<compile_context>
chip_gen: v7x
topology: tpu7x:2x2x1
jax: 0.10.0
libtpu: 0.0.40
codegen_flags: <defaults>
</compile_context>

<pallas_src>
import functools
import math

import jax
import jax.numpy as jnp
from jax.experimental import pallas as pl
from jax.experimental.pallas import tpu as pltpu


# ----------------------------------------------------------------------------
# Kernel
# ----------------------------------------------------------------------------

def _upsample_conv_kernel(x_ref, w_ref, b_ref, o_ref):
    """Fused 2x-nearest-upsample + 3x3 conv for one (image, cout-tile, row-tile) step.

    x_ref: (1, H+2, W+2, Cin)  zero-padded bf16 input image; block index is constant
                               across the co/r grid axes so it stays VMEM-resident.
    w_ref: (16, Cin, TN)       effective sub-pixel taps, tap = ((p*2+q)*2+dy)*2+dx, bf16.
    b_ref: (1, TN)             bias, f32.
    o_ref: (1, 4, TH, W, TN)   output parities, axis-1 index = p*2 + q.
    """
    _, _, TH, W, TN = o_ref.shape
    cin = x_ref.shape[-1]

    r = pl.program_id(2)                       # row-tile index (innermost grid axis)
    row0 = pl.multiple_of(r * TH, TH)

    bias = b_ref[...].astype(jnp.float32)      # (1, TN)

    # One dynamic row-window load, then only 3 column-shifted slabs (the only
    # sublane-shift copies in the kernel).  The 16 windows below are cheap
    # leading-axis slices of these, created inside the parity loop.
    xb = x_ref[0, pl.ds(row0, TH + 2), :, :]               # (TH+2, W+2, Cin)
    slabs = [xb[:, dc:dc + W, :] for dc in range(3)]       # each (TH+2, W, Cin)

    for p in range(2):
        for q in range(2):
            # Initialise the accumulator with the broadcast bias (saves a zeros+add).
            acc = jnp.broadcast_to(bias, (TH * W, TN))
            for dy in range(2):
                for dx in range(2):
                    tap = ((p * 2 + q) * 2 + dy) * 2 + dx
                    win = slabs[q + dx][p + dy:p + dy + TH].reshape(TH * W, cin)
                    acc = acc + jnp.dot(win, w_ref[tap],
                                        preferred_element_type=jnp.float32)
            o_ref[0, p * 2 + q] = acc.reshape(TH, W, TN).astype(o_ref.dtype)


# ----------------------------------------------------------------------------
# Wrapper glue
# ----------------------------------------------------------------------------

def _subpixel_weights(w_hwio):
    """(3, 3, Cin, Cout) conv weight -> (16, Cin, Cout) per-(p, q, dy, dx) taps."""
    w0, w1, w2 = w_hwio[0], w_hwio[1], w_hwio[2]        # each (3, Cin, Cout) over kx
    rows = ((w0, w1 + w2),          # p = 0: input rows (i-1, i)
            (w0 + w1, w2))          # p = 1: input rows (i, i+1)
    taps = []
    for p in range(2):
        for q in range(2):
            for dy in range(2):
                r = rows[p][dy]
                cols = (r[0], r[1] + r[2]) if q == 0 else (r[0] + r[1], r[2])
                for dx in range(2):
                    taps.append(cols[dx])
    return jnp.stack(taps, axis=0)                       # (16, Cin, Cout)


def _select_tiles(H, W, cin, coutp, out_itemsize):
    """Pick (TH, TN) so the per-step VMEM footprint fits the default scoped-VMEM
    budget on all of v5e / v6e / v7x (conservative 28 MiB target, double-buffered)."""
    # 256-wide Cout tiles fill the 256-deep MXU on v6e/v7x; 128 is native on v5e and
    # the only option when Coutp is not a multiple of 256.
    tn_pref = 256 if (coutp % 256 == 0) else 128
    budget = 28 * 2 ** 20

    def est(th, tn):
        inp = 2 * (H + 2) * (W + 2) * cin * 2           # bf16 input block, 2 buffers
        wgt = 2 * 16 * cin * tn * 2                     # bf16 weight block, 2 buffers
        outb = 2 * 4 * th * W * tn * out_itemsize       # output block, 2 buffers
        slabs = 3 * (th + 2) * W * cin * 2              # in-kernel column slabs
        acc = 2 * th * W * tn * 4                       # f32 accumulator + partial
        return inp + wgt + outb + slabs + acc

    divs = sorted([d for d in range(1, H + 1) if H % d == 0], reverse=True)
    # Prefer >= 2 row tiles so a single-image call still spans both v7x TensorCores.
    cand = [d for d in divs if d * 2 <= H] or divs
    for tn in ([tn_pref, 128] if tn_pref != 128 else [128]):
        for th in cand:
            if est(th, tn) <= budget:
                return th, tn
    return cand[-1], 128


def upsample_forward(params, x_nchw, *, with_conv=True):
    """PyTorch-equivalent Upsample.forward (NCHW in, NCHW out)."""
    N, C, H, W = x_nchw.shape

    if not with_conv:
        # Pure data movement: one XLA pass writing the interleaved NCHW layout
        # directly (per perf review, a Pallas kernel here only adds an HBM pass).
        return jnp.repeat(jnp.repeat(x_nchw, 2, axis=2), 2, axis=3)

    w, b = params["w"], params["b"]                      # torch layout (Cout, Cin, 3, 3)
    cout, cin = w.shape[0], w.shape[1]
    assert cin == C, (cin, C)
    coutp = ((cout + 127) // 128) * 128                  # lane-dense output stores

    # Effective sub-pixel taps; bf16 MXU operands, f32 accumulation inside the kernel.
    w_hwio = jnp.transpose(w, (2, 3, 1, 0)).astype(jnp.float32)     # (3, 3, Cin, Cout)
    w_eff = _subpixel_weights(w_hwio)                                # (16, Cin, Cout)
    w_eff = jnp.pad(w_eff, ((0, 0), (0, 0), (0, coutp - cout))).astype(jnp.bfloat16)
    b_pad = jnp.pad(b.astype(jnp.float32), (0, coutp - cout)).reshape(1, coutp)

    # Channels-last + 1-px zero halo; the kernel only takes cheap slices of this.
    x_nhwc = jnp.transpose(x_nchw, (0, 2, 3, 1))
    x_pad = jnp.pad(x_nhwc.astype(jnp.bfloat16), ((0, 0), (1, 1), (1, 1), (0, 0)))

    out_itemsize = jnp.dtype(x_nchw.dtype).itemsize
    th, tn = _select_tiles(H, W, C, coutp, out_itemsize)
    n_r, n_co = H // th, coutp // tn
    grid = (N, n_co, n_r)                                # r innermost -> weights resident per co

    flops = 2 * 16 * H * W * C * coutp * N
    bytes_accessed = (x_pad.size * 2 + N * w_eff.size * 2
                      + N * 4 * H * W * coutp * out_itemsize)

    out4 = pl.pallas_call(
        _upsample_conv_kernel,
        out_shape=jax.ShapeDtypeStruct((N, 4, H, W, coutp), x_nchw.dtype),
        grid=grid,
        in_specs=[
            # Full padded image; block index constant over (co, r) -> stays resident.
            pl.BlockSpec((1, H + 2, W + 2, C), lambda n, co, r: (n, 0, 0, 0)),
            pl.BlockSpec((16, C, tn), lambda n, co, r: (0, 0, co)),
            pl.BlockSpec((1, tn), lambda n, co, r: (0, co)),
        ],
        out_specs=pl.BlockSpec((1, 4, th, W, tn), lambda n, co, r: (n, 0, r, 0, co)),
        compiler_params=pltpu.CompilerParams(
            dimension_semantics=("parallel", "parallel", "parallel"),
            vmem_limit_bytes=48 * 2 ** 20),
        cost_estimate=pl.CostEstimate(flops=flops, transcendentals=0,
                                      bytes_accessed=bytes_accessed),
    )(x_pad, w_eff, b_pad)

    if coutp != cout:
        out4 = out4[..., :cout]                          # drop lane padding

    # Single relayout pass required by the NCHW API; the parity interleave is fused
    # into it.  out4[n, p*2+q, i, j, c] = y[n, c, 2i+p, 2j+q].
    out6 = out4.reshape(N, 2, 2, H, W, cout)             # (n, p, q, i, j, c)
    out = jnp.transpose(out6, (0, 5, 3, 1, 4, 2))        # (n, c, i, p, j, q)
    return out.reshape(N, cout, 2 * H, 2 * W)


# ----------------------------------------------------------------------------
# Deterministic params + pure-JAX reference (for self-check)
# ----------------------------------------------------------------------------

def init_upsample_params(key, in_channels, with_conv=True):
    if not with_conv:
        return {}
    kw, kb = jax.random.split(key)
    fan_in = 9 * in_channels
    bound = 1.0 / math.sqrt(fan_in)
    w = jax.random.uniform(kw, (in_channels, in_channels, 3, 3),
                           jnp.float32, -bound, bound)
    b = jax.random.uniform(kb, (in_channels,), jnp.float32, -bound, bound)
    return dict(w=w, b=b)


def upsample_reference(params, x, *, with_conv=True):
    up = jnp.repeat(jnp.repeat(x, 2, axis=2), 2, axis=3)
    if with_conv:
        up = jax.lax.conv_general_dilated(
            up, params["w"], window_strides=(1, 1), padding=((1, 1), (1, 1)),
            dimension_numbers=("NCHW", "OIHW", "NCHW"),
            precision=jax.lax.Precision.HIGHEST)
        up = up + params["b"][None, :, None, None]
    return up


def _check_conv_case(key, N, C, H, W):
    kx, kp = jax.random.split(key)
    x = jax.random.normal(kx, (N, C, H, W), jnp.float32)
    params = init_upsample_params(kp, C, with_conv=True)
    fwd = jax.jit(functools.partial(upsample_forward, with_conv=True))
    out = jax.block_until_ready(fwd(params, x))
    assert out.shape == (N, C, 2 * H, 2 * W), out.shape
    assert bool(jnp.all(jnp.isfinite(out)))
    ref = upsample_reference(params, x, with_conv=True)
    err = float(jnp.max(jnp.abs(out - ref)))
    scale = float(jnp.max(jnp.abs(ref))) + 1e-6
    # bf16 MXU operands with f32 accumulation (intended): relative tolerance.
    assert err <= 5e-2 and err / scale <= 2.5e-2, \
        f"N={N} C={C} H={H}: max abs err {err}, rel {err / scale}"


if __name__ == "__main__":
    key = jax.random.PRNGKey(0)
    k1, k2, k3 = jax.random.split(key, 3)

    # Primary with_conv=True check (small shapes).
    _check_conv_case(k1, N=2, C=32, H=16, W=16)

    # Secondary check exercising row + Cout tiling and an N=1 grid.
    _check_conv_case(k2, N=1, C=384, H=16, W=16)

    # with_conv=False path (pure nearest upsample; exact).
    x = jax.random.normal(k3, (2, 32, 16, 16), jnp.float32)
    fwd_plain = jax.jit(functools.partial(upsample_forward, with_conv=False))
    out_plain = jax.block_until_ready(fwd_plain({}, x))
    ref_plain = upsample_reference({}, x, with_conv=False)
    assert out_plain.shape == (2, 32, 32, 32)
    assert bool(jnp.array_equal(out_plain, ref_plain))

    print("KERNEL_OK")
</pallas_src>

<mosaic_0001>
module attributes {stable_mosaic.version = 11 : i64} {
  func.func @_upsample_conv_kernel(%arg0: i32, %arg1: i32, %arg2: i32, %arg3: memref<1x18x18x32xbf16, #tpu.memory_space<vmem>>, %arg4: memref<16x32x128xbf16, #tpu.memory_space<vmem>>, %arg5: memref<1x128xf32, #tpu.memory_space<vmem>>, %arg6: memref<1x4x8x16x128xf32, #tpu.memory_space<vmem>>) attributes {dimension_semantics = [#tpu.dimension_semantics<parallel>, #tpu.dimension_semantics<parallel>, #tpu.dimension_semantics<parallel>], iteration_bounds = array<i64: 2, 1, 2>, scalar_prefetch = 0 : i64, scratch_operands = 0 : i64, tpu.core_type = #tpu.core_type<tc>, window_params = [{transform_indices = @transform_0, window_bounds = array<i64: 1, 18, 18, 32>}, {transform_indices = @transform_1, window_bounds = array<i64: 16, 32, 128>}, {transform_indices = @transform_2, window_bounds = array<i64: 1, 128>}, {transform_indices = @transform_3, window_bounds = array<i64: 1, 4, 8, 16, 128>}]} {
    %c8_i32 = arith.constant 8 : i32
    %0 = arith.muli %arg2, %c8_i32 : i32
    %1 = tpu.assume_multiple %0, 8 : i32
    %c0 = arith.constant 0 : index
    %c0_0 = arith.constant 0 : index
    %2 = vector.load %arg5[%c0, %c0_0] : memref<1x128xf32, #tpu.memory_space<vmem>>, vector<1x128xf32>
    %c0_1 = arith.constant 0 : index
    %3 = arith.index_cast %1 : i32 to index
    %c0_2 = arith.constant 0 : index
    %c0_3 = arith.constant 0 : index
    %4 = vector.load %arg3[%c0_1, %3, %c0_2, %c0_3] : memref<1x18x18x32xbf16, #tpu.memory_space<vmem>>, vector<1x10x18x32xbf16>
    %5 = vector.shape_cast %4 : vector<1x10x18x32xbf16> to vector<10x18x32xbf16>
    %6 = vector.extract_strided_slice %5 {offsets = [0, 0, 0], sizes = [10, 16, 32], strides = [1, 1, 1]} : vector<10x18x32xbf16> to vector<10x16x32xbf16>
    %7 = vector.extract_strided_slice %5 {offsets = [0, 1, 0], sizes = [10, 16, 32], strides = [1, 1, 1]} : vector<10x18x32xbf16> to vector<10x16x32xbf16>
    %8 = vector.extract_strided_slice %5 {offsets = [0, 2, 0], sizes = [10, 16, 32], strides = [1, 1, 1]} : vector<10x18x32xbf16> to vector<10x16x32xbf16>
    %9 = vector.shape_cast %2 : vector<1x128xf32> to vector<1x128xf32>
    %10 = vector.broadcast %9 : vector<1x128xf32> to vector<128x128xf32>
    %11 = vector.extract_strided_slice %6 {offsets = [0, 0, 0], sizes = [8, 16, 32], strides = [1, 1, 1]} : vector<10x16x32xbf16> to vector<8x16x32xbf16>
    %12 = vector.shape_cast %11 : vector<8x16x32xbf16> to vector<128x32xbf16>
    %c0_4 = arith.constant 0 : index
    %c0_5 = arith.constant 0 : index
    %c0_6 = arith.constant 0 : index
    %13 = vector.load %arg4[%c0_4, %c0_5, %c0_6] : memref<16x32x128xbf16, #tpu.memory_space<vmem>>, vector<1x32x128xbf16>
    %14 = vector.shape_cast %13 : vector<1x32x128xbf16> to vector<32x128xbf16>
    %cst = arith.constant dense<0.000000e+00> : vector<128x128xf32>
    %15 = tpu.matmul %12, %14, %cst {dimension_numbers = #tpu.dot_dimension_numbers<[1], [0], [0], [1], [0, 0, 1, 1], [], []>} : vector<128x32xbf16>, vector<32x128xbf16>, vector<128x128xf32> -> vector<128x128xf32>
    %16 = arith.addf %10, %15 : vector<128x128xf32>
    %17 = vector.extract_strided_slice %7 {offsets = [0, 0, 0], sizes = [8, 16, 32], strides = [1, 1, 1]} : vector<10x16x32xbf16> to vector<8x16x32xbf16>
    %18 = vector.shape_cast %17 : vector<8x16x32xbf16> to vector<128x32xbf16>
    %c1 = arith.constant 1 : index
    %c0_7 = arith.constant 0 : index
    %c0_8 = arith.constant 0 : index
    %19 = vector.load %arg4[%c1, %c0_7, %c0_8] : memref<16x32x128xbf16, #tpu.memory_space<vmem>>, vector<1x32x128xbf16>
    %20 = vector.shape_cast %19 : vector<1x32x128xbf16> to vector<32x128xbf16>
    %cst_9 = arith.constant dense<0.000000e+00> : vector<128x128xf32>
    %21 = tpu.matmul %18, %20, %cst_9 {dimension_numbers = #tpu.dot_dimension_numbers<[1], [0], [0], [1], [0, 0, 1, 1], [], []>} : vector<128x32xbf16>, vector<32x128xbf16>, vector<128x128xf32> -> vector<128x128xf32>
    %22 = arith.addf %16, %21 : vector<128x128xf32>
    %23 = vector.extract_strided_slice %6 {offsets = [1, 0, 0], sizes = [8, 16, 32], strides = [1, 1, 1]} : vector<10x16x32xbf16> to vector<8x16x32xbf16>
    %24 = vector.shape_cast %23 : vector<8x16x32xbf16> to vector<128x32xbf16>
    %c2 = arith.constant 2 : index
    %c0_10 = arith.constant 0 : index
    %c0_11 = arith.constant 0 : index
    %25 = vector.load %arg4[%c2, %c0_10, %c0_11] : memref<16x32x128xbf16, #tpu.memory_space<vmem>>, vector<1x32x128xbf16>
    %26 = vector.shape_cast %25 : vector<1x32x128xbf16> to vector<32x128xbf16>
    %cst_12 = arith.constant dense<0.000000e+00> : vector<128x128xf32>
    %27 = tpu.matmul %24, %26, %cst_12 {dimension_numbers = #tpu.dot_dimension_numbers<[1], [0], [0], [1], [0, 0, 1, 1], [], []>} : vector<128x32xbf16>, vector<32x128xbf16>, vector<128x128xf32> -> vector<128x128xf32>
    %28 = arith.addf %22, %27 : vector<128x128xf32>
    %29 = vector.extract_strided_slice %7 {offsets = [1, 0, 0], sizes = [8, 16, 32], strides = [1, 1, 1]} : vector<10x16x32xbf16> to vector<8x16x32xbf16>
    %30 = vector.shape_cast %29 : vector<8x16x32xbf16> to vector<128x32xbf16>
    %c3 = arith.constant 3 : index
    %c0_13 = arith.constant 0 : index
    %c0_14 = arith.constant 0 : index
    %31 = vector.load %arg4[%c3, %c0_13, %c0_14] : memref<16x32x128xbf16, #tpu.memory_space<vmem>>, vector<1x32x128xbf16>
    %32 = vector.shape_cast %31 : vector<1x32x128xbf16> to vector<32x128xbf16>
    %cst_15 = arith.constant dense<0.000000e+00> : vector<128x128xf32>
    %33 = tpu.matmul %30, %32, %cst_15 {dimension_numbers = #tpu.dot_dimension_numbers<[1], [0], [0], [1], [0, 0, 1, 1], [], []>} : vector<128x32xbf16>, vector<32x128xbf16>, vector<128x128xf32> -> vector<128x128xf32>
    %34 = arith.addf %28, %33 : vector<128x128xf32>
    %35 = vector.shape_cast %34 : vector<128x128xf32> to vector<8x16x128xf32>
    %c0_16 = arith.constant 0 : index
    %c0_17 = arith.constant 0 : index
    %c0_18 = arith.constant 0 : index
    %c0_19 = arith.constant 0 : index
    %c0_20 = arith.constant 0 : index
    %36 = vector.load %arg6[%c0_16, %c0_17, %c0_18, %c0_19, %c0_20] : memref<1x4x8x16x128xf32, #tpu.memory_space<vmem>>, vector<1x1x8x16x128xf32>
    %37 = vector.shape_cast %36 : vector<1x1x8x16x128xf32> to vector<8x16x128xf32>
    %38 = vector.shape_cast %35 : vector<8x16x128xf32> to vector<1x1x8x16x128xf32>
    tpu.vector_store %arg6[%c0_16, %c0_17, %c0_18, %c0_19, %c0_20], %38 {strides = array<i32>} : memref<1x4x8x16x128xf32, #tpu.memory_space<vmem>>, vector<1x1x8x16x128xf32>,
    %39 = vector.shape_cast %2 : vector<1x128xf32> to vector<1x128xf32>
    %40 = vector.broadcast %39 : vector<1x128xf32> to vector<128x128xf32>
    %41 = vector.extract_strided_slice %7 {offsets = [0, 0, 0], sizes = [8, 16, 32], strides = [1, 1, 1]} : vector<10x16x32xbf16> to vector<8x16x32xbf16>
    %42 = vector.shape_cast %41 : vector<8x16x32xbf16> to vector<128x32xbf16>
    %c4 = arith.constant 4 : index
    %c0_21 = arith.constant 0 : index
    %c0_22 = arith.constant 0 : index
    %43 = vector.load %arg4[%c4, %c0_21, %c0_22] : memref<16x32x128xbf16, #tpu.memory_space<vmem>>, vector<1x32x128xbf16>
    %44 = vector.shape_cast %43 : vector<1x32x128xbf16> to vector<32x128xbf16>
    %cst_23 = arith.constant dense<0.000000e+00> : vector<128x128xf32>
    %45 = tpu.matmul %42, %44, %cst_23 {dimension_numbers = #tpu.dot_dimension_numbers<[1], [0], [0], [1], [0, 0, 1, 1], [], []>} : vector<128x32xbf16>, vector<32x128xbf16>, vector<128x128xf32> -> vector<128x128xf32>
    %46 = arith.addf %40, %45 : vector<128x128xf32>
    %47 = vector.extract_strided_slice %8 {offsets = [0, 0, 0], sizes = [8, 16, 32], strides = [1, 1, 1]} : vector<10x16x32xbf16> to vector<8x16x32xbf16>
    %48 = vector.shape_cast %47 : vector<8x16x32xbf16> to vector<128x32xbf16>
    %c5 = arith.constant 5 : index
    %c0_24 = arith.constant 0 : index
    %c0_25 = arith.constant 0 : index
    %49 = vector.load %arg4[%c5, %c0_24, %c0_25] : memref<16x32x128xbf16, #tpu.memory_space<vmem>>, vector<1x32x128xbf16>
    %50 = vector.shape_cast %49 : vector<1x32x128xbf16> to vector<32x128xbf16>
    %cst_26 = arith.constant dense<0.000000e+00> : vector<128x128xf32>
    %51 = tpu.matmul %48, %50, %cst_26 {dimension_numbers = #tpu.dot_dimension_numbers<[1], [0], [0], [1], [0, 0, 1, 1], [], []>} : vector<128x32xbf16>, vector<32x128xbf16>, vector<128x128xf32> -> vector<128x128xf32>
    %52 = arith.addf %46, %51 : vector<128x128xf32>
    %53 = vector.extract_strided_slice %7 {offsets = [1, 0, 0], sizes = [8, 16, 32], strides = [1, 1, 1]} : vector<10x16x32xbf16> to vector<8x16x32xbf16>
    %54 = vector.shape_cast %53 : vector<8x16x32xbf16> to vector<128x32xbf16>
    %c6 = arith.constant 6 : index
    %c0_27 = arith.constant 0 : index
    %c0_28 = arith.constant 0 : index
    %55 = vector.load %arg4[%c6, %c0_27, %c0_28] : memref<16x32x128xbf16, #tpu.memory_space<vmem>>, vector<1x32x128xbf16>
    %56 = vector.shape_cast %55 : vector<1x32x128xbf16> to vector<32x128xbf16>
    %cst_29 = arith.constant dense<0.000000e+00> : vector<128x128xf32>
    %57 = tpu.matmul %54, %56, %cst_29 {dimension_numbers = #tpu.dot_dimension_numbers<[1], [0], [0], [1], [0, 0, 1, 1], [], []>} : vector<128x32xbf16>, vector<32x128xbf16>, vector<128x128xf32> -> vector<128x128xf32>
    %58 = arith.addf %52, %57 : vector<128x128xf32>
    %59 = vector.extract_strided_slice %8 {offsets = [1, 0, 0], sizes = [8, 16, 32], strides = [1, 1, 1]} : vector<10x16x32xbf16> to vector<8x16x32xbf16>
    %60 = vector.shape_cast %59 : vector<8x16x32xbf16> to vector<128x32xbf16>
    %c7 = arith.constant 7 : index
    %c0_30 = arith.constant 0 : index
    %c0_31 = arith.constant 0 : index
    %61 = vector.load %arg4[%c7, %c0_30, %c0_31] : memref<16x32x128xbf16, #tpu.memory_space<vmem>>, vector<1x32x128xbf16>
    %62 = vector.shape_cast %61 : vector<1x32x128xbf16> to vector<32x128xbf16>
    %cst_32 = arith.constant dense<0.000000e+00> : vector<128x128xf32>
    %63 = tpu.matmul %60, %62, %cst_32 {dimension_numbers = #tpu.dot_dimension_numbers<[1], [0], [0], [1], [0, 0, 1, 1], [], []>} : vector<128x32xbf16>, vector<32x128xbf16>, vector<128x128xf32> -> vector<128x128xf32>
    %64 = arith.addf %58, %63 : vector<128x128xf32>
    %65 = vector.shape_cast %64 : vector<128x128xf32> to vector<8x16x128xf32>
    %c0_33 = arith.constant 0 : index
    %c1_34 = arith.constant 1 : index
    %c0_35 = arith.constant 0 : index
    %c0_36 = arith.constant 0 : index
    %c0_37 = arith.constant 0 : index
    %66 = vector.load %arg6[%c0_33, %c1_34, %c0_35, %c0_36, %c0_37] : memref<1x4x8x16x128xf32, #tpu.memory_space<vmem>>, vector<1x1x8x16x128xf32>
    %67 = vector.shape_cast %66 : vector<1x1x8x16x128xf32> to vector<8x16x128xf32>
    %68 = vector.shape_cast %65 : vector<8x16x128xf32> to vector<1x1x8x16x128xf32>
    tpu.vector_store %arg6[%c0_33, %c1_34, %c0_35, %c0_36, %c0_37], %68 {strides = array<i32>} : memref<1x4x8x16x128xf32, #tpu.memory_space<vmem>>, vector<1x1x8x16x128xf32>,
    %69 = vector.shape_cast %2 : vector<1x128xf32> to vector<1x128xf32>
    %70 = vector.broadcast %69 : vector<1x128xf32> to vector<128x128xf32>
    %71 = vector.extract_strided_slice %6 {offsets = [1, 0, 0], sizes = [8, 16, 32], strides = [1, 1, 1]} : vector<10x16x32xbf16> to vector<8x16x32xbf16>
    %72 = vector.shape_cast %71 : vector<8x16x32xbf16> to vector<128x32xbf16>
    %c8 = arith.constant 8 : index
    %c0_38 = arith.constant 0 : index
    %c0_39 = arith.constant 0 : index
    %73 = vector.load %arg4[%c8, %c0_38, %c0_39] : memref<16x32x128xbf16, #tpu.memory_space<vmem>>, vector<1x32x128xbf16>
    %74 = vector.shape_cast %73 : vector<1x32x128xbf16> to vector<32x128xbf16>
    %cst_40 = arith.constant dense<0.000000e+00> : vector<128x128xf32>
    %75 = tpu.matmul %72, %74, %cst_40 {dimension_numbers = #tpu.dot_dimension_numbers<[1], [0], [0], [1], [0, 0, 1, 1], [], []>} : vector<128x32xbf16>, vector<32x128xbf16>, vector<128x128xf32> -> vector<128x128xf32>
    %76 = arith.addf %70, %75 : vector<128x128xf32>
    %77 = vector.extract_strided_slice %7 {offsets = [1, 0, 0], sizes = [8, 16, 32], strides = [1, 1, 1]} : vector<10x16x32xbf16> to vector<8x16x32xbf16>
    %78 = vector.shape_cast %77 : vector<8x16x32xbf16> to vector<128x32xbf16>
    %c9 = arith.constant 9 : index
    %c0_41 = arith.constant 0 : index
    %c0_42 = arith.constant 0 : index
    %79 = vector.load %arg4[%c9, %c0_41, %c0_42] : memref<16x32x128xbf16, #tpu.memory_space<vmem>>, vector<1x32x128xbf16>
    %80 = vector.shape_cast %79 : vector<1x32x128xbf16> to vector<32x128xbf16>
    %cst_43 = arith.constant dense<0.000000e+00> : vector<128x128xf32>
    %81 = tpu.matmul %78, %80, %cst_43 {dimension_numbers = #tpu.dot_dimension_numbers<[1], [0], [0], [1], [0, 0, 1, 1], [], []>} : vector<128x32xbf16>, vector<32x128xbf16>, vector<128x128xf32> -> vector<128x128xf32>
    %82 = arith.addf %76, %81 : vector<128x128xf32>
    %83 = vector.extract_strided_slice %6 {offsets = [2, 0, 0], sizes = [8, 16, 32], strides = [1, 1, 1]} : vector<10x16x32xbf16> to vector<8x16x32xbf16>
    %84 = vector.shape_cast %83 : vector<8x16x32xbf16> to vector<128x32xbf16>
    %c10 = arith.constant 10 : index
    %c0_44 = arith.constant 0 : index
    %c0_45 = arith.constant 0 : index
    %85 = vector.load %arg4[%c10, %c0_44, %c0_45] : memref<16x32x128xbf16, #tpu.memory_space<vmem>>, vector<1x32x128xbf16>
    %86 = vector.shape_cast %85 : vector<1x32x128xbf16> to vector<32x128xbf16>
    %cst_46 = arith.constant dense<0.000000e+00> : vector<128x128xf32>
    %87 = tpu.matmul %84, %86, %cst_46 {dimension_numbers = #tpu.dot_dimension_numbers<[1], [0], [0], [1], [0, 0, 1, 1], [], []>} : vector<128x32xbf16>, vector<32x128xbf16>, vector<128x128xf32> -> vector<128x128xf32>
    %88 = arith.addf %82, %87 : vector<128x128xf32>
    %89 = vector.extract_strided_slice %7 {offsets = [2, 0, 0], sizes = [8, 16, 32], strides = [1, 1, 1]} : vector<10x16x32xbf16> to vector<8x16x32xbf16>
    %90 = vector.shape_cast %89 : vector<8x16x32xbf16> to vector<128x32xbf16>
    %c11 = arith.constant 11 : index
    %c0_47 = arith.constant 0 : index
    %c0_48 = arith.constant 0 : index
    %91 = vector.load %arg4[%c11, %c0_47, %c0_48] : memref<16x32x128xbf16, #tpu.memory_space<vmem>>, vector<1x32x128xbf16>
    %92 = vector.shape_cast %91 : vector<1x32x128xbf16> to vector<32x128xbf16>
    %cst_49 = arith.constant dense<0.000000e+00> : vector<128x128xf32>
    %93 = tpu.matmul %90, %92, %cst_49 {dimension_numbers = #tpu.dot_dimension_numbers<[1], [0], [0], [1], [0, 0, 1, 1], [], []>} : vector<128x32xbf16>, vector<32x128xbf16>, vector<128x128xf32> -> vector<128x128xf32>
    %94 = arith.addf %88, %93 : vector<128x128xf32>
    %95 = vector.shape_cast %94 : vector<128x128xf32> to vector<8x16x128xf32>
    %c0_50 = arith.constant 0 : index
    %c2_51 = arith.constant 2 : index
    %c0_52 = arith.constant 0 : index
    %c0_53 = arith.constant 0 : index
    %c0_54 = arith.constant 0 : index
    %96 = vector.load %arg6[%c0_50, %c2_51, %c0_52, %c0_53, %c0_54] : memref<1x4x8x16x128xf32, #tpu.memory_space<vmem>>, vector<1x1x8x16x128xf32>
    %97 = vector.shape_cast %96 : vector<1x1x8x16x128xf32> to vector<8x16x128xf32>
    %98 = vector.shape_cast %95 : vector<8x16x128xf32> to vector<1x1x8x16x128xf32>
    tpu.vector_store %arg6[%c0_50, %c2_51, %c0_52, %c0_53, %c0_54], %98 {strides = array<i32>} : memref<1x4x8x16x128xf32, #tpu.memory_space<vmem>>, vector<1x1x8x16x128xf32>,
    %99 = vector.shape_cast %2 : vector<1x128xf32> to vector<1x128xf32>
    %100 = vector.broadcast %99 : vector<1x128xf32> to vector<128x128xf32>
    %101 = vector.extract_strided_slice %7 {offsets = [1, 0, 0], sizes = [8, 16, 32], strides = [1, 1, 1]} : vector<10x16x32xbf16> to vector<8x16x32xbf16>
    %102 = vector.shape_cast %101 : vector<8x16x32xbf16> to vector<128x32xbf16>
    %c12 = arith.constant 12 : index
    %c0_55 = arith.constant 0 : index
    %c0_56 = arith.constant 0 : index
    %103 = vector.load %arg4[%c12, %c0_55, %c0_56] : memref<16x32x128xbf16, #tpu.memory_space<vmem>>, vector<1x32x128xbf16>
    %104 = vector.shape_cast %103 : vector<1x32x128xbf16> to vector<32x128xbf16>
    %cst_57 = arith.constant dense<0.000000e+00> : vector<128x128xf32>
    %105 = tpu.matmul %102, %104, %cst_57 {dimension_numbers = #tpu.dot_dimension_numbers<[1], [0], [0], [1], [0, 0, 1, 1], [], []>} : vector<128x32xbf16>, vector<32x128xbf16>, vector<128x128xf32> -> vector<128x128xf32>
    %106 = arith.addf %100, %105 : vector<128x128xf32>
    %107 = vector.extract_strided_slice %8 {offsets = [1, 0, 0], sizes = [8, 16, 32], strides = [1, 1, 1]} : vector<10x16x32xbf16> to vector<8x16x32xbf16>
    %108 = vector.shape_cast %107 : vector<8x16x32xbf16> to vector<128x32xbf16>
    %c13 = arith.constant 13 : index
    %c0_58 = arith.constant 0 : index
    %c0_59 = arith.constant 0 : index
    %109 = vector.load %arg4[%c13, %c0_58, %c0_59] : memref<16x32x128xbf16, #tpu.memory_space<vmem>>, vector<1x32x128xbf16>
    %110 = vector.shape_cast %109 : vector<1x32x128xbf16> to vector<32x128xbf16>
    %cst_60 = arith.constant dense<0.000000e+00> : vector<128x128xf32>
    %111 = tpu.matmul %108, %110, %cst_60 {dimension_numbers = #tpu.dot_dimension_numbers<[1], [0], [0], [1], [0, 0, 1, 1], [], []>} : vector<128x32xbf16>, vector<32x128xbf16>, vector<128x128xf32> -> vector<128x128xf32>
    %112 = arith.addf %106, %111 : vector<128x128xf32>
    %113 = vector.extract_strided_slice %7 {offsets = [2, 0, 0], sizes = [8, 16, 32], strides = [1, 1, 1]} : vector<10x16x32xbf16> to vector<8x16x32xbf16>
    %114 = vector.shape_cast %113 : vector<8x16x32xbf16> to vector<128x32xbf16>
    %c14 = arith.constant 14 : index
    %c0_61 = arith.constant 0 : index
    %c0_62 = arith.constant 0 : index
    %115 = vector.load %arg4[%c14, %c0_61, %c0_62] : memref<16x32x128xbf16, #tpu.memory_space<vmem>>, vector<1x32x128xbf16>
    %116 = vector.shape_cast %115 : vector<1x32x128xbf16> to vector<32x128xbf16>
    %cst_63 = arith.constant dense<0.000000e+00> : vector<128x128xf32>
    %117 = tpu.matmul %114, %116, %cst_63 {dimension_numbers = #tpu.dot_dimension_numbers<[1], [0], [0], [1], [0, 0, 1, 1], [], []>} : vector<128x32xbf16>, vector<32x128xbf16>, vector<128x128xf32> -> vector<128x128xf32>
    %118 = arith.addf %112, %117 : vector<128x128xf32>
    %119 = vector.extract_strided_slice %8 {offsets = [2, 0, 0], sizes = [8, 16, 32], strides = [1, 1, 1]} : vector<10x16x32xbf16> to vector<8x16x32xbf16>
    %120 = vector.shape_cast %119 : vector<8x16x32xbf16> to vector<128x32xbf16>
    %c15 = arith.constant 15 : index
    %c0_64 = arith.constant 0 : index
    %c0_65 = arith.constant 0 : index
    %121 = vector.load %arg4[%c15, %c0_64, %c0_65] : memref<16x32x128xbf16, #tpu.memory_space<vmem>>, vector<1x32x128xbf16>
    %122 = vector.shape_cast %121 : vector<1x32x128xbf16> to vector<32x128xbf16>
    %cst_66 = arith.constant dense<0.000000e+00> : vector<128x128xf32>
    %123 = tpu.matmul %120, %122, %cst_66 {dimension_numbers = #tpu.dot_dimension_numbers<[1], [0], [0], [1], [0, 0, 1, 1], [], []>} : vector<128x32xbf16>, vector<32x128xbf16>, vector<128x128xf32> -> vector<128x128xf32>
    %124 = arith.addf %118, %123 : vector<128x128xf32>
    %125 = vector.shape_cast %124 : vector<128x128xf32> to vector<8x16x128xf32>
    %c0_67 = arith.constant 0 : index
    %c3_68 = arith.constant 3 : index
    %c0_69 = arith.constant 0 : index
    %c0_70 = arith.constant 0 : index
    %c0_71 = arith.constant 0 : index
    %126 = vector.load %arg6[%c0_67, %c3_68, %c0_69, %c0_70, %c0_71] : memref<1x4x8x16x128xf32, #tpu.memory_space<vmem>>, vector<1x1x8x16x128xf32>
    %127 = vector.shape_cast %126 : vector<1x1x8x16x128xf32> to vector<8x16x128xf32>
    %128 = vector.shape_cast %125 : vector<8x16x128xf32> to vector<1x1x8x16x128xf32>
    tpu.vector_store %arg6[%c0_67, %c3_68, %c0_69, %c0_70, %c0_71], %128 {strides = array<i32>} : memref<1x4x8x16x128xf32, #tpu.memory_space<vmem>>, vector<1x1x8x16x128xf32>,
    return
  }
  func.func @transform_0(%arg0: i32, %arg1: i32, %arg2: i32) -> (i32, i32, i32, i32) {
    %c0_i32 = arith.constant 0 : i32
    %c0_i32_0 = arith.constant 0 : i32
    %c0_i32_1 = arith.constant 0 : i32
    %c0_i32_2 = arith.constant 0 : i32
    return %arg0, %c0_i32, %c0_i32_0, %c0_i32_1 : i32, i32, i32, i32
  }
  func.func @transform_1(%arg0: i32, %arg1: i32, %arg2: i32) -> (i32, i32, i32) {
    %c0_i32 = arith.constant 0 : i32
    %c0_i32_0 = arith.constant 0 : i32
    %c0_i32_1 = arith.constant 0 : i32
    return %c0_i32, %c0_i32_0, %arg1 : i32, i32, i32
  }
  func.func @transform_2(%arg0: i32, %arg1: i32, %arg2: i32) -> (i32, i32) {
    %c0_i32 = arith.constant 0 : i32
    %c0_i32_0 = arith.constant 0 : i32
    return %c0_i32, %arg1 : i32, i32
  }
  func.func @transform_3(%arg0: i32, %arg1: i32, %arg2: i32) -> (i32, i32, i32, i32, i32) {
    %c0_i32 = arith.constant 0 : i32
    %c0_i32_0 = arith.constant 0 : i32
    %c0_i32_1 = arith.constant 0 : i32
    return %arg0, %c0_i32, %arg2, %c0_i32_0, %arg1 : i32, i32, i32, i32, i32
  }
}

</mosaic_0001>

<llo_original>
// kernel: upsample_forward.1
$region0: #{upsample_forward.1}
  #allocation0 [shape = 'u32[]', space=smem, size = 0x4, offset = 0x4, fixed_abs, tag = 'smem constant byte address 0x4 - core index']
  #allocation1 [shape = 'u32[144,128]{1,0:T(1,128)}', space=vmem, size = 0x12000, scoped, tag = 'internal scratch']
  %s0 = inlined_call_operand.vmem [shape: bf16[2,18,18,32], index: 0, kind: input, shape index: {}]
  %s1 = inlined_call_operand.vmem [shape: bf16[16,32,128], index: 1, kind: input, shape index: {}]
  %s2 = inlined_call_operand.vmem [shape: f32[1,128], index: 2, kind: input, shape index: {}]
  %s3 = inlined_call_operand.vmem [shape: f32[2,4,16,16,128], index: 3, kind: output, shape index: {}]
  %s4 = sld [smem:[#allocation0]]
  $region79: #{upsample_forward.1} parent=0
    _
  %s6 = ssub.s32 1, %s4
  %s7 = scalar_select 0, %s6, %s4
  $region1: #{upsample_forward.1} parent=0
    #allocation2 [shape = 'u8[524288]{0}', space=vmem, size = 0x80000, scoped, tag = 'output window, operand 0']
    loop: start=0, step=1, limit=6
    $region2: #{upsample_forward.1} parent=1 // loop_pre_header
      _
    $region3: #{upsample_forward.1} parent=1 // loop_header
      %s9 = sphi 0, %s13
      %p10 = scmp.ge.s32.totalorder %s9, 6
      %s16 = sphi 0, %s35
      %s17 = sphi 0, %s31
      %s18 = sphi 0, %s27
      %s19 = sphi 0, %s16
      %s20 = sphi 0, %s17
      %s21 = sphi 0, %s18
      %s22 = sphi 0, %s19
      %s23 = sphi 0, %s20
      %s24 = sphi 0, %s21
      %s38 = sphi 0, %s40
      %s41 = sphi 0, %s38
      %s42 = sphi 0, %s41
      %s58 = sphi 0, %s42
      %s64 = sphi 0, %s66
      %s67 = sphi 0, %s64
      %s68 = sphi 0, %s67
      %s84 = sphi 0, %s68
      %s90 = sphi 0, %s92
      %s93 = sphi 0, %s90
      %s94 = sphi 0, %s93
      %s110 = sphi 0, %s94
      %s120 = sphi 0, %s122
      %s123 = sphi 0, %s120
      %s124 = sphi 0, %s123
      %s140 = sphi 0, %s124
    $region4: #{upsample_forward.1} parent=1 // loop_header_branch
      %12 = sbr.rel (%p10) target = $region8
    $region5: #{upsample_forward.1} parent=1 // loop_body
      %s14 = ssub.s32 %s9, 1
      %s15 = ssub.s32 %s9, 2
      %s25 = sadd.s32 1, %s18
      %p26 = scmp.ge.s32.totalorder %s25, 2
      %s27 = scalar_select %p26, 0, %s25
      %s28 = sadd.s32 1, %s17
      %s29 = scalar_select %p26, %s28, %s17
      %p30 = scmp.ge.s32.totalorder %s29, 1
      %s31 = scalar_select %p30, 0, %s29
      %s32 = sadd.s32 1, %s16
      %s33 = scalar_select %p30, %s32, %s16
      %p34 = scmp.ge.s32.totalorder %s33, 2
      %s35 = scalar_select %p34, 0, %s33
      %s36 = ssub.s32 %s16, %s35
      %p37 = scmp.eq.s32.totalorder %s36, 0
      %s39 = sadd.s32 %s38, 1
      %s40 = scalar_select %p37, %s38, %s39
      %p43 = pneg %p37
      %p44 = scmp.eq.s32.totalorder %s9, 3
      %p45 = por %p43, %p44
      %p46 = scmp.ne.s32.totalorder %s38, %s41
      %p47 = scmp.eq.s32.totalorder %s9, 0
      %p48 = por %p46, %p47
      %p49 = scmp.ne.s32.totalorder %s38, %s41
      %p50 = scmp.eq.s32.totalorder %s14, 3
      %p51 = por %p49, %p50
      %p52 = scmp.ne.s32.totalorder %s41, %s42
      %p53 = scmp.eq.s32.totalorder %s14, 0
      %p54 = por %p52, %p53
      %p55 = scmp.ne.s32.totalorder %s41, %s42
      %p56 = scmp.eq.s32.totalorder %s15, 3
      %p57 = por %p55, %p56
      %p59 = scmp.ne.s32.totalorder %s42, %s58
      %p60 = scmp.eq.s32.totalorder %s15, 0
      %p61 = por %p59, %p60
      %s62 = ssub.s32 %s17, %s31
      %p63 = scmp.eq.s32.totalorder %s62, 0
      %s65 = sadd.s32 %s64, 1
      %s66 = scalar_select %p63, %s64, %s65
      %p69 = pneg %p63
      %p70 = scmp.eq.s32.totalorder %s9, 3
      %p71 = por %p69, %p70
      %p72 = scmp.ne.s32.totalorder %s64, %s67
      %p73 = scmp.eq.s32.totalorder %s9, 0
      %p74 = por %p72, %p73
      %p75 = scmp.ne.s32.totalorder %s64, %s67
      %p76 = scmp.eq.s32.totalorder %s14, 3
      %p77 = por %p75, %p76
      %p78 = scmp.ne.s32.totalorder %s67, %s68
      %p79 = scmp.eq.s32.totalorder %s14, 0
      %p80 = por %p78, %p79
      %p81 = scmp.ne.s32.totalorder %s67, %s68
      %p82 = scmp.eq.s32.totalorder %s15, 3
      %p83 = por %p81, %p82
      %p85 = scmp.ne.s32.totalorder %s68, %s84
      %p86 = scmp.eq.s32.totalorder %s15, 0
      %p87 = por %p85, %p86
      %s88 = ssub.s32 %s17, %s31
      %p89 = scmp.eq.s32.totalorder %s88, 0
      %s91 = sadd.s32 %s90, 1
      %s92 = scalar_select %p89, %s90, %s91
      %p95 = pneg %p89
      %p96 = scmp.eq.s32.totalorder %s9, 3
      %p97 = por %p95, %p96
      %p98 = scmp.ne.s32.totalorder %s90, %s93
      %p99 = scmp.eq.s32.totalorder %s9, 0
      %p100 = por %p98, %p99
      %p101 = scmp.ne.s32.totalorder %s90, %s93
      %p102 = scmp.eq.s32.totalorder %s14, 3
      %p103 = por %p101, %p102
      %p104 = scmp.ne.s32.totalorder %s93, %s94
      %p105 = scmp.eq.s32.totalorder %s14, 0
      %p106 = por %p104, %p105
      %p107 = scmp.ne.s32.totalorder %s93, %s94
      %p108 = scmp.eq.s32.totalorder %s15, 3
      %p109 = por %p107, %p108
      %p111 = scmp.ne.s32.totalorder %s94, %s110
      %p112 = scmp.eq.s32.totalorder %s15, 0
      %p113 = por %p111, %p112
      %s114 = ssub.s32 %s16, %s35
      %s115 = ssub.s32 %s18, %s27
      %s116 = sor.u32 %s114, %s115
      %s117 = ssub.s32 %s17, %s31
      %s118 = sor.u32 %s116, %s117
      %p119 = scmp.eq.s32.totalorder %s118, 0
      %s121 = sadd.s32 %s120, 1
      %s122 = scalar_select %p119, %s120, %s121
      %p125 = pneg %p119
      %p126 = scmp.eq.s32.totalorder %s9, 3
      %p127 = por %p125, %p126
      %p128 = scmp.ne.s32.totalorder %s120, %s123
      %p129 = scmp.eq.s32.totalorder %s9, 0
      %p130 = por %p128, %p129
      %p131 = scmp.ne.s32.totalorder %s120, %s123
      %p132 = scmp.eq.s32.totalorder %s14, 3
      %p133 = por %p131, %p132
      %p134 = scmp.ne.s32.totalorder %s123, %s124
      %p135 = scmp.eq.s32.totalorder %s14, 0
      %p136 = por %p134, %p135
      %p137 = scmp.ne.s32.totalorder %s123, %s124
      %p138 = scmp.eq.s32.totalorder %s15, 3
      %p139 = por %p137, %p138
      %p141 = scmp.ne.s32.totalorder %s124, %s140
      %p142 = scmp.eq.s32.totalorder %s15, 0
      %p143 = por %p141, %p142
      %p144 = scmp.le.s32.totalorder 1, %s9
      %p145 = scmp.lt.s32.totalorder %s9, 5
      %p146 = pnand %p144, %p145
      %p147 = pneg %p146
      // Predicated region
      $region9: #{upsample_forward.1} parent=5 // pred_check
        _
      $region10: #{upsample_forward.1} parent=5 // pred_check_branch
        %149 = sbr.rel (%p146) target = $region12
      $region11: #{upsample_forward.1} parent=5 // pred_region
        %s150 = ssub.s32 %s9, 1
        // Predicated region
        $region13: #{upsample_forward.1} parent=11 // pred_check
          %p151 = pneg %p80
        $region14: #{upsample_forward.1} parent=11 // pred_check_branch
          %153 = sbr.rel (%p151) target = $region16
        $region15: #{upsample_forward.1} parent=11 // pred_region
          %p154 = scmp.lt.s32.totalorder %s20, 0
          %s155 = scalar_select %p154, %s20, 0
          %s156 = smul.addr %s155, 4
          %s157 = scalar_lea.vmem %s1, %s156
        $region16: #{upsample_forward.1} parent=11 // pred_fallthru
          _
        // Predicated region
        $region17: #{upsample_forward.1} parent=11 // pred_check
          %p158 = pneg %p106
        $region18: #{upsample_forward.1} parent=11 // pred_check_branch
          %160 = sbr.rel (%p158) target = $region20
        $region19: #{upsample_forward.1} parent=11 // pred_region
          %p161 = scmp.lt.s32.totalorder %s20, 0
          %s162 = scalar_select %p161, %s20, 0
          %s163 = scalar_lea.vmem %s2, %s162
        $region20: #{upsample_forward.1} parent=11 // pred_fallthru
          _
      $region12: #{upsample_forward.1} parent=5 // pred_fallthru
        _
      %p164 = scmp.lt.s32.totalorder %s9, 4
      // Predicated region
      $region21: #{upsample_forward.1} parent=5 // pred_check
        %p165 = pneg %p164
      $region22: #{upsample_forward.1} parent=5 // pred_check_branch
        %167 = sbr.rel (%p165) target = $region24
      $region23: #{upsample_forward.1} parent=5 // pred_region
        // Predicated region
        $region25: #{upsample_forward.1} parent=23 // pred_check
          %p168 = pneg %p48
        $region26: #{upsample_forward.1} parent=23 // pred_check_branch
          %170 = sbr.rel (%p168) target = $region28
        $region27: #{upsample_forward.1} parent=23 // pred_region
          %p171 = scmp.lt.s32.totalorder %s16, 1
          %s172 = scalar_select %p171, %s16, 1
          %s173 = smul.addr %s172, 54
          %s174 = smul.addr %s173, 4
          %s175 = scalar_lea.vmem %s0, %s174
        $region28: #{upsample_forward.1} parent=23 // pred_fallthru
          _
      $region24: #{upsample_forward.1} parent=5 // pred_fallthru
        _
      %p176 = scmp.le.s32.totalorder 1, %s9
      %p177 = scmp.lt.s32.totalorder %s9, 5
      %p178 = pnand %p176, %p177
      %p179 = pneg %p178
      // Predicated region
      $region29: #{upsample_forward.1} parent=5 // pred_check
        _
      $region30: #{upsample_forward.1} parent=5 // pred_check_branch
        %181 = sbr.rel (%p178) target = $region32
      $region31: #{upsample_forward.1} parent=5 // pred_region
        %s182 = ssub.s32 %s9, 1
        %p183 = scmp.lt.s32.totalorder %s19, 1
        %s184 = scalar_select %p183, %s19, 1
        %s185 = smul.addr %s184, 54
        %s186 = smul.addr %s185, 4
        %s187 = scalar_lea.vmem %s0, %s186
        %p188 = pneg %p54
        %p189 = pneg %p51
        %p190 = scmp.lt.s32.totalorder %s20, 0
        %s191 = scalar_select %p190, %s20, 0
        %s192 = smul.addr %s191, 4
        %s193 = scalar_lea.vmem %s1, %s192
        %p194 = pneg %p80
        %p195 = pneg %p77
        %p196 = scmp.lt.s32.totalorder %s20, 0
        %s197 = scalar_select %p196, %s20, 0
        %s198 = scalar_lea.vmem %s2, %s197
        %p199 = pneg %p106
        %p200 = pneg %p103
        %p201 = pneg %p136
        %p202 = pneg %p133
        %s203 = sand.u32 %s123, 1
        %s204 = sand.u32 %s123, 1
        %s205 = smul.addr %s204, 512
        %s206 = scalar_lea.vmem [#allocation2], %s205
        %p207 = scmp.lt.s32.totalorder %s19, 1
        %s208 = scalar_select %p207, %s19, 1
        %s209 = smul.addr %s208, 54
        %s210 = smul.addr %s209, 4
        %s211 = scalar_lea.vmem %s0, %s210
        %p212 = scmp.lt.s32.totalorder %s20, 0
        %s213 = scalar_select %p212, %s20, 0
        %s214 = smul.addr %s213, 4
        %s215 = scalar_lea.vmem %s1, %s214
        %p216 = scmp.lt.s32.totalorder %s20, 0
        %s217 = scalar_select %p216, %s20, 0
        %s218 = scalar_lea.vmem %s2, %s217
        %s219 = smul.u32 8, %s21
        %s221 = smul.u32 %s21, 8
        %v222 = vld [vmem:[%s218] sm:$0x1]
        %s223 = smul.u32 %s221, 3
        %s224 = smul.addr %s223, 4
        %s225 = scalar_lea.vmem %s211, %s224
        %v226 = vld [vmem:[%s225] sm:$0xf]
        %v227 = vld [vmem:[%s225 + $0x4] sm:$0xf]
        %v228 = vld [vmem:[%s225 + $0x8] sm:$0x1]
        %v229 = vld [vmem:[%s225 + $0xc] sm:$0xf]
        %v230 = vld [vmem:[%s225 + $0x10] sm:$0xf]
        %v231 = vld [vmem:[%s225 + $0x14] sm:$0x1]
        %v232 = vld [vmem:[%s225 + $0x18] sm:$0xf]
        %v233 = vld [vmem:[%s225 + $0x1c] sm:$0xf]
        %v234 = vld [vmem:[%s225 + $0x20] sm:$0x1]
        %v235 = vld [vmem:[%s225 + $0x24] sm:$0xf]
        %v236 = vld [vmem:[%s225 + $0x28] sm:$0xf]
        %v237 = vld [vmem:[%s225 + $0x2c] sm:$0x1]
        %v238 = vld [vmem:[%s225 + $0x30] sm:$0xf]
        %v239 = vld [vmem:[%s225 + $0x34] sm:$0xf]
        %v240 = vld [vmem:[%s225 + $0x38] sm:$0x1]
        %v241 = vld [vmem:[%s225 + $0x3c] sm:$0xf]
        %v242 = vld [vmem:[%s225 + $0x40] sm:$0xf]
        %v243 = vld [vmem:[%s225 + $0x44] sm:$0x1]
        %v244 = vld [vmem:[%s225 + $0x48] sm:$0xf]
        %v245 = vld [vmem:[%s225 + $0x4c] sm:$0xf]
        %v246 = vld [vmem:[%s225 + $0x50] sm:$0x1]
        %v247 = vld [vmem:[%s225 + $0x54] sm:$0xf]
        %v248 = vld [vmem:[%s225 + $0x58] sm:$0xf]
        %v249 = vld [vmem:[%s225 + $0x5c] sm:$0x1]
        %v250 = vld [vmem:[%s225 + $0x60] sm:$0xf]
        %v251 = vld [vmem:[%s225 + $0x64] sm:$0xf]
        %v252 = vld [vmem:[%s225 + $0x68] sm:$0x1]
        %v253 = vld [vmem:[%s225 + $0x6c] sm:$0xf]
        %v254 = vld [vmem:[%s225 + $0x70] sm:$0xf]
        %v255 = vld [vmem:[%s225 + $0x74] sm:$0x1]
        %v257 = vlaneseq
        %v258 = vshrl.u32 %v257, 7
        %v259 = vsub.s32 0, %v258
        %v260 = vrot.slane %v222, %v259
        %v262 = vld [vmem:[%s215] sm:$0xf]
        %v263 = vld [vmem:[%s215 + $0x4] sm:$0xf]
        %v264 = vld [vmem:[%s215 + $0x8] sm:$0xf]
        %v265 = vld [vmem:[%s215 + $0xc] sm:$0xf]
        %v282 = vunpack.c.l.b16 %v226
        %v283 = vunpack.c.l.b16 %v227
        %v284 = vunpack.c.l.b16 %v229
        %v285 = vunpack.c.l.b16 %v230
        %v286 = vunpack.c.l.b16 %v232
        %v287 = vunpack.c.l.b16 %v233
        %v288 = vunpack.c.l.b16 %v235
        %v289 = vunpack.c.l.b16 %v236
        %v290 = vunpack.c.l.b16 %v238
        %v291 = vunpack.c.l.b16 %v239
        %v292 = vunpack.c.l.b16 %v241
        %v293 = vunpack.c.l.b16 %v242
        %v294 = vunpack.c.l.b16 %v244
        %v295 = vunpack.c.l.b16 %v245
        %v296 = vunpack.c.l.b16 %v247
        %v297 = vunpack.c.l.b16 %v248
        %v298 = vpack.c.b16 %v283, %v282
        %v299 = vpack.c.b16 %v285, %v284
        %v300 = vpack.c.b16 %v287, %v286
        %v301 = vpack.c.b16 %v289, %v288
        %v302 = vpack.c.b16 %v291, %v290
        %v303 = vpack.c.b16 %v293, %v292
        %v304 = vpack.c.b16 %v295, %v294
        %v305 = vpack.c.b16 %v297, %v296
        %v310 = vunpack.c.l.b16 %v262
        %v311 = vunpack.c.l.b16 %v263
        %v312 = vunpack.c.l.b16 %v264
        %v313 = vunpack.c.l.b16 %v265
        %v314 = vpack.c.b16 %v311, %v310
        %v315 = vpack.c.b16 %v313, %v312
        %vm318 = vcmask 261120
        %v320 = vsel %vm318, %v298, 0
        %v323 = vsel %vm318, %v299, 0
        %v326 = vsel %vm318, %v300, 0
        %v329 = vsel %vm318, %v301, 0
        %v332 = vsel %vm318, %v302, 0
        %v335 = vsel %vm318, %v303, 0
        %v338 = vsel %vm318, %v304, 0
        %v341 = vsel %vm318, %v305, 0
        %343 = vmatprep.subr.bf16.mxu0 0
        %344 = vmatpush1.bf16.msra.mxu0 %v314
        %345 = vmatprep.subr.bf16.mxu0 0
        %346 = vmatpush1.bf16.msra.mxu0 %v315
        %347 = vmatprep.subr.bf16.mxu0 0
        %348 = vmatpush1.bf16.msra.mxu0 0
        %349 = vmatprep.subr.bf16.mxu0 0
        %350 = vmatpush1.bf16.msra.mxu0 0
        %351 = vmatprep.subr.bf16.mxu0 0
        %352 = vmatpush1.bf16.msra.mxu0 0
        %353 = vmatprep.subr.bf16.mxu0 0
        %354 = vmatpush1.bf16.msra.mxu0 0
        %355 = vmatprep.subr.bf16.mxu0 0
        %356 = vmatpush1.bf16.msra.mxu0 0
        %357 = vmatprep.subr.bf16.mxu0 0
        %358 = vmatpush1.bf16.msra.mxu0 0
        %359 = vmatprep.subr.bf16.mxu0 0
        %360 = vmatpush1.bf16.msra.mxu0 0
        %361 = vmatprep.subr.bf16.mxu0 0
        %362 = vmatpush1.bf16.msra.mxu0 0
        %363 = vmatprep.subr.bf16.mxu0 0
        %364 = vmatpush1.bf16.msra.mxu0 0
        %365 = vmatprep.subr.bf16.mxu0 0
        %366 = vmatpush1.bf16.msra.mxu0 0
        %367 = vmatprep.subr.bf16.mxu0 0
        %368 = vmatpush1.bf16.msra.mxu0 0
        %369 = vmatprep.subr.bf16.mxu0 0
        %370 = vmatpush1.bf16.msra.mxu0 0
        %371 = vmatprep.subr.bf16.mxu0 0
        %372 = vmatpush1.bf16.msra.mxu0 0
        %373 = vmatprep.subr.bf16.mxu0 0
        %374 = vmatpush1.bf16.msra.mxu0 0
        %375 = vmatprep.mubr.bf16.mxu0 0
        %376 = vmatmul.mubr.bf16.gmra.mrb[0].mxu0 %v320
        %v377 = vpop.f32.mrb[0].mxu0
        %v378 = vadd.f32 0.0, %v377
        %v379 = vpop.f32.mrb[0].mxu0
        %v380 = vpop.f32.mrb[0].mxu0
        %v381 = vadd.f32 0.0, %v380
        %v382 = vpop.f32.mrb[0].mxu0
        %383 = vmatprep.mubr.bf16.mxu0 0
        %384 = vmatmul.mubr.bf16.gmra.mrb[0].mxu0 %v323
        %v385 = vpop.f32.mrb[0].mxu0
        %v386 = vadd.f32 0.0, %v385
        %v387 = vpop.f32.mrb[0].mxu0
        %v388 = vpop.f32.mrb[0].mxu0
        %v389 = vadd.f32 0.0, %v388
        %v390 = vpop.f32.mrb[0].mxu0
        %391 = vmatprep.mubr.bf16.mxu0 0
        %392 = vmatmul.mubr.bf16.gmra.mrb[0].mxu0 %v326
        %v393 = vpop.f32.mrb[0].mxu0
        %v394 = vadd.f32 0.0, %v393
        %v395 = vpop.f32.mrb[0].mxu0
        %v396 = vpop.f32.mrb[0].mxu0
        %v397 = vadd.f32 0.0, %v396
        %v398 = vpop.f32.mrb[0].mxu0
        %399 = vmatprep.mubr.bf16.mxu0 0
        %400 = vmatmul.mubr.bf16.gmra.mrb[0].mxu0 %v329
        %v401 = vpop.f32.mrb[0].mxu0
        %v402 = vadd.f32 0.0, %v401
        %v403 = vpop.f32.mrb[0].mxu0
        %v404 = vpop.f32.mrb[0].mxu0
        %v405 = vadd.f32 0.0, %v404
        %v406 = vpop.f32.mrb[0].mxu0
        %407 = vmatprep.mubr.bf16.mxu0 0
        %408 = vmatmul.mubr.bf16.gmra.mrb[0].mxu0 %v332
        %v409 = vpop.f32.mrb[0].mxu0
        %v410 = vadd.f32 0.0, %v409
        %v411 = vpop.f32.mrb[0].mxu0
        %v412 = vpop.f32.mrb[0].mxu0
        %v413 = vadd.f32 0.0, %v412
        %v414 = vpop.f32.mrb[0].mxu0
        %415 = vmatprep.mubr.bf16.mxu0 0
        %416 = vmatmul.mubr.bf16.gmra.mrb[0].mxu0 %v335
        %v417 = vpop.f32.mrb[0].mxu0
        %v418 = vadd.f32 0.0, %v417
        %v419 = vpop.f32.mrb[0].mxu0
        %v420 = vpop.f32.mrb[0].mxu0
        %v421 = vadd.f32 0.0, %v420
        %v422 = vpop.f32.mrb[0].mxu0
        %423 = vmatprep.mubr.bf16.mxu0 0
        %424 = vmatmul.mubr.bf16.gmra.mrb[0].mxu0 %v338
        %v425 = vpop.f32.mrb[0].mxu0
        %v426 = vadd.f32 0.0, %v425
        %v427 = vpop.f32.mrb[0].mxu0
        %v428 = vpop.f32.mrb[0].mxu0
        %v429 = vadd.f32 0.0, %v428
        %v430 = vpop.f32.mrb[0].mxu0
        %431 = vmatprep.mubr.bf16.mxu0 0
        %432 = vmatmul.mubr.bf16.gmra.mrb[0].mxu0 %v341
        %v433 = vpop.f32.mrb[0].mxu0
        %v434 = vadd.f32 0.0, %v433
        %v435 = vpop.f32.mrb[0].mxu0
        %v436 = vpop.f32.mrb[0].mxu0
        %v437 = vadd.f32 0.0, %v436
        %v438 = vpop.f32.mrb[0].mxu0
        %439 = vdwg.mxu0
        %v440 = vadd.f32 %v260, %v378
        %v441 = vadd.f32 %v260, %v381
        %v442 = vadd.f32 %v260, %v386
        %v443 = vadd.f32 %v260, %v389
        %v444 = vadd.f32 %v260, %v394
        %v445 = vadd.f32 %v260, %v397
        %v446 = vadd.f32 %v260, %v402
        %v447 = vadd.f32 %v260, %v405
        %v448 = vadd.f32 %v260, %v410
        %v449 = vadd.f32 %v260, %v413
        %v450 = vadd.f32 %v260, %v418
        %v451 = vadd.f32 %v260, %v421
        %v452 = vadd.f32 %v260, %v426
        %v453 = vadd.f32 %v260, %v429
        %v454 = vadd.f32 %v260, %v434
        %v455 = vadd.f32 %v260, %v437
        %vm456 = vsmask.f32 3328
        %vm457 = vsmask.f32 7440
        %vm458 = vmor %vm456, %vm457
        %v460 = vshrl.u32 %v226, 16
        %v462 = vrot.slane %v460, 4
        %v463 = vshll.u32 %v226, 16
        %v465 = vrot.slane %v463, 5
        %v466 = vor.u32 %v462, %v465
        %v467 = vrot.slane %v466, 4
        %v469 = vshll.u32 %v227, 16
        %v471 = vrot.slane %v469, 5
        %v472 = vsel %vm458, %v467, %v471
        %v473 = vshrl.u32 %v227, 16
        %v475 = vrot.slane %v473, 4
        %v476 = vor.u32 %v475, %v471
        %v477 = vrot.slane %v476, 4
        %v479 = vshll.u32 %v228, 16
        %v481 = vrot.slane %v479, 5
        %v482 = vsel %vm458, %v477, %v481
        %v484 = vshrl.u32 %v229, 16
        %v486 = vrot.slane %v484, 4
        %v487 = vshll.u32 %v229, 16
        %v489 = vrot.slane %v487, 5
        %v490 = vor.u32 %v486, %v489
        %v491 = vrot.slane %v490, 4
        %v493 = vshll.u32 %v230, 16
        %v495 = vrot.slane %v493, 5
        %v496 = vsel %vm458, %v491, %v495
        %v497 = vshrl.u32 %v230, 16
        %v499 = vrot.slane %v497, 4
        %v500 = vor.u32 %v499, %v495
        %v501 = vrot.slane %v500, 4
        %v503 = vshll.u32 %v231, 16
        %v505 = vrot.slane %v503, 5
        %v506 = vsel %vm458, %v501, %v505
        %v508 = vshrl.u32 %v232, 16
        %v510 = vrot.slane %v508, 4
        %v511 = vshll.u32 %v232, 16
        %v513 = vrot.slane %v511, 5
        %v514 = vor.u32 %v510, %v513
        %v515 = vrot.slane %v514, 4
        %v517 = vshll.u32 %v233, 16
        %v519 = vrot.slane %v517, 5
        %v520 = vsel %vm458, %v515, %v519
        %v521 = vshrl.u32 %v233, 16
        %v523 = vrot.slane %v521, 4
        %v524 = vor.u32 %v523, %v519
        %v525 = vrot.slane %v524, 4
        %v527 = vshll.u32 %v234, 16
        %v529 = vrot.slane %v527, 5
        %v530 = vsel %vm458, %v525, %v529
        %v532 = vshrl.u32 %v235, 16
        %v534 = vrot.slane %v532, 4
        %v535 = vshll.u32 %v235, 16
        %v537 = vrot.slane %v535, 5
        %v538 = vor.u32 %v534, %v537
        %v539 = vrot.slane %v538, 4
        %v541 = vshll.u32 %v236, 16
        %v543 = vrot.slane %v541, 5
        %v544 = vsel %vm458, %v539, %v543
        %v545 = vshrl.u32 %v236, 16
        %v547 = vrot.slane %v545, 4
        %v548 = vor.u32 %v547, %v543
        %v549 = vrot.slane %v548, 4
        %v551 = vshll.u32 %v237, 16
        %v553 = vrot.slane %v551, 5
        %v554 = vsel %vm458, %v549, %v553
        %v556 = vshrl.u32 %v238, 16
        %v558 = vrot.slane %v556, 4
        %v559 = vshll.u32 %v238, 16
        %v561 = vrot.slane %v559, 5
        %v562 = vor.u32 %v558, %v561
        %v563 = vrot.slane %v562, 4
        %v565 = vshll.u32 %v239, 16
        %v567 = vrot.slane %v565, 5
        %v568 = vsel %vm458, %v563, %v567
        %v569 = vshrl.u32 %v239, 16
        %v571 = vrot.slane %v569, 4
        %v572 = vor.u32 %v571, %v567
        %v573 = vrot.slane %v572, 4
        %v575 = vshll.u32 %v240, 16
        %v577 = vrot.slane %v575, 5
        %v578 = vsel %vm458, %v573, %v577
        %v580 = vshrl.u32 %v241, 16
        %v582 = vrot.slane %v580, 4
        %v583 = vshll.u32 %v241, 16
        %v585 = vrot.slane %v583, 5
        %v586 = vor.u32 %v582, %v585
        %v587 = vrot.slane %v586, 4
        %v589 = vshll.u32 %v242, 16
        %v591 = vrot.slane %v589, 5
        %v592 = vsel %vm458, %v587, %v591
        %v593 = vshrl.u32 %v242, 16
        %v595 = vrot.slane %v593, 4
        %v596 = vor.u32 %v595, %v591
        %v597 = vrot.slane %v596, 4
        %v599 = vshll.u32 %v243, 16
        %v601 = vrot.slane %v599, 5
        %v602 = vsel %vm458, %v597, %v601
        %v604 = vshrl.u32 %v244, 16
        %v606 = vrot.slane %v604, 4
        %v607 = vshll.u32 %v244, 16
        %v609 = vrot.slane %v607, 5
        %v610 = vor.u32 %v606, %v609
        %v611 = vrot.slane %v610, 4
        %v613 = vshll.u32 %v245, 16
        %v615 = vrot.slane %v613, 5
        %v616 = vsel %vm458, %v611, %v615
        %v617 = vshrl.u32 %v245, 16
        %v619 = vrot.slane %v617, 4
        %v620 = vor.u32 %v619, %v615
        %v621 = vrot.slane %v620, 4
        %v623 = vshll.u32 %v246, 16
        %v625 = vrot.slane %v623, 5
        %v626 = vsel %vm458, %v621, %v625
        %v628 = vshrl.u32 %v247, 16
        %v630 = vrot.slane %v628, 4
        %v631 = vshll.u32 %v247, 16
        %v633 = vrot.slane %v631, 5
        %v634 = vor.u32 %v630, %v633
        %v635 = vrot.slane %v634, 4
        %v637 = vshll.u32 %v248, 16
        %v639 = vrot.slane %v637, 5
        %v640 = vsel %vm458, %v635, %v639
        %v641 = vshrl.u32 %v248, 16
        %v643 = vrot.slane %v641, 4
        %v644 = vor.u32 %v643, %v639
        %v645 = vrot.slane %v644, 4
        %v647 = vshll.u32 %v249, 16
        %v649 = vrot.slane %v647, 5
        %v650 = vsel %vm458, %v645, %v649
        %s651 = scalar_lea.vmem %s215, 16
        %v652 = vld [vmem:[%s651] sm:$0xf]
        %v653 = vld [vmem:[%s651 + $0x4] sm:$0xf]
        %v654 = vld [vmem:[%s651 + $0x8] sm:$0xf]
        %v655 = vld [vmem:[%s651 + $0xc] sm:$0xf]
        %v656 = vunpack.c.l.b16 %v472
        %v657 = vunpack.c.l.b16 %v482
        %v658 = vunpack.c.l.b16 %v496
        %v659 = vunpack.c.l.b16 %v506
        %v660 = vunpack.c.l.b16 %v520
        %v661 = vunpack.c.l.b16 %v530
        %v662 = vunpack.c.l.b16 %v544
        %v663 = vunpack.c.l.b16 %v554
        %v664 = vunpack.c.l.b16 %v568
        %v665 = vunpack.c.l.b16 %v578
        %v666 = vunpack.c.l.b16 %v592
        %v667 = vunpack.c.l.b16 %v602
        %v668 = vunpack.c.l.b16 %v616
        %v669 = vunpack.c.l.b16 %v626
        %v670 = vunpack.c.l.b16 %v640
        %v671 = vunpack.c.l.b16 %v650
        %v672 = vpack.c.b16 %v657, %v656
        %v673 = vpack.c.b16 %v659, %v658
        %v674 = vpack.c.b16 %v661, %v660
        %v675 = vpack.c.b16 %v663, %v662
        %v676 = vpack.c.b16 %v665, %v664
        %v677 = vpack.c.b16 %v667, %v666
        %v678 = vpack.c.b16 %v669, %v668
        %v679 = vpack.c.b16 %v671, %v670
        %v684 = vunpack.c.l.b16 %v652
        %v685 = vunpack.c.l.b16 %v653
        %v686 = vunpack.c.l.b16 %v654
        %v687 = vunpack.c.l.b16 %v655
        %v688 = vpack.c.b16 %v685, %v684
        %v689 = vpack.c.b16 %v687, %v686
        %v693 = vsel %vm318, %v672, 0
        %v696 = vsel %vm318, %v673, 0
        %v699 = vsel %vm318, %v674, 0
        %v702 = vsel %vm318, %v675, 0
        %v705 = vsel %vm318, %v676, 0
        %v708 = vsel %vm318, %v677, 0
        %v711 = vsel %vm318, %v678, 0
        %v714 = vsel %vm318, %v679, 0
        %716 = vmatprep.subr.bf16.mxu0 0
        %717 = vmatpush1.bf16.msra.mxu0 %v688
        %718 = vmatprep.subr.bf16.mxu0 0
        %719 = vmatpush1.bf16.msra.mxu0 %v689
        %720 = vmatprep.subr.bf16.mxu0 0
        %721 = vmatpush1.bf16.msra.mxu0 0
        %722 = vmatprep.subr.bf16.mxu0 0
        %723 = vmatpush1.bf16.msra.mxu0 0
        %724 = vmatprep.subr.bf16.mxu0 0
        %725 = vmatpush1.bf16.msra.mxu0 0
        %726 = vmatprep.subr.bf16.mxu0 0
        %727 = vmatpush1.bf16.msra.mxu0 0
        %728 = vmatprep.subr.bf16.mxu0 0
        %729 = vmatpush1.bf16.msra.mxu0 0
        %730 = vmatprep.subr.bf16.mxu0 0
        %731 = vmatpush1.bf16.msra.mxu0 0
        %732 = vmatprep.subr.bf16.mxu0 0
        %733 = vmatpush1.bf16.msra.mxu0 0
        %734 = vmatprep.subr.bf16.mxu0 0
        %735 = vmatpush1.bf16.msra.mxu0 0
        %736 = vmatprep.subr.bf16.mxu0 0
        %737 = vmatpush1.bf16.msra.mxu0 0
        %738 = vmatprep.subr.bf16.mxu0 0
        %739 = vmatpush1.bf16.msra.mxu0 0
        %740 = vmatprep.subr.bf16.mxu0 0
        %741 = vmatpush1.bf16.msra.mxu0 0
        %742 = vmatprep.subr.bf16.mxu0 0
        %743 = vmatpush1.bf16.msra.mxu0 0
        %744 = vmatprep.subr.bf16.mxu0 0
        %745 = vmatpush1.bf16.msra.mxu0 0
        %746 = vmatprep.subr.bf16.mxu0 0
        %747 = vmatpush1.bf16.msra.mxu0 0
        %748 = vmatprep.mubr.bf16.mxu0 0
        %749 = vmatmul.mubr.bf16.gmra.mrb[0].mxu0 %v693
        %v750 = vpop.f32.mrb[0].mxu0
        %v751 = vadd.f32 0.0, %v750
        %v752 = vpop.f32.mrb[0].mxu0
        %v753 = vpop.f32.mrb[0].mxu0
        %v754 = vadd.f32 0.0, %v753
        %v755 = vpop.f32.mrb[0].mxu0
        %756 = vmatprep.mubr.bf16.mxu0 0
        %757 = vmatmul.mubr.bf16.gmra.mrb[0].mxu0 %v696
        %v758 = vpop.f32.mrb[0].mxu0
        %v759 = vadd.f32 0.0, %v758
        %v760 = vpop.f32.mrb[0].mxu0
        %v761 = vpop.f32.mrb[0].mxu0
        %v762 = vadd.f32 0.0, %v761
        %v763 = vpop.f32.mrb[0].mxu0
        %764 = vmatprep.mubr.bf16.mxu0 0
        %765 = vmatmul.mubr.bf16.gmra.mrb[0].mxu0 %v699
        %v766 = vpop.f32.mrb[0].mxu0
        %v767 = vadd.f32 0.0, %v766
        %v768 = vpop.f32.mrb[0].mxu0
        %v769 = vpop.f32.mrb[0].mxu0
        %v770 = vadd.f32 0.0, %v769
        %v771 = vpop.f32.mrb[0].mxu0
        %772 = vmatprep.mubr.bf16.mxu0 0
        %773 = vmatmul.mubr.bf16.gmra.mrb[0].mxu0 %v702
        %v774 = vpop.f32.mrb[0].mxu0
        %v775 = vadd.f32 0.0, %v774
        %v776 = vpop.f32.mrb[0].mxu0
        %v777 = vpop.f32.mrb[0].mxu0
        %v778 = vadd.f32 0.0, %v777
        %v779 = vpop.f32.mrb[0].mxu0
        %780 = vmatprep.mubr.bf16.mxu0 0
        %781 = vmatmul.mubr.bf16.gmra.mrb[0].mxu0 %v705
        %v782 = vpop.f32.mrb[0].mxu0
        %v783 = vadd.f32 0.0, %v782
        %v784 = vpop.f32.mrb[0].mxu0
        %v785 = vpop.f32.mrb[0].mxu0
        %v786 = vadd.f32 0.0, %v785
        %v787 = vpop.f32.mrb[0].mxu0
        %788 = vmatprep.mubr.bf16.mxu0 0
        %789 = vmatmul.mubr.bf16.gmra.mrb[0].mxu0 %v708
        %v790 = vpop.f32.mrb[0].mxu0
        %v791 = vadd.f32 0.0, %v790
        %v792 = vpop.f32.mrb[0].mxu0
        %v793 = vpop.f32.mrb[0].mxu0
        %v794 = vadd.f32 0.0, %v793
        %v795 = vpop.f32.mrb[0].mxu0
        %796 = vmatprep.mubr.bf16.mxu0 0
        %797 = vmatmul.mubr.bf16.gmra.mrb[0].mxu0 %v711
        %v798 = vpop.f32.mrb[0].mxu0
        %v799 = vadd.f32 0.0, %v798
        %v800 = vpop.f32.mrb[0].mxu0
        %v801 = vpop.f32.mrb[0].mxu0
        %v802 = vadd.f32 0.0, %v801
        %v803 = vpop.f32.mrb[0].mxu0
        %804 = vmatprep.mubr.bf16.mxu0 0
        %805 = vmatmul.mubr.bf16.gmra.mrb[0].mxu0 %v714
        %v806 = vpop.f32.mrb[0].mxu0
        %v807 = vadd.f32 0.0, %v806
        %v808 = vpop.f32.mrb[0].mxu0
        %v809 = vpop.f32.mrb[0].mxu0
        %v810 = vadd.f32 0.0, %v809
        %v811 = vpop.f32.mrb[0].mxu0
        %812 = vdwg.mxu0
        %v813 = vadd.f32 %v440, %v751
        %v814 = vadd.f32 %v441, %v754
        %v815 = vadd.f32 %v442, %v759
        %v816 = vadd.f32 %v443, %v762
        %v817 = vadd.f32 %v444, %v767
        %v818 = vadd.f32 %v445, %v770
        %v819 = vadd.f32 %v446, %v775
        %v820 = vadd.f32 %v447, %v778
        %v821 = vadd.f32 %v448, %v783
        %v822 = vadd.f32 %v449, %v786
        %v823 = vadd.f32 %v450, %v791
        %v824 = vadd.f32 %v451, %v794
        %v825 = vadd.f32 %v452, %v799
        %v826 = vadd.f32 %v453, %v802
        %v827 = vadd.f32 %v454, %v807
        %v828 = vadd.f32 %v455, %v810
        %s829 = scalar_lea.vmem %s215, 32
        %v830 = vld [vmem:[%s829] sm:$0xf]
        %v831 = vld [vmem:[%s829 + $0x4] sm:$0xf]
        %v832 = vld [vmem:[%s829 + $0x8] sm:$0xf]
        %v833 = vld [vmem:[%s829 + $0xc] sm:$0xf]
        %v836 = vunpack.c.l.b16 %v250
        %v837 = vunpack.c.l.b16 %v251
        %v838 = vpack.c.b16 %v837, %v836
        %v843 = vunpack.c.l.b16 %v830
        %v844 = vunpack.c.l.b16 %v831
        %v845 = vunpack.c.l.b16 %v832
        %v846 = vunpack.c.l.b16 %v833
        %v847 = vpack.c.b16 %v844, %v843
        %v848 = vpack.c.b16 %v846, %v845
        %v852 = vsel %vm318, %v838, 0
        %854 = vmatprep.subr.bf16.mxu0 0
        %855 = vmatpush1.bf16.msra.mxu0 %v847
        %856 = vmatprep.subr.bf16.mxu0 0
        %857 = vmatpush1.bf16.msra.mxu0 %v848
        %858 = vmatprep.subr.bf16.mxu0 0
        %859 = vmatpush1.bf16.msra.mxu0 0
        %860 = vmatprep.subr.bf16.mxu0 0
        %861 = vmatpush1.bf16.msra.mxu0 0
        %862 = vmatprep.subr.bf16.mxu0 0
        %863 = vmatpush1.bf16.msra.mxu0 0
        %864 = vmatprep.subr.bf16.mxu0 0
        %865 = vmatpush1.bf16.msra.mxu0 0
        %866 = vmatprep.subr.bf16.mxu0 0
        %867 = vmatpush1.bf16.msra.mxu0 0
        %868 = vmatprep.subr.bf16.mxu0 0
        %869 = vmatpush1.bf16.msra.mxu0 0
        %870 = vmatprep.subr.bf16.mxu0 0
        %871 = vmatpush1.bf16.msra.mxu0 0
        %872 = vmatprep.subr.bf16.mxu0 0
        %873 = vmatpush1.bf16.msra.mxu0 0
        %874 = vmatprep.subr.bf16.mxu0 0
        %875 = vmatpush1.bf16.msra.mxu0 0
        %876 = vmatprep.subr.bf16.mxu0 0
        %877 = vmatpush1.bf16.msra.mxu0 0
        %878 = vmatprep.subr.bf16.mxu0 0
        %879 = vmatpush1.bf16.msra.mxu0 0
        %880 = vmatprep.subr.bf16.mxu0 0
        %881 = vmatpush1.bf16.msra.mxu0 0
        %882 = vmatprep.subr.bf16.mxu0 0
        %883 = vmatpush1.bf16.msra.mxu0 0
        %884 = vmatprep.subr.bf16.mxu0 0
        %885 = vmatpush1.bf16.msra.mxu0 0
        %886 = vmatprep.mubr.bf16.mxu0 0
        %887 = vmatmul.mubr.bf16.gmra.mrb[0].mxu0 %v323
        %v888 = vpop.f32.mrb[0].mxu0
        %v889 = vadd.f32 0.0, %v888
        %v890 = vpop.f32.mrb[0].mxu0
        %v891 = vpop.f32.mrb[0].mxu0
        %v892 = vadd.f32 0.0, %v891
        %v893 = vpop.f32.mrb[0].mxu0
        %894 = vmatprep.mubr.bf16.mxu0 0
        %895 = vmatmul.mubr.bf16.gmra.mrb[0].mxu0 %v326
        %v896 = vpop.f32.mrb[0].mxu0
        %v897 = vadd.f32 0.0, %v896
        %v898 = vpop.f32.mrb[0].mxu0
        %v899 = vpop.f32.mrb[0].mxu0
        %v900 = vadd.f32 0.0, %v899
        %v901 = vpop.f32.mrb[0].mxu0
        %902 = vmatprep.mubr.bf16.mxu0 0
        %903 = vmatmul.mubr.bf16.gmra.mrb[0].mxu0 %v329
        %v904 = vpop.f32.mrb[0].mxu0
        %v905 = vadd.f32 0.0, %v904
        %v906 = vpop.f32.mrb[0].mxu0
        %v907 = vpop.f32.mrb[0].mxu0
        %v908 = vadd.f32 0.0, %v907
        %v909 = vpop.f32.mrb[0].mxu0
        %910 = vmatprep.mubr.bf16.mxu0 0
        %911 = vmatmul.mubr.bf16.gmra.mrb[0].mxu0 %v332
        %v912 = vpop.f32.mrb[0].mxu0
        %v913 = vadd.f32 0.0, %v912
        %v914 = vpop.f32.mrb[0].mxu0
        %v915 = vpop.f32.mrb[0].mxu0
        %v916 = vadd.f32 0.0, %v915
        %v917 = vpop.f32.mrb[0].mxu0
        %918 = vmatprep.mubr.bf16.mxu0 0
        %919 = vmatmul.mubr.bf16.gmra.mrb[0].mxu0 %v335
        %v920 = vpop.f32.mrb[0].mxu0
        %v921 = vadd.f32 0.0, %v920
        %v922 = vpop.f32.mrb[0].mxu0
        %v923 = vpop.f32.mrb[0].mxu0
        %v924 = vadd.f32 0.0, %v923
        %v925 = vpop.f32.mrb[0].mxu0
        %926 = vmatprep.mubr.bf16.mxu0 0
        %927 = vmatmul.mubr.bf16.gmra.mrb[0].mxu0 %v338
        %v928 = vpop.f32.mrb[0].mxu0
        %v929 = vadd.f32 0.0, %v928
        %v930 = vpop.f32.mrb[0].mxu0
        %v931 = vpop.f32.mrb[0].mxu0
        %v932 = vadd.f32 0.0, %v931
        %v933 = vpop.f32.mrb[0].mxu0
        %934 = vmatprep.mubr.bf16.mxu0 0
        %935 = vmatmul.mubr.bf16.gmra.mrb[0].mxu0 %v341
        %v936 = vpop.f32.mrb[0].mxu0
        %v937 = vadd.f32 0.0, %v936
        %v938 = vpop.f32.mrb[0].mxu0
        %v939 = vpop.f32.mrb[0].mxu0
        %v940 = vadd.f32 0.0, %v939
        %v941 = vpop.f32.mrb[0].mxu0
        %942 = vmatprep.mubr.bf16.mxu0 0
        %943 = vmatmul.mubr.bf16.gmra.mrb[0].mxu0 %v852
        %v944 = vpop.f32.mrb[0].mxu0
        %v945 = vadd.f32 0.0, %v944
        %v946 = vpop.f32.mrb[0].mxu0
        %v947 = vpop.f32.mrb[0].mxu0
        %v948 = vadd.f32 0.0, %v947
        %v949 = vpop.f32.mrb[0].mxu0
        %950 = vdwg.mxu0
        %v951 = vadd.f32 %v813, %v889
        %v952 = vadd.f32 %v814, %v892
        %v953 = vadd.f32 %v815, %v897
        %v954 = vadd.f32 %v816, %v900
        %v955 = vadd.f32 %v817, %v905
        %v956 = vadd.f32 %v818, %v908
        %v957 = vadd.f32 %v819, %v913
        %v958 = vadd.f32 %v820, %v916
        %v959 = vadd.f32 %v821, %v921
        %v960 = vadd.f32 %v822, %v924
        %v961 = vadd.f32 %v823, %v929
        %v962 = vadd.f32 %v824, %v932
        %v963 = vadd.f32 %v825, %v937
        %v964 = vadd.f32 %v826, %v940
        %v965 = vadd.f32 %v827, %v945
        %v966 = vadd.f32 %v828, %v948
        %v968 = vshrl.u32 %v250, 16
        %v970 = vrot.slane %v968, 4
        %v971 = vshll.u32 %v250, 16
        %v973 = vrot.slane %v971, 5
        %v974 = vor.u32 %v970, %v973
        %v975 = vrot.slane %v974, 4
        %v977 = vshll.u32 %v251, 16
        %v979 = vrot.slane %v977, 5
        %v980 = vsel %vm458, %v975, %v979
        %v981 = vshrl.u32 %v251, 16
        %v983 = vrot.slane %v981, 4
        %v984 = vor.u32 %v983, %v979
        %v985 = vrot.slane %v984, 4
        %v987 = vshll.u32 %v252, 16
        %v989 = vrot.slane %v987, 5
        %v990 = vsel %vm458, %v985, %v989
        %s991 = scalar_lea.vmem %s215, 48
        %v992 = vld [vmem:[%s991] sm:$0xf]
        %v993 = vld [vmem:[%s991 + $0x4] sm:$0xf]
        %v994 = vld [vmem:[%s991 + $0x8] sm:$0xf]
        %v995 = vld [vmem:[%s991 + $0xc] sm:$0xf]
        %v996 = vunpack.c.l.b16 %v980
        %v997 = vunpack.c.l.b16 %v990
        %v998 = vpack.c.b16 %v997, %v996
        %v1003 = vunpack.c.l.b16 %v992
        %v1004 = vunpack.c.l.b16 %v993
        %v1005 = vunpack.c.l.b16 %v994
        %v1006 = vunpack.c.l.b16 %v995
        %v1007 = vpack.c.b16 %v1004, %v1003
        %v1008 = vpack.c.b16 %v1006, %v1005
        %v1012 = vsel %vm318, %v998, 0
        %1014 = vmatprep.subr.bf16.mxu0 0
        %1015 = vmatpush1.bf16.msra.mxu0 %v1007
        %1016 = vmatprep.subr.bf16.mxu0 0
        %1017 = vmatpush1.bf16.msra.mxu0 %v1008
        %1018 = vmatprep.subr.bf16.mxu0 0
        %1019 = vmatpush1.bf16.msra.mxu0 0
        %1020 = vmatprep.subr.bf16.mxu0 0
        %1021 = vmatpush1.bf16.msra.mxu0 0
        %1022 = vmatprep.subr.bf16.mxu0 0
        %1023 = vmatpush1.bf16.msra.mxu0 0
        %1024 = vmatprep.subr.bf16.mxu0 0
        %1025 = vmatpush1.bf16.msra.mxu0 0
        %1026 = vmatprep.subr.bf16.mxu0 0
        %1027 = vmatpush1.bf16.msra.mxu0 0
        %1028 = vmatprep.subr.bf16.mxu0 0
        %1029 = vmatpush1.bf16.msra.mxu0 0
        %1030 = vmatprep.subr.bf16.mxu0 0
        %1031 = vmatpush1.bf16.msra.mxu0 0
        %1032 = vmatprep.subr.bf16.mxu0 0
        %1033 = vmatpush1.bf16.msra.mxu0 0
        %1034 = vmatprep.subr.bf16.mxu0 0
        %1035 = vmatpush1.bf16.msra.mxu0 0
        %1036 = vmatprep.subr.bf16.mxu0 0
        %1037 = vmatpush1.bf16.msra.mxu0 0
        %1038 = vmatprep.subr.bf16.mxu0 0
        %1039 = vmatpush1.bf16.msra.mxu0 0
        %1040 = vmatprep.subr.bf16.mxu0 0
        %1041 = vmatpush1.bf16.msra.mxu0 0
        %1042 = vmatprep.subr.bf16.mxu0 0
        %1043 = vmatpush1.bf16.msra.mxu0 0
        %1044 = vmatprep.subr.bf16.mxu0 0
        %1045 = vmatpush1.bf16.msra.mxu0 0
        %1046 = vmatprep.mubr.bf16.mxu0 0
        %1047 = vmatmul.mubr.bf16.gmra.mrb[0].mxu0 %v696
        %v1048 = vpop.f32.mrb[0].mxu0
        %v1049 = vadd.f32 0.0, %v1048
        %v1050 = vpop.f32.mrb[0].mxu0
        %v1051 = vpop.f32.mrb[0].mxu0
        %v1052 = vadd.f32 0.0, %v1051
        %v1053 = vpop.f32.mrb[0].mxu0
        %1054 = vmatprep.mubr.bf16.mxu0 0
        %1055 = vmatmul.mubr.bf16.gmra.mrb[0].mxu0 %v699
        %v1056 = vpop.f32.mrb[0].mxu0
        %v1057 = vadd.f32 0.0, %v1056
        %v1058 = vpop.f32.mrb[0].mxu0
        %v1059 = vpop.f32.mrb[0].mxu0
        %v1060 = vadd.f32 0.0, %v1059
        %v1061 = vpop.f32.mrb[0].mxu0
        %1062 = vmatprep.mubr.bf16.mxu0 0
        %1063 = vmatmul.mubr.bf16.gmra.mrb[0].mxu0 %v702
        %v1064 = vpop.f32.mrb[0].mxu0
        %v1065 = vadd.f32 0.0, %v1064
        %v1066 = vpop.f32.mrb[0].mxu0
        %v1067 = vpop.f32.mrb[0].mxu0
        %v1068 = vadd.f32 0.0, %v1067
        %v1069 = vpop.f32.mrb[0].mxu0
        %1070 = vmatprep.mubr.bf16.mxu0 0
        %1071 = vmatmul.mubr.bf16.gmra.mrb[0].mxu0 %v705
        %v1072 = vpop.f32.mrb[0].mxu0
        %v1073 = vadd.f32 0.0, %v1072
        %v1074 = vpop.f32.mrb[0].mxu0
        %v1075 = vpop.f32.mrb[0].mxu0
        %v1076 = vadd.f32 0.0, %v1075
        %v1077 = vpop.f32.mrb[0].mxu0
        %1078 = vmatprep.mubr.bf16.mxu0 0
        %1079 = vmatmul.mubr.bf16.gmra.mrb[0].mxu0 %v708
        %v1080 = vpop.f32.mrb[0].mxu0
        %v1081 = vadd.f32 0.0, %v1080
        %v1082 = vpop.f32.mrb[0].mxu0
        %v1083 = vpop.f32.mrb[0].mxu0
        %v1084 = vadd.f32 0.0, %v1083
        %v1085 = vpop.f32.mrb[0].mxu0
        %1086 = vmatprep.mubr.bf16.mxu0 0
        %1087 = vmatmul.mubr.bf16.gmra.mrb[0].mxu0 %v711
        %v1088 = vpop.f32.mrb[0].mxu0
        %v1089 = vadd.f32 0.0, %v1088
        %v1090 = vpop.f32.mrb[0].mxu0
        %v1091 = vpop.f32.mrb[0].mxu0
        %v1092 = vadd.f32 0.0, %v1091
        %v1093 = vpop.f32.mrb[0].mxu0
        %1094 = vmatprep.mubr.bf16.mxu0 0
        %1095 = vmatmul.mubr.bf16.gmra.mrb[0].mxu0 %v714
        %v1096 = vpop.f32.mrb[0].mxu0
        %v1097 = vadd.f32 0.0, %v1096
        %v1098 = vpop.f32.mrb[0].mxu0
        %v1099 = vpop.f32.mrb[0].mxu0
        %v1100 = vadd.f32 0.0, %v1099
        %v1101 = vpop.f32.mrb[0].mxu0
        %1102 = vmatprep.mubr.bf16.mxu0 0
        %1103 = vmatmul.mubr.bf16.gmra.mrb[0].mxu0 %v1012
        %v1104 = vpop.f32.mrb[0].mxu0
        %v1105 = vadd.f32 0.0, %v1104
        %v1106 = vpop.f32.mrb[0].mxu0
        %v1107 = vpop.f32.mrb[0].mxu0
        %v1108 = vadd.f32 0.0, %v1107
        %v1109 = vpop.f32.mrb[0].mxu0
        %1110 = vdwg.mxu0
        %v1111 = vadd.f32 %v951, %v1049
        %v1112 = vadd.f32 %v952, %v1052
        %v1113 = vadd.f32 %v953, %v1057
        %v1114 = vadd.f32 %v954, %v1060
        %v1115 = vadd.f32 %v955, %v1065
        %v1116 = vadd.f32 %v956, %v1068
        %v1117 = vadd.f32 %v957, %v1073
        %v1118 = vadd.f32 %v958, %v1076
        %v1119 = vadd.f32 %v959, %v1081
        %v1120 = vadd.f32 %v960, %v1084
        %v1121 = vadd.f32 %v961, %v1089
        %v1122 = vadd.f32 %v962, %v1092
        %v1123 = vadd.f32 %v963, %v1097
        %v1124 = vadd.f32 %v964, %v1100
        %v1125 = vadd.f32 %v965, %v1105
        %v1126 = vadd.f32 %v966, %v1108
        %1127 = vst [vmem:[%s206] sm:$0xff] %v1111
        %1128 = vst [vmem:[%s206 + $0x8] sm:$0xff] %v1112
        %1129 = vst [vmem:[%s206 + $0x10] sm:$0xff] %v1113
        %1130 = vst [vmem:[%s206 + $0x18] sm:$0xff] %v1114
        %1131 = vst [vmem:[%s206 + $0x20] sm:$0xff] %v1115
        %1132 = vst [vmem:[%s206 + $0x28] sm:$0xff] %v1116
        %1133 = vst [vmem:[%s206 + $0x30] sm:$0xff] %v1117
        %1134 = vst [vmem:[%s206 + $0x38] sm:$0xff] %v1118
        %1135 = vst [vmem:[%s206 + $0x40] sm:$0xff] %v1119
        %1136 = vst [vmem:[%s206 + $0x48] sm:$0xff] %v1120
        %1137 = vst [vmem:[%s206 + $0x50] sm:$0xff] %v1121
        %1138 = vst [vmem:[%s206 + $0x58] sm:$0xff] %v1122
        %1139 = vst [vmem:[%s206 + $0x60] sm:$0xff] %v1123
        %1140 = vst [vmem:[%s206 + $0x68] sm:$0xff] %v1124
        %1141 = vst [vmem:[%s206 + $0x70] sm:$0xff] %v1125
        %1142 = vst [vmem:[%s206 + $0x78] sm:$0xff] %v1126
        %s1143 = scalar_lea.vmem %s215, 64
        %v1144 = vld [vmem:[%s1143] sm:$0xf]
        %v1145 = vld [vmem:[%s1143 + $0x4] sm:$0xf]
        %v1146 = vld [vmem:[%s1143 + $0x8] sm:$0xf]
        %v1147 = vld [vmem:[%s1143 + $0xc] sm:$0xf]
        %v1152 = vunpack.c.l.b16 %v1144
        %v1153 = vunpack.c.l.b16 %v1145
        %v1154 = vunpack.c.l.b16 %v1146
        %v1155 = vunpack.c.l.b16 %v1147
        %v1156 = vpack.c.b16 %v1153, %v1152
        %v1157 = vpack.c.b16 %v1155, %v1154
        %1160 = vmatprep.subr.bf16.mxu0 0
        %1161 = vmatpush1.bf16.msra.mxu0 %v1156
        %1162 = vmatprep.subr.bf16.mxu0 0
        %1163 = vmatpush1.bf16.msra.mxu0 %v1157
        %1164 = vmatprep.subr.bf16.mxu0 0
        %1165 = vmatpush1.bf16.msra.mxu0 0
        %1166 = vmatprep.subr.bf16.mxu0 0
        %1167 = vmatpush1.bf16.msra.mxu0 0
        %1168 = vmatprep.subr.bf16.mxu0 0
        %1169 = vmatpush1.bf16.msra.mxu0 0
        %1170 = vmatprep.subr.bf16.mxu0 0
        %1171 = vmatpush1.bf16.msra.mxu0 0
        %1172 = vmatprep.subr.bf16.mxu0 0
        %1173 = vmatpush1.bf16.msra.mxu0 0
        %1174 = vmatprep.subr.bf16.mxu0 0
        %1175 = vmatpush1.bf16.msra.mxu0 0
        %1176 = vmatprep.subr.bf16.mxu0 0
        %1177 = vmatpush1.bf16.msra.mxu0 0
        %1178 = vmatprep.subr.bf16.mxu0 0
        %1179 = vmatpush1.bf16.msra.mxu0 0
        %1180 = vmatprep.subr.bf16.mxu0 0
        %1181 = vmatpush1.bf16.msra.mxu0 0
        %1182 = vmatprep.subr.bf16.mxu0 0
        %1183 = vmatpush1.bf16.msra.mxu0 0
        %1184 = vmatprep.subr.bf16.mxu0 0
        %1185 = vmatpush1.bf16.msra.mxu0 0
        %1186 = vmatprep.subr.bf16.mxu0 0
        %1187 = vmatpush1.bf16.msra.mxu0 0
        %1188 = vmatprep.subr.bf16.mxu0 0
        %1189 = vmatpush1.bf16.msra.mxu0 0
        %1190 = vmatprep.subr.bf16.mxu0 0
        %1191 = vmatpush1.bf16.msra.mxu0 0
        %1192 = vmatprep.mubr.bf16.mxu0 0
        %1193 = vmatmul.mubr.bf16.gmra.mrb[0].mxu0 %v693
        %v1194 = vpop.f32.mrb[0].mxu0
        %v1195 = vadd.f32 0.0, %v1194
        %v1196 = vpop.f32.mrb[0].mxu0
        %v1197 = vpop.f32.mrb[0].mxu0
        %v1198 = vadd.f32 0.0, %v1197
        %v1199 = vpop.f32.mrb[0].mxu0
        %1200 = vmatprep.mubr.bf16.mxu0 0
        %1201 = vmatmul.mubr.bf16.gmra.mrb[0].mxu0 %v696
        %v1202 = vpop.f32.mrb[0].mxu0
        %v1203 = vadd.f32 0.0, %v1202
        %v1204 = vpop.f32.mrb[0].mxu0
        %v1205 = vpop.f32.mrb[0].mxu0
        %v1206 = vadd.f32 0.0, %v1205
        %v1207 = vpop.f32.mrb[0].mxu0
        %1208 = vmatprep.mubr.bf16.mxu0 0
        %1209 = vmatmul.mubr.bf16.gmra.mrb[0].mxu0 %v699
        %v1210 = vpop.f32.mrb[0].mxu0
        %v1211 = vadd.f32 0.0, %v1210
        %v1212 = vpop.f32.mrb[0].mxu0
        %v1213 = vpop.f32.mrb[0].mxu0
        %v1214 = vadd.f32 0.0, %v1213
        %v1215 = vpop.f32.mrb[0].mxu0
        %1216 = vmatprep.mubr.bf16.mxu0 0
        %1217 = vmatmul.mubr.bf16.gmra.mrb[0].mxu0 %v702
        %v1218 = vpop.f32.mrb[0].mxu0
        %v1219 = vadd.f32 0.0, %v1218
        %v1220 = vpop.f32.mrb[0].mxu0
        %v1221 = vpop.f32.mrb[0].mxu0
        %v1222 = vadd.f32 0.0, %v1221
        %v1223 = vpop.f32.mrb[0].mxu0
        %1224 = vmatprep.mubr.bf16.mxu0 0
        %1225 = vmatmul.mubr.bf16.gmra.mrb[0].mxu0 %v705
        %v1226 = vpop.f32.mrb[0].mxu0
        %v1227 = vadd.f32 0.0, %v1226
        %v1228 = vpop.f32.mrb[0].mxu0
        %v1229 = vpop.f32.mrb[0].mxu0
        %v1230 = vadd.f32 0.0, %v1229
        %v1231 = vpop.f32.mrb[0].mxu0
        %1232 = vmatprep.mubr.bf16.mxu0 0
        %1233 = vmatmul.mubr.bf16.gmra.mrb[0].mxu0 %v708
        %v1234 = vpop.f32.mrb[0].mxu0
        %v1235 = vadd.f32 0.0, %v1234
        %v1236 = vpop.f32.mrb[0].mxu0
        %v1237 = vpop.f32.mrb[0].mxu0
        %v1238 = vadd.f32 0.0, %v1237
        %v1239 = vpop.f32.mrb[0].mxu0
        %1240 = vmatprep.mubr.bf16.mxu0 0
        %1241 = vmatmul.mubr.bf16.gmra.mrb[0].mxu0 %v711
        %v1242 = vpop.f32.mrb[0].mxu0
        %v1243 = vadd.f32 0.0, %v1242
        %v1244 = vpop.f32.mrb[0].mxu0
        %v1245 = vpop.f32.mrb[0].mxu0
        %v1246 = vadd.f32 0.0, %v1245
        %v1247 = vpop.f32.mrb[0].mxu0
        %1248 = vmatprep.mubr.bf16.mxu0 0
        %1249 = vmatmul.mubr.bf16.gmra.mrb[0].mxu0 %v714
        %v1250 = vpop.f32.mrb[0].mxu0
        %v1251 = vadd.f32 0.0, %v1250
        %v1252 = vpop.f32.mrb[0].mxu0
        %v1253 = vpop.f32.mrb[0].mxu0
        %v1254 = vadd.f32 0.0, %v1253
        %v1255 = vpop.f32.mrb[0].mxu0
        %1256 = vdwg.mxu0
        %v1257 = vadd.f32 %v260, %v1195
        %v1258 = vadd.f32 %v260, %v1198
        %v1259 = vadd.f32 %v260, %v1203
        %v1260 = vadd.f32 %v260, %v1206
        %v1261 = vadd.f32 %v260, %v1211
        %v1262 = vadd.f32 %v260, %v1214
        %v1263 = vadd.f32 %v260, %v1219
        %v1264 = vadd.f32 %v260, %v1222
        %v1265 = vadd.f32 %v260, %v1227
        %v1266 = vadd.f32 %v260, %v1230
        %v1267 = vadd.f32 %v260, %v1235
        %v1268 = vadd.f32 %v260, %v1238
        %v1269 = vadd.f32 %v260, %v1243
        %v1270 = vadd.f32 %v260, %v1246
        %v1271 = vadd.f32 %v260, %v1251
        %v1272 = vadd.f32 %v260, %v1254
        %vm1281 = vcmask 1042432
        %vm1282 = vcmask 1046532
        %vm1283 = vmor %vm1281, %vm1282
        %v1284 = vrot.slane %v226, 5
        %v1285 = vrot.slane %v1284, 4
        %v1286 = vrot.slane %v227, 5
        %v1287 = vsel %vm1283, %v1285, %v1286
        %v1288 = vrot.slane %v1286, 4
        %v1289 = vrot.slane %v228, 5
        %v1290 = vsel %vm1283, %v1288, %v1289
        %v1291 = vrot.slane %v229, 5
        %v1292 = vrot.slane %v1291, 4
        %v1293 = vrot.slane %v230, 5
        %v1294 = vsel %vm1283, %v1292, %v1293
        %v1295 = vrot.slane %v1293, 4
        %v1296 = vrot.slane %v231, 5
        %v1297 = vsel %vm1283, %v1295, %v1296
        %v1298 = vrot.slane %v232, 5
        %v1299 = vrot.slane %v1298, 4
        %v1300 = vrot.slane %v233, 5
        %v1301 = vsel %vm1283, %v1299, %v1300
        %v1302 = vrot.slane %v1300, 4
        %v1303 = vrot.slane %v234, 5
        %v1304 = vsel %vm1283, %v1302, %v1303
        %v1305 = vrot.slane %v235, 5
        %v1306 = vrot.slane %v1305, 4
        %v1307 = vrot.slane %v236, 5
        %v1308 = vsel %vm1283, %v1306, %v1307
        %v1309 = vrot.slane %v1307, 4
        %v1310 = vrot.slane %v237, 5
        %v1311 = vsel %vm1283, %v1309, %v1310
        %v1312 = vrot.slane %v238, 5
        %v1313 = vrot.slane %v1312, 4
        %v1314 = vrot.slane %v239, 5
        %v1315 = vsel %vm1283, %v1313, %v1314
        %v1316 = vrot.slane %v1314, 4
        %v1317 = vrot.slane %v240, 5
        %v1318 = vsel %vm1283, %v1316, %v1317
        %v1319 = vrot.slane %v241, 5
        %v1320 = vrot.slane %v1319, 4
        %v1321 = vrot.slane %v242, 5
        %v1322 = vsel %vm1283, %v1320, %v1321
        %v1323 = vrot.slane %v1321, 4
        %v1324 = vrot.slane %v243, 5
        %v1325 = vsel %vm1283, %v1323, %v1324
        %v1326 = vrot.slane %v244, 5
        %v1327 = vrot.slane %v1326, 4
        %v1328 = vrot.slane %v245, 5
        %v1329 = vsel %vm1283, %v1327, %v1328
        %v1330 = vrot.slane %v1328, 4
        %v1331 = vrot.slane %v246, 5
        %v1332 = vsel %vm1283, %v1330, %v1331
        %v1333 = vrot.slane %v247, 5
        %v1334 = vrot.slane %v1333, 4
        %v1335 = vrot.slane %v248, 5
        %v1336 = vsel %vm1283, %v1334, %v1335
        %v1337 = vrot.slane %v1335, 4
        %v1338 = vrot.slane %v249, 5
        %v1339 = vsel %vm1283, %v1337, %v1338
        %s1340 = scalar_lea.vmem %s215, 80
        %v1341 = vld [vmem:[%s1340] sm:$0xf]
        %v1342 = vld [vmem:[%s1340 + $0x4] sm:$0xf]
        %v1343 = vld [vmem:[%s1340 + $0x8] sm:$0xf]
        %v1344 = vld [vmem:[%s1340 + $0xc] sm:$0xf]
        %v1345 = vunpack.c.l.b16 %v1287
        %v1346 = vunpack.c.l.b16 %v1290
        %v1347 = vunpack.c.l.b16 %v1294
        %v1348 = vunpack.c.l.b16 %v1297
        %v1349 = vunpack.c.l.b16 %v1301
        %v1350 = vunpack.c.l.b16 %v1304
        %v1351 = vunpack.c.l.b16 %v1308
        %v1352 = vunpack.c.l.b16 %v1311
        %v1353 = vunpack.c.l.b16 %v1315
        %v1354 = vunpack.c.l.b16 %v1318
        %v1355 = vunpack.c.l.b16 %v1322
        %v1356 = vunpack.c.l.b16 %v1325
        %v1357 = vunpack.c.l.b16 %v1329
        %v1358 = vunpack.c.l.b16 %v1332
        %v1359 = vunpack.c.l.b16 %v1336
        %v1360 = vunpack.c.l.b16 %v1339
        %v1361 = vpack.c.b16 %v1346, %v1345
        %v1362 = vpack.c.b16 %v1348, %v1347
        %v1363 = vpack.c.b16 %v1350, %v1349
        %v1364 = vpack.c.b16 %v1352, %v1351
        %v1365 = vpack.c.b16 %v1354, %v1353
        %v1366 = vpack.c.b16 %v1356, %v1355
        %v1367 = vpack.c.b16 %v1358, %v1357
        %v1368 = vpack.c.b16 %v1360, %v1359
        %v1373 = vunpack.c.l.b16 %v1341
        %v1374 = vunpack.c.l.b16 %v1342
        %v1375 = vunpack.c.l.b16 %v1343
        %v1376 = vunpack.c.l.b16 %v1344
        %v1377 = vpack.c.b16 %v1374, %v1373
        %v1378 = vpack.c.b16 %v1376, %v1375
        %v1382 = vsel %vm318, %v1361, 0
        %v1385 = vsel %vm318, %v1362, 0
        %v1388 = vsel %vm318, %v1363, 0
        %v1391 = vsel %vm318, %v1364, 0
        %v1394 = vsel %vm318, %v1365, 0
        %v1397 = vsel %vm318, %v1366, 0
        %v1400 = vsel %vm318, %v1367, 0
        %v1403 = vsel %vm318, %v1368, 0
        %1405 = vmatprep.subr.bf16.mxu0 0
        %1406 = vmatpush1.bf16.msra.mxu0 %v1377
        %1407 = vmatprep.subr.bf16.mxu0 0
        %1408 = vmatpush1.bf16.msra.mxu0 %v1378
        %1409 = vmatprep.subr.bf16.mxu0 0
        %1410 = vmatpush1.bf16.msra.mxu0 0
        %1411 = vmatprep.subr.bf16.mxu0 0
        %1412 = vmatpush1.bf16.msra.mxu0 0
        %1413 = vmatprep.subr.bf16.mxu0 0
        %1414 = vmatpush1.bf16.msra.mxu0 0
        %1415 = vmatprep.subr.bf16.mxu0 0
        %1416 = vmatpush1.bf16.msra.mxu0 0
        %1417 = vmatprep.subr.bf16.mxu0 0
        %1418 = vmatpush1.bf16.msra.mxu0 0
        %1419 = vmatprep.subr.bf16.mxu0 0
        %1420 = vmatpush1.bf16.msra.mxu0 0
        %1421 = vmatprep.subr.bf16.mxu0 0
        %1422 = vmatpush1.bf16.msra.mxu0 0
        %1423 = vmatprep.subr.bf16.mxu0 0
        %1424 = vmatpush1.bf16.msra.mxu0 0
        %1425 = vmatprep.subr.bf16.mxu0 0
        %1426 = vmatpush1.bf16.msra.mxu0 0
        %1427 = vmatprep.subr.bf16.mxu0 0
        %1428 = vmatpush1.bf16.msra.mxu0 0
        %1429 = vmatprep.subr.bf16.mxu0 0
        %1430 = vmatpush1.bf16.msra.mxu0 0
        %1431 = vmatprep.subr.bf16.mxu0 0
        %1432 = vmatpush1.bf16.msra.mxu0 0
        %1433 = vmatprep.subr.bf16.mxu0 0
        %1434 = vmatpush1.bf16.msra.mxu0 0
        %1435 = vmatprep.subr.bf16.mxu0 0
        %1436 = vmatpush1.bf16.msra.mxu0 0
        %1437 = vmatprep.mubr.bf16.mxu0 0
        %1438 = vmatmul.mubr.bf16.gmra.mrb[0].mxu0 %v1382
        %v1439 = vpop.f32.mrb[0].mxu0
        %v1440 = vadd.f32 0.0, %v1439
        %v1441 = vpop.f32.mrb[0].mxu0
        %v1442 = vpop.f32.mrb[0].mxu0
        %v1443 = vadd.f32 0.0, %v1442
        %v1444 = vpop.f32.mrb[0].mxu0
        %1445 = vmatprep.mubr.bf16.mxu0 0
        %1446 = vmatmul.mubr.bf16.gmra.mrb[0].mxu0 %v1385
        %v1447 = vpop.f32.mrb[0].mxu0
        %v1448 = vadd.f32 0.0, %v1447
        %v1449 = vpop.f32.mrb[0].mxu0
        %v1450 = vpop.f32.mrb[0].mxu0
        %v1451 = vadd.f32 0.0, %v1450
        %v1452 = vpop.f32.mrb[0].mxu0
        %1453 = vmatprep.mubr.bf16.mxu0 0
        %1454 = vmatmul.mubr.bf16.gmra.mrb[0].mxu0 %v1388
        %v1455 = vpop.f32.mrb[0].mxu0
        %v1456 = vadd.f32 0.0, %v1455
        %v1457 = vpop.f32.mrb[0].mxu0
        %v1458 = vpop.f32.mrb[0].mxu0
        %v1459 = vadd.f32 0.0, %v1458
        %v1460 = vpop.f32.mrb[0].mxu0
        %1461 = vmatprep.mubr.bf16.mxu0 0
        %1462 = vmatmul.mubr.bf16.gmra.mrb[0].mxu0 %v1391
        %v1463 = vpop.f32.mrb[0].mxu0
        %v1464 = vadd.f32 0.0, %v1463
        %v1465 = vpop.f32.mrb[0].mxu0
        %v1466 = vpop.f32.mrb[0].mxu0
        %v1467 = vadd.f32 0.0, %v1466
        %v1468 = vpop.f32.mrb[0].mxu0
        %1469 = vmatprep.mubr.bf16.mxu0 0
        %1470 = vmatmul.mubr.bf16.gmra.mrb[0].mxu0 %v1394
        %v1471 = vpop.f32.mrb[0].mxu0
        %v1472 = vadd.f32 0.0, %v1471
        %v1473 = vpop.f32.mrb[0].mxu0
        %v1474 = vpop.f32.mrb[0].mxu0
        %v1475 = vadd.f32 0.0, %v1474
        %v1476 = vpop.f32.mrb[0].mxu0
        %1477 = vmatprep.mubr.bf16.mxu0 0
        %1478 = vmatmul.mubr.bf16.gmra.mrb[0].mxu0 %v1397
        %v1479 = vpop.f32.mrb[0].mxu0
        %v1480 = vadd.f32 0.0, %v1479
        %v1481 = vpop.f32.mrb[0].mxu0
        %v1482 = vpop.f32.mrb[0].mxu0
        %v1483 = vadd.f32 0.0, %v1482
        %v1484 = vpop.f32.mrb[0].mxu0
        %1485 = vmatprep.mubr.bf16.mxu0 0
        %1486 = vmatmul.mubr.bf16.gmra.mrb[0].mxu0 %v1400
        %v1487 = vpop.f32.mrb[0].mxu0
        %v1488 = vadd.f32 0.0, %v1487
        %v1489 = vpop.f32.mrb[0].mxu0
        %v1490 = vpop.f32.mrb[0].mxu0
        %v1491 = vadd.f32 0.0, %v1490
        %v1492 = vpop.f32.mrb[0].mxu0
        %1493 = vmatprep.mubr.bf16.mxu0 0
        %1494 = vmatmul.mubr.bf16.gmra.mrb[0].mxu0 %v1403
        %v1495 = vpop.f32.mrb[0].mxu0
        %v1496 = vadd.f32 0.0, %v1495
        %v1497 = vpop.f32.mrb[0].mxu0
        %v1498 = vpop.f32.mrb[0].mxu0
        %v1499 = vadd.f32 0.0, %v1498
        %v1500 = vpop.f32.mrb[0].mxu0
        %1501 = vdwg.mxu0
        %v1502 = vadd.f32 %v1257, %v1440
        %v1503 = vadd.f32 %v1258, %v1443
        %v1504 = vadd.f32 %v1259, %v1448
        %v1505 = vadd.f32 %v1260, %v1451
        %v1506 = vadd.f32 %v1261, %v1456
        %v1507 = vadd.f32 %v1262, %v1459
        %v1508 = vadd.f32 %v1263, %v1464
        %v1509 = vadd.f32 %v1264, %v1467
        %v1510 = vadd.f32 %v1265, %v1472
        %v1511 = vadd.f32 %v1266, %v1475
        %v1512 = vadd.f32 %v1267, %v1480
        %v1513 = vadd.f32 %v1268, %v1483
        %v1514 = vadd.f32 %v1269, %v1488
        %v1515 = vadd.f32 %v1270, %v1491
        %v1516 = vadd.f32 %v1271, %v1496
        %v1517 = vadd.f32 %v1272, %v1499
        %s1518 = scalar_lea.vmem %s215, 96
        %v1519 = vld [vmem:[%s1518] sm:$0xf]
        %v1520 = vld [vmem:[%s1518 + $0x4] sm:$0xf]
        %v1521 = vld [vmem:[%s1518 + $0x8] sm:$0xf]
        %v1522 = vld [vmem:[%s1518 + $0xc] sm:$0xf]
        %v1527 = vunpack.c.l.b16 %v1519
        %v1528 = vunpack.c.l.b16 %v1520
        %v1529 = vunpack.c.l.b16 %v1521
        %v1530 = vunpack.c.l.b16 %v1522
        %v1531 = vpack.c.b16 %v1528, %v1527
        %v1532 = vpack.c.b16 %v1530, %v1529
        %1535 = vmatprep.subr.bf16.mxu0 0
        %1536 = vmatpush1.bf16.msra.mxu0 %v1531
        %1537 = vmatprep.subr.bf16.mxu0 0
        %1538 = vmatpush1.bf16.msra.mxu0 %v1532
        %1539 = vmatprep.subr.bf16.mxu0 0
        %1540 = vmatpush1.bf16.msra.mxu0 0
        %1541 = vmatprep.subr.bf16.mxu0 0
        %1542 = vmatpush1.bf16.msra.mxu0 0
        %1543 = vmatprep.subr.bf16.mxu0 0
        %1544 = vmatpush1.bf16.msra.mxu0 0
        %1545 = vmatprep.subr.bf16.mxu0 0
        %1546 = vmatpush1.bf16.msra.mxu0 0
        %1547 = vmatprep.subr.bf16.mxu0 0
        %1548 = vmatpush1.bf16.msra.mxu0 0
        %1549 = vmatprep.subr.bf16.mxu0 0
        %1550 = vmatpush1.bf16.msra.mxu0 0
        %1551 = vmatprep.subr.bf16.mxu0 0
        %1552 = vmatpush1.bf16.msra.mxu0 0
        %1553 = vmatprep.subr.bf16.mxu0 0
        %1554 = vmatpush1.bf16.msra.mxu0 0
        %1555 = vmatprep.subr.bf16.mxu0 0
        %1556 = vmatpush1.bf16.msra.mxu0 0
        %1557 = vmatprep.subr.bf16.mxu0 0
        %1558 = vmatpush1.bf16.msra.mxu0 0
        %1559 = vmatprep.subr.bf16.mxu0 0
        %1560 = vmatpush1.bf16.msra.mxu0 0
        %1561 = vmatprep.subr.bf16.mxu0 0
        %1562 = vmatpush1.bf16.msra.mxu0 0
        %1563 = vmatprep.subr.bf16.mxu0 0
        %1564 = vmatpush1.bf16.msra.mxu0 0
        %1565 = vmatprep.subr.bf16.mxu0 0
        %1566 = vmatpush1.bf16.msra.mxu0 0
        %1567 = vmatprep.mubr.bf16.mxu0 0
        %1568 = vmatmul.mubr.bf16.gmra.mrb[0].mxu0 %v696
        %v1569 = vpop.f32.mrb[0].mxu0
        %v1570 = vadd.f32 0.0, %v1569
        %v1571 = vpop.f32.mrb[0].mxu0
        %v1572 = vpop.f32.mrb[0].mxu0
        %v1573 = vadd.f32 0.0, %v1572
        %v1574 = vpop.f32.mrb[0].mxu0
        %1575 = vmatprep.mubr.bf16.mxu0 0
        %1576 = vmatmul.mubr.bf16.gmra.mrb[0].mxu0 %v699
        %v1577 = vpop.f32.mrb[0].mxu0
        %v1578 = vadd.f32 0.0, %v1577
        %v1579 = vpop.f32.mrb[0].mxu0
        %v1580 = vpop.f32.mrb[0].mxu0
        %v1581 = vadd.f32 0.0, %v1580
        %v1582 = vpop.f32.mrb[0].mxu0
        %1583 = vmatprep.mubr.bf16.mxu0 0
        %1584 = vmatmul.mubr.bf16.gmra.mrb[0].mxu0 %v702
        %v1585 = vpop.f32.mrb[0].mxu0
        %v1586 = vadd.f32 0.0, %v1585
        %v1587 = vpop.f32.mrb[0].mxu0
        %v1588 = vpop.f32.mrb[0].mxu0
        %v1589 = vadd.f32 0.0, %v1588
        %v1590 = vpop.f32.mrb[0].mxu0
        %1591 = vmatprep.mubr.bf16.mxu0 0
        %1592 = vmatmul.mubr.bf16.gmra.mrb[0].mxu0 %v705
        %v1593 = vpop.f32.mrb[0].mxu0
        %v1594 = vadd.f32 0.0, %v1593
        %v1595 = vpop.f32.mrb[0].mxu0
        %v1596 = vpop.f32.mrb[0].mxu0
        %v1597 = vadd.f32 0.0, %v1596
        %v1598 = vpop.f32.mrb[0].mxu0
        %1599 = vmatprep.mubr.bf16.mxu0 0
        %1600 = vmatmul.mubr.bf16.gmra.mrb[0].mxu0 %v708
        %v1601 = vpop.f32.mrb[0].mxu0
        %v1602 = vadd.f32 0.0, %v1601
        %v1603 = vpop.f32.mrb[0].mxu0
        %v1604 = vpop.f32.mrb[0].mxu0
        %v1605 = vadd.f32 0.0, %v1604
        %v1606 = vpop.f32.mrb[0].mxu0
        %1607 = vmatprep.mubr.bf16.mxu0 0
        %1608 = vmatmul.mubr.bf16.gmra.mrb[0].mxu0 %v711
        %v1609 = vpop.f32.mrb[0].mxu0
        %v1610 = vadd.f32 0.0, %v1609
        %v1611 = vpop.f32.mrb[0].mxu0
        %v1612 = vpop.f32.mrb[0].mxu0
        %v1613 = vadd.f32 0.0, %v1612
        %v1614 = vpop.f32.mrb[0].mxu0
        %1615 = vmatprep.mubr.bf16.mxu0 0
        %1616 = vmatmul.mubr.bf16.gmra.mrb[0].mxu0 %v714
        %v1617 = vpop.f32.mrb[0].mxu0
        %v1618 = vadd.f32 0.0, %v1617
        %v1619 = vpop.f32.mrb[0].mxu0
        %v1620 = vpop.f32.mrb[0].mxu0
        %v1621 = vadd.f32 0.0, %v1620
        %v1622 = vpop.f32.mrb[0].mxu0
        %1623 = vmatprep.mubr.bf16.mxu0 0
        %1624 = vmatmul.mubr.bf16.gmra.mrb[0].mxu0 %v1012
        %v1625 = vpop.f32.mrb[0].mxu0
        %v1626 = vadd.f32 0.0, %v1625
        %v1627 = vpop.f32.mrb[0].mxu0
        %v1628 = vpop.f32.mrb[0].mxu0
        %v1629 = vadd.f32 0.0, %v1628
        %v1630 = vpop.f32.mrb[0].mxu0
        %1631 = vdwg.mxu0
        %v1632 = vadd.f32 %v1502, %v1570
        %v1633 = vadd.f32 %v1503, %v1573
        %v1634 = vadd.f32 %v1504, %v1578
        %v1635 = vadd.f32 %v1505, %v1581
        %v1636 = vadd.f32 %v1506, %v1586
        %v1637 = vadd.f32 %v1507, %v1589
        %v1638 = vadd.f32 %v1508, %v1594
        %v1639 = vadd.f32 %v1509, %v1597
        %v1640 = vadd.f32 %v1510, %v1602
        %v1641 = vadd.f32 %v1511, %v1605
        %v1642 = vadd.f32 %v1512, %v1610
        %v1643 = vadd.f32 %v1513, %v1613
        %v1644 = vadd.f32 %v1514, %v1618
        %v1645 = vadd.f32 %v1515, %v1621
        %v1646 = vadd.f32 %v1516, %v1626
        %v1647 = vadd.f32 %v1517, %v1629
        %v1649 = vrot.slane %v250, 5
        %v1650 = vrot.slane %v1649, 4
        %v1651 = vrot.slane %v251, 5
        %v1652 = vsel %vm1283, %v1650, %v1651
        %v1653 = vrot.slane %v1651, 4
        %v1654 = vrot.slane %v252, 5
        %v1655 = vsel %vm1283, %v1653, %v1654
        %s1656 = scalar_lea.vmem %s215, 112
        %v1657 = vld [vmem:[%s1656] sm:$0xf]
        %v1658 = vld [vmem:[%s1656 + $0x4] sm:$0xf]
        %v1659 = vld [vmem:[%s1656 + $0x8] sm:$0xf]
        %v1660 = vld [vmem:[%s1656 + $0xc] sm:$0xf]
        %v1661 = vunpack.c.l.b16 %v1652
        %v1662 = vunpack.c.l.b16 %v1655
        %v1663 = vpack.c.b16 %v1662, %v1661
        %v1668 = vunpack.c.l.b16 %v1657
        %v1669 = vunpack.c.l.b16 %v1658
        %v1670 = vunpack.c.l.b16 %v1659
        %v1671 = vunpack.c.l.b16 %v1660
        %v1672 = vpack.c.b16 %v1669, %v1668
        %v1673 = vpack.c.b16 %v1671, %v1670
        %v1677 = vsel %vm318, %v1663, 0
        %1679 = vmatprep.subr.bf16.mxu0 0
        %1680 = vmatpush1.bf16.msra.mxu0 %v1672
        %1681 = vmatprep.subr.bf16.mxu0 0
        %1682 = vmatpush1.bf16.msra.mxu0 %v1673
        %1683 = vmatprep.subr.bf16.mxu0 0
        %1684 = vmatpush1.bf16.msra.mxu0 0
        %1685 = vmatprep.subr.bf16.mxu0 0
        %1686 = vmatpush1.bf16.msra.mxu0 0
        %1687 = vmatprep.subr.bf16.mxu0 0
        %1688 = vmatpush1.bf16.msra.mxu0 0
        %1689 = vmatprep.subr.bf16.mxu0 0
        %1690 = vmatpush1.bf16.msra.mxu0 0
        %1691 = vmatprep.subr.bf16.mxu0 0
        %1692 = vmatpush1.bf16.msra.mxu0 0
        %1693 = vmatprep.subr.bf16.mxu0 0
        %1694 = vmatpush1.bf16.msra.mxu0 0
        %1695 = vmatprep.subr.bf16.mxu0 0
        %1696 = vmatpush1.bf16.msra.mxu0 0
        %1697 = vmatprep.subr.bf16.mxu0 0
        %1698 = vmatpush1.bf16.msra.mxu0 0
        %1699 = vmatprep.subr.bf16.mxu0 0
        %1700 = vmatpush1.bf16.msra.mxu0 0
        %1701 = vmatprep.subr.bf16.mxu0 0
        %1702 = vmatpush1.bf16.msra.mxu0 0
        %1703 = vmatprep.subr.bf16.mxu0 0
        %1704 = vmatpush1.bf16.msra.mxu0 0
        %1705 = vmatprep.subr.bf16.mxu0 0
        %1706 = vmatpush1.bf16.msra.mxu0 0
        %1707 = vmatprep.subr.bf16.mxu0 0
        %1708 = vmatpush1.bf16.msra.mxu0 0
        %1709 = vmatprep.subr.bf16.mxu0 0
        %1710 = vmatpush1.bf16.msra.mxu0 0
        %1711 = vmatprep.mubr.bf16.mxu0 0
        %1712 = vmatmul.mubr.bf16.gmra.mrb[0].mxu0 %v1385
        %v1713 = vpop.f32.mrb[0].mxu0
        %v1714 = vadd.f32 0.0, %v1713
        %v1715 = vpop.f32.mrb[0].mxu0
        %v1716 = vpop.f32.mrb[0].mxu0
        %v1717 = vadd.f32 0.0, %v1716
        %v1718 = vpop.f32.mrb[0].mxu0
        %1719 = vmatprep.mubr.bf16.mxu0 0
        %1720 = vmatmul.mubr.bf16.gmra.mrb[0].mxu0 %v1388
        %v1721 = vpop.f32.mrb[0].mxu0
        %v1722 = vadd.f32 0.0, %v1721
        %v1723 = vpop.f32.mrb[0].mxu0
        %v1724 = vpop.f32.mrb[0].mxu0
        %v1725 = vadd.f32 0.0, %v1724
        %v1726 = vpop.f32.mrb[0].mxu0
        %1727 = vmatprep.mubr.bf16.mxu0 0
        %1728 = vmatmul.mubr.bf16.gmra.mrb[0].mxu0 %v1391
        %v1729 = vpop.f32.mrb[0].mxu0
        %v1730 = vadd.f32 0.0, %v1729
        %v1731 = vpop.f32.mrb[0].mxu0
        %v1732 = vpop.f32.mrb[0].mxu0
        %v1733 = vadd.f32 0.0, %v1732
        %v1734 = vpop.f32.mrb[0].mxu0
        %1735 = vmatprep.mubr.bf16.mxu0 0
        %1736 = vmatmul.mubr.bf16.gmra.mrb[0].mxu0 %v1394
        %v1737 = vpop.f32.mrb[0].mxu0
        %v1738 = vadd.f32 0.0, %v1737
        %v1739 = vpop.f32.mrb[0].mxu0
        %v1740 = vpop.f32.mrb[0].mxu0
        %v1741 = vadd.f32 0.0, %v1740
        %v1742 = vpop.f32.mrb[0].mxu0
        %1743 = vmatprep.mubr.bf16.mxu0 0
        %1744 = vmatmul.mubr.bf16.gmra.mrb[0].mxu0 %v1397
        %v1745 = vpop.f32.mrb[0].mxu0
        %v1746 = vadd.f32 0.0, %v1745
        %v1747 = vpop.f32.mrb[0].mxu0
        %v1748 = vpop.f32.mrb[0].mxu0
        %v1749 = vadd.f32 0.0, %v1748
        %v1750 = vpop.f32.mrb[0].mxu0
        %1751 = vmatprep.mubr.bf16.mxu0 0
        %1752 = vmatmul.mubr.bf16.gmra.mrb[0].mxu0 %v1400
        %v1753 = vpop.f32.mrb[0].mxu0
        %v1754 = vadd.f32 0.0, %v1753
        %v1755 = vpop.f32.mrb[0].mxu0
        %v1756 = vpop.f32.mrb[0].mxu0
        %v1757 = vadd.f32 0.0, %v1756
        %v1758 = vpop.f32.mrb[0].mxu0
        %1759 = vmatprep.mubr.bf16.mxu0 0
        %1760 = vmatmul.mubr.bf16.gmra.mrb[0].mxu0 %v1403
        %v1761 = vpop.f32.mrb[0].mxu0
        %v1762 = vadd.f32 0.0, %v1761
        %v1763 = vpop.f32.mrb[0].mxu0
        %v1764 = vpop.f32.mrb[0].mxu0
        %v1765 = vadd.f32 0.0, %v1764
        %v1766 = vpop.f32.mrb[0].mxu0
        %1767 = vmatprep.mubr.bf16.mxu0 0
        %1768 = vmatmul.mubr.bf16.gmra.mrb[0].mxu0 %v1677
        %v1769 = vpop.f32.mrb[0].mxu0
        %v1770 = vadd.f32 0.0, %v1769
        %v1771 = vpop.f32.mrb[0].mxu0
        %v1772 = vpop.f32.mrb[0].mxu0
        %v1773 = vadd.f32 0.0, %v1772
        %v1774 = vpop.f32.mrb[0].mxu0
        %1775 = vdwg.mxu0
        %v1776 = vadd.f32 %v1632, %v1714
        %v1777 = vadd.f32 %v1633, %v1717
        %v1778 = vadd.f32 %v1634, %v1722
        %v1779 = vadd.f32 %v1635, %v1725
        %v1780 = vadd.f32 %v1636, %v1730
        %v1781 = vadd.f32 %v1637, %v1733
        %v1782 = vadd.f32 %v1638, %v1738
        %v1783 = vadd.f32 %v1639, %v1741
        %v1784 = vadd.f32 %v1640, %v1746
        %v1785 = vadd.f32 %v1641, %v1749
        %v1786 = vadd.f32 %v1642, %v1754
        %v1787 = vadd.f32 %v1643, %v1757
        %v1788 = vadd.f32 %v1644, %v1762
        %v1789 = vadd.f32 %v1645, %v1765
        %v1790 = vadd.f32 %v1646, %v1770
        %v1791 = vadd.f32 %v1647, %v1773
        %s1792 = scalar_lea.vmem %s206, 128 [#allocation2]
        %1793 = vst [vmem:[%s1792] sm:$0xff] %v1776
        %1794 = vst [vmem:[%s1792 + $0x8] sm:$0xff] %v1777
        %1795 = vst [vmem:[%s1792 + $0x10] sm:$0xff] %v1778
        %1796 = vst [vmem:[%s1792 + $0x18] sm:$0xff] %v1779
        %1797 = vst [vmem:[%s1792 + $0x20] sm:$0xff] %v1780
        %1798 = vst [vmem:[%s1792 + $0x28] sm:$0xff] %v1781
        %1799 = vst [vmem:[%s1792 + $0x30] sm:$0xff] %v1782
        %1800 = vst [vmem:[%s1792 + $0x38] sm:$0xff] %v1783
        %1801 = vst [vmem:[%s1792 + $0x40] sm:$0xff] %v1784
        %1802 = vst [vmem:[%s1792 + $0x48] sm:$0xff] %v1785
        %1803 = vst [vmem:[%s1792 + $0x50] sm:$0xff] %v1786
        %1804 = vst [vmem:[%s1792 + $0x58] sm:$0xff] %v1787
        %1805 = vst [vmem:[%s1792 + $0x60] sm:$0xff] %v1788
        %1806 = vst [vmem:[%s1792 + $0x68] sm:$0xff] %v1789
        %1807 = vst [vmem:[%s1792 + $0x70] sm:$0xff] %v1790
        %1808 = vst [vmem:[%s1792 + $0x78] sm:$0xff] %v1791
        %s1809 = scalar_lea.vmem %s215, 128
        %v1810 = vld [vmem:[%s1809] sm:$0xf]
        %v1811 = vld [vmem:[%s1809 + $0x4] sm:$0xf]
        %v1812 = vld [vmem:[%s1809 + $0x8] sm:$0xf]
        %v1813 = vld [vmem:[%s1809 + $0xc] sm:$0xf]
        %v1818 = vunpack.c.l.b16 %v1810
        %v1819 = vunpack.c.l.b16 %v1811
        %v1820 = vunpack.c.l.b16 %v1812
        %v1821 = vunpack.c.l.b16 %v1813
        %v1822 = vpack.c.b16 %v1819, %v1818
        %v1823 = vpack.c.b16 %v1821, %v1820
        %1826 = vmatprep.subr.bf16.mxu0 0
        %1827 = vmatpush1.bf16.msra.mxu0 %v1822
        %1828 = vmatprep.subr.bf16.mxu0 0
        %1829 = vmatpush1.bf16.msra.mxu0 %v1823
        %1830 = vmatprep.subr.bf16.mxu0 0
        %1831 = vmatpush1.bf16.msra.mxu0 0
        %1832 = vmatprep.subr.bf16.mxu0 0
        %1833 = vmatpush1.bf16.msra.mxu0 0
        %1834 = vmatprep.subr.bf16.mxu0 0
        %1835 = vmatpush1.bf16.msra.mxu0 0
        %1836 = vmatprep.subr.bf16.mxu0 0
        %1837 = vmatpush1.bf16.msra.mxu0 0
        %1838 = vmatprep.subr.bf16.mxu0 0
        %1839 = vmatpush1.bf16.msra.mxu0 0
        %1840 = vmatprep.subr.bf16.mxu0 0
        %1841 = vmatpush1.bf16.msra.mxu0 0
        %1842 = vmatprep.subr.bf16.mxu0 0
        %1843 = vmatpush1.bf16.msra.mxu0 0
        %1844 = vmatprep.subr.bf16.mxu0 0
        %1845 = vmatpush1.bf16.msra.mxu0 0
        %1846 = vmatprep.subr.bf16.mxu0 0
        %1847 = vmatpush1.bf16.msra.mxu0 0
        %1848 = vmatprep.subr.bf16.mxu0 0
        %1849 = vmatpush1.bf16.msra.mxu0 0
        %1850 = vmatprep.subr.bf16.mxu0 0
        %1851 = vmatpush1.bf16.msra.mxu0 0
        %1852 = vmatprep.subr.bf16.mxu0 0
        %1853 = vmatpush1.bf16.msra.mxu0 0
        %1854 = vmatprep.subr.bf16.mxu0 0
        %1855 = vmatpush1.bf16.msra.mxu0 0
        %1856 = vmatprep.subr.bf16.mxu0 0
        %1857 = vmatpush1.bf16.msra.mxu0 0
        %1858 = vmatprep.mubr.bf16.mxu0 0
        %1859 = vmatmul.mubr.bf16.gmra.mrb[0].mxu0 %v323
        %v1860 = vpop.f32.mrb[0].mxu0
        %v1861 = vadd.f32 0.0, %v1860
        %v1862 = vpop.f32.mrb[0].mxu0
        %v1863 = vpop.f32.mrb[0].mxu0
        %v1864 = vadd.f32 0.0, %v1863
        %v1865 = vpop.f32.mrb[0].mxu0
        %1866 = vmatprep.mubr.bf16.mxu0 0
        %1867 = vmatmul.mubr.bf16.gmra.mrb[0].mxu0 %v326
        %v1868 = vpop.f32.mrb[0].mxu0
        %v1869 = vadd.f32 0.0, %v1868
        %v1870 = vpop.f32.mrb[0].mxu0
        %v1871 = vpop.f32.mrb[0].mxu0
        %v1872 = vadd.f32 0.0, %v1871
        %v1873 = vpop.f32.mrb[0].mxu0
        %1874 = vmatprep.mubr.bf16.mxu0 0
        %1875 = vmatmul.mubr.bf16.gmra.mrb[0].mxu0 %v329
        %v1876 = vpop.f32.mrb[0].mxu0
        %v1877 = vadd.f32 0.0, %v1876
        %v1878 = vpop.f32.mrb[0].mxu0
        %v1879 = vpop.f32.mrb[0].mxu0
        %v1880 = vadd.f32 0.0, %v1879
        %v1881 = vpop.f32.mrb[0].mxu0
        %1882 = vmatprep.mubr.bf16.mxu0 0
        %1883 = vmatmul.mubr.bf16.gmra.mrb[0].mxu0 %v332
        %v1884 = vpop.f32.mrb[0].mxu0
        %v1885 = vadd.f32 0.0, %v1884
        %v1886 = vpop.f32.mrb[0].mxu0
        %v1887 = vpop.f32.mrb[0].mxu0
        %v1888 = vadd.f32 0.0, %v1887
        %v1889 = vpop.f32.mrb[0].mxu0
        %1890 = vmatprep.mubr.bf16.mxu0 0
        %1891 = vmatmul.mubr.bf16.gmra.mrb[0].mxu0 %v335
        %v1892 = vpop.f32.mrb[0].mxu0
        %v1893 = vadd.f32 0.0, %v1892
        %v1894 = vpop.f32.mrb[0].mxu0
        %v1895 = vpop.f32.mrb[0].mxu0
        %v1896 = vadd.f32 0.0, %v1895
        %v1897 = vpop.f32.mrb[0].mxu0
        %1898 = vmatprep.mubr.bf16.mxu0 0
        %1899 = vmatmul.mubr.bf16.gmra.mrb[0].mxu0 %v338
        %v1900 = vpop.f32.mrb[0].mxu0
        %v1901 = vadd.f32 0.0, %v1900
        %v1902 = vpop.f32.mrb[0].mxu0
        %v1903 = vpop.f32.mrb[0].mxu0
        %v1904 = vadd.f32 0.0, %v1903
        %v1905 = vpop.f32.mrb[0].mxu0
        %1906 = vmatprep.mubr.bf16.mxu0 0
        %1907 = vmatmul.mubr.bf16.gmra.mrb[0].mxu0 %v341
        %v1908 = vpop.f32.mrb[0].mxu0
        %v1909 = vadd.f32 0.0, %v1908
        %v1910 = vpop.f32.mrb[0].mxu0
        %v1911 = vpop.f32.mrb[0].mxu0
        %v1912 = vadd.f32 0.0, %v1911
        %v1913 = vpop.f32.mrb[0].mxu0
        %1914 = vmatprep.mubr.bf16.mxu0 0
        %1915 = vmatmul.mubr.bf16.gmra.mrb[0].mxu0 %v852
        %v1916 = vpop.f32.mrb[0].mxu0
        %v1917 = vadd.f32 0.0, %v1916
        %v1918 = vpop.f32.mrb[0].mxu0
        %v1919 = vpop.f32.mrb[0].mxu0
        %v1920 = vadd.f32 0.0, %v1919
        %v1921 = vpop.f32.mrb[0].mxu0
        %1922 = vdwg.mxu0
        %v1923 = vadd.f32 %v260, %v1861
        %v1924 = vadd.f32 %v260, %v1864
        %v1925 = vadd.f32 %v260, %v1869
        %v1926 = vadd.f32 %v260, %v1872
        %v1927 = vadd.f32 %v260, %v1877
        %v1928 = vadd.f32 %v260, %v1880
        %v1929 = vadd.f32 %v260, %v1885
        %v1930 = vadd.f32 %v260, %v1888
        %v1931 = vadd.f32 %v260, %v1893
        %v1932 = vadd.f32 %v260, %v1896
        %v1933 = vadd.f32 %v260, %v1901
        %v1934 = vadd.f32 %v260, %v1904
        %v1935 = vadd.f32 %v260, %v1909
        %v1936 = vadd.f32 %v260, %v1912
        %v1937 = vadd.f32 %v260, %v1917
        %v1938 = vadd.f32 %v260, %v1920
        %s1939 = scalar_lea.vmem %s215, 144
        %v1940 = vld [vmem:[%s1939] sm:$0xf]
        %v1941 = vld [vmem:[%s1939 + $0x4] sm:$0xf]
        %v1942 = vld [vmem:[%s1939 + $0x8] sm:$0xf]
        %v1943 = vld [vmem:[%s1939 + $0xc] sm:$0xf]
        %v1948 = vunpack.c.l.b16 %v1940
        %v1949 = vunpack.c.l.b16 %v1941
        %v1950 = vunpack.c.l.b16 %v1942
        %v1951 = vunpack.c.l.b16 %v1943
        %v1952 = vpack.c.b16 %v1949, %v1948
        %v1953 = vpack.c.b16 %v1951, %v1950
        %1956 = vmatprep.subr.bf16.mxu0 0
        %1957 = vmatpush1.bf16.msra.mxu0 %v1952
        %1958 = vmatprep.subr.bf16.mxu0 0
        %1959 = vmatpush1.bf16.msra.mxu0 %v1953
        %1960 = vmatprep.subr.bf16.mxu0 0
        %1961 = vmatpush1.bf16.msra.mxu0 0
        %1962 = vmatprep.subr.bf16.mxu0 0
        %1963 = vmatpush1.bf16.msra.mxu0 0
        %1964 = vmatprep.subr.bf16.mxu0 0
        %1965 = vmatpush1.bf16.msra.mxu0 0
        %1966 = vmatprep.subr.bf16.mxu0 0
        %1967 = vmatpush1.bf16.msra.mxu0 0
        %1968 = vmatprep.subr.bf16.mxu0 0
        %1969 = vmatpush1.bf16.msra.mxu0 0
        %1970 = vmatprep.subr.bf16.mxu0 0
        %1971 = vmatpush1.bf16.msra.mxu0 0
        %1972 = vmatprep.subr.bf16.mxu0 0
        %1973 = vmatpush1.bf16.msra.mxu0 0
        %1974 = vmatprep.subr.bf16.mxu0 0
        %1975 = vmatpush1.bf16.msra.mxu0 0
        %1976 = vmatprep.subr.bf16.mxu0 0
        %1977 = vmatpush1.bf16.msra.mxu0 0
        %1978 = vmatprep.subr.bf16.mxu0 0
        %1979 = vmatpush1.bf16.msra.mxu0 0
        %1980 = vmatprep.subr.bf16.mxu0 0
        %1981 = vmatpush1.bf16.msra.mxu0 0
        %1982 = vmatprep.subr.bf16.mxu0 0
        %1983 = vmatpush1.bf16.msra.mxu0 0
        %1984 = vmatprep.subr.bf16.mxu0 0
        %1985 = vmatpush1.bf16.msra.mxu0 0
        %1986 = vmatprep.subr.bf16.mxu0 0
        %1987 = vmatpush1.bf16.msra.mxu0 0
        %1988 = vmatprep.mubr.bf16.mxu0 0
        %1989 = vmatmul.mubr.bf16.gmra.mrb[0].mxu0 %v696
        %v1990 = vpop.f32.mrb[0].mxu0
        %v1991 = vadd.f32 0.0, %v1990
        %v1992 = vpop.f32.mrb[0].mxu0
        %v1993 = vpop.f32.mrb[0].mxu0
        %v1994 = vadd.f32 0.0, %v1993
        %v1995 = vpop.f32.mrb[0].mxu0
        %1996 = vmatprep.mubr.bf16.mxu0 0
        %1997 = vmatmul.mubr.bf16.gmra.mrb[0].mxu0 %v699
        %v1998 = vpop.f32.mrb[0].mxu0
        %v1999 = vadd.f32 0.0, %v1998
        %v2000 = vpop.f32.mrb[0].mxu0
        %v2001 = vpop.f32.mrb[0].mxu0
        %v2002 = vadd.f32 0.0, %v2001
        %v2003 = vpop.f32.mrb[0].mxu0
        %2004 = vmatprep.mubr.bf16.mxu0 0
        %2005 = vmatmul.mubr.bf16.gmra.mrb[0].mxu0 %v702
        %v2006 = vpop.f32.mrb[0].mxu0
        %v2007 = vadd.f32 0.0, %v2006
        %v2008 = vpop.f32.mrb[0].mxu0
        %v2009 = vpop.f32.mrb[0].mxu0
        %v2010 = vadd.f32 0.0, %v2009
        %v2011 = vpop.f32.mrb[0].mxu0
        %2012 = vmatprep.mubr.bf16.mxu0 0
        %2013 = vmatmul.mubr.bf16.gmra.mrb[0].mxu0 %v705
        %v2014 = vpop.f32.mrb[0].mxu0
        %v2015 = vadd.f32 0.0, %v2014
        %v2016 = vpop.f32.mrb[0].mxu0
        %v2017 = vpop.f32.mrb[0].mxu0
        %v2018 = vadd.f32 0.0, %v2017
        %v2019 = vpop.f32.mrb[0].mxu0
        %2020 = vmatprep.mubr.bf16.mxu0 0
        %2021 = vmatmul.mubr.bf16.gmra.mrb[0].mxu0 %v708
        %v2022 = vpop.f32.mrb[0].mxu0
        %v2023 = vadd.f32 0.0, %v2022
        %v2024 = vpop.f32.mrb[0].mxu0
        %v2025 = vpop.f32.mrb[0].mxu0
        %v2026 = vadd.f32 0.0, %v2025
        %v2027 = vpop.f32.mrb[0].mxu0
        %2028 = vmatprep.mubr.bf16.mxu0 0
        %2029 = vmatmul.mubr.bf16.gmra.mrb[0].mxu0 %v711
        %v2030 = vpop.f32.mrb[0].mxu0
        %v2031 = vadd.f32 0.0, %v2030
        %v2032 = vpop.f32.mrb[0].mxu0
        %v2033 = vpop.f32.mrb[0].mxu0
        %v2034 = vadd.f32 0.0, %v2033
        %v2035 = vpop.f32.mrb[0].mxu0
        %2036 = vmatprep.mubr.bf16.mxu0 0
        %2037 = vmatmul.mubr.bf16.gmra.mrb[0].mxu0 %v714
        %v2038 = vpop.f32.mrb[0].mxu0
        %v2039 = vadd.f32 0.0, %v2038
        %v2040 = vpop.f32.mrb[0].mxu0
        %v2041 = vpop.f32.mrb[0].mxu0
        %v2042 = vadd.f32 0.0, %v2041
        %v2043 = vpop.f32.mrb[0].mxu0
        %2044 = vmatprep.mubr.bf16.mxu0 0
        %2045 = vmatmul.mubr.bf16.gmra.mrb[0].mxu0 %v1012
        %v2046 = vpop.f32.mrb[0].mxu0
        %v2047 = vadd.f32 0.0, %v2046
        %v2048 = vpop.f32.mrb[0].mxu0
        %v2049 = vpop.f32.mrb[0].mxu0
        %v2050 = vadd.f32 0.0, %v2049
        %v2051 = vpop.f32.mrb[0].mxu0
        %2052 = vdwg.mxu0
        %v2053 = vadd.f32 %v1923, %v1991
        %v2054 = vadd.f32 %v1924, %v1994
        %v2055 = vadd.f32 %v1925, %v1999
        %v2056 = vadd.f32 %v1926, %v2002
        %v2057 = vadd.f32 %v1927, %v2007
        %v2058 = vadd.f32 %v1928, %v2010
        %v2059 = vadd.f32 %v1929, %v2015
        %v2060 = vadd.f32 %v1930, %v2018
        %v2061 = vadd.f32 %v1931, %v2023
        %v2062 = vadd.f32 %v1932, %v2026
        %v2063 = vadd.f32 %v1933, %v2031
        %v2064 = vadd.f32 %v1934, %v2034
        %v2065 = vadd.f32 %v1935, %v2039
        %v2066 = vadd.f32 %v1936, %v2042
        %v2067 = vadd.f32 %v1937, %v2047
        %v2068 = vadd.f32 %v1938, %v2050
        %s2069 = scalar_lea.vmem %s215, 160
        %v2070 = vld [vmem:[%s2069] sm:$0xf]
        %v2071 = vld [vmem:[%s2069 + $0x4] sm:$0xf]
        %v2072 = vld [vmem:[%s2069 + $0x8] sm:$0xf]
        %v2073 = vld [vmem:[%s2069 + $0xc] sm:$0xf]
        %v2076 = vunpack.c.l.b16 %v253
        %v2077 = vunpack.c.l.b16 %v254
        %v2078 = vpack.c.b16 %v2077, %v2076
        %v2083 = vunpack.c.l.b16 %v2070
        %v2084 = vunpack.c.l.b16 %v2071
        %v2085 = vunpack.c.l.b16 %v2072
        %v2086 = vunpack.c.l.b16 %v2073
        %v2087 = vpack.c.b16 %v2084, %v2083
        %v2088 = vpack.c.b16 %v2086, %v2085
        %v2092 = vsel %vm318, %v2078, 0
        %2094 = vmatprep.subr.bf16.mxu0 0
        %2095 = vmatpush1.bf16.msra.mxu0 %v2087
        %2096 = vmatprep.subr.bf16.mxu0 0
        %2097 = vmatpush1.bf16.msra.mxu0 %v2088
        %2098 = vmatprep.subr.bf16.mxu0 0
        %2099 = vmatpush1.bf16.msra.mxu0 0
        %2100 = vmatprep.subr.bf16.mxu0 0
        %2101 = vmatpush1.bf16.msra.mxu0 0
        %2102 = vmatprep.subr.bf16.mxu0 0
        %2103 = vmatpush1.bf16.msra.mxu0 0
        %2104 = vmatprep.subr.bf16.mxu0 0
        %2105 = vmatpush1.bf16.msra.mxu0 0
        %2106 = vmatprep.subr.bf16.mxu0 0
        %2107 = vmatpush1.bf16.msra.mxu0 0
        %2108 = vmatprep.subr.bf16.mxu0 0
        %2109 = vmatpush1.bf16.msra.mxu0 0
        %2110 = vmatprep.subr.bf16.mxu0 0
        %2111 = vmatpush1.bf16.msra.mxu0 0
        %2112 = vmatprep.subr.bf16.mxu0 0
        %2113 = vmatpush1.bf16.msra.mxu0 0
        %2114 = vmatprep.subr.bf16.mxu0 0
        %2115 = vmatpush1.bf16.msra.mxu0 0
        %2116 = vmatprep.subr.bf16.mxu0 0
        %2117 = vmatpush1.bf16.msra.mxu0 0
        %2118 = vmatprep.subr.bf16.mxu0 0
        %2119 = vmatpush1.bf16.msra.mxu0 0
        %2120 = vmatprep.subr.bf16.mxu0 0
        %2121 = vmatpush1.bf16.msra.mxu0 0
        %2122 = vmatprep.subr.bf16.mxu0 0
        %2123 = vmatpush1.bf16.msra.mxu0 0
        %2124 = vmatprep.subr.bf16.mxu0 0
        %2125 = vmatpush1.bf16.msra.mxu0 0
        %2126 = vmatprep.mubr.bf16.mxu0 0
        %2127 = vmatmul.mubr.bf16.gmra.mrb[0].mxu0 %v326
        %v2128 = vpop.f32.mrb[0].mxu0
        %v2129 = vadd.f32 0.0, %v2128
        %v2130 = vpop.f32.mrb[0].mxu0
        %v2131 = vpop.f32.mrb[0].mxu0
        %v2132 = vadd.f32 0.0, %v2131
        %v2133 = vpop.f32.mrb[0].mxu0
        %2134 = vmatprep.mubr.bf16.mxu0 0
        %2135 = vmatmul.mubr.bf16.gmra.mrb[0].mxu0 %v329
        %v2136 = vpop.f32.mrb[0].mxu0
        %v2137 = vadd.f32 0.0, %v2136
        %v2138 = vpop.f32.mrb[0].mxu0
        %v2139 = vpop.f32.mrb[0].mxu0
        %v2140 = vadd.f32 0.0, %v2139
        %v2141 = vpop.f32.mrb[0].mxu0
        %2142 = vmatprep.mubr.bf16.mxu0 0
        %2143 = vmatmul.mubr.bf16.gmra.mrb[0].mxu0 %v332
        %v2144 = vpop.f32.mrb[0].mxu0
        %v2145 = vadd.f32 0.0, %v2144
        %v2146 = vpop.f32.mrb[0].mxu0
        %v2147 = vpop.f32.mrb[0].mxu0
        %v2148 = vadd.f32 0.0, %v2147
        %v2149 = vpop.f32.mrb[0].mxu0
        %2150 = vmatprep.mubr.bf16.mxu0 0
        %2151 = vmatmul.mubr.bf16.gmra.mrb[0].mxu0 %v335
        %v2152 = vpop.f32.mrb[0].mxu0
        %v2153 = vadd.f32 0.0, %v2152
        %v2154 = vpop.f32.mrb[0].mxu0
        %v2155 = vpop.f32.mrb[0].mxu0
        %v2156 = vadd.f32 0.0, %v2155
        %v2157 = vpop.f32.mrb[0].mxu0
        %2158 = vmatprep.mubr.bf16.mxu0 0
        %2159 = vmatmul.mubr.bf16.gmra.mrb[0].mxu0 %v338
        %v2160 = vpop.f32.mrb[0].mxu0
        %v2161 = vadd.f32 0.0, %v2160
        %v2162 = vpop.f32.mrb[0].mxu0
        %v2163 = vpop.f32.mrb[0].mxu0
        %v2164 = vadd.f32 0.0, %v2163
        %v2165 = vpop.f32.mrb[0].mxu0
        %2166 = vmatprep.mubr.bf16.mxu0 0
        %2167 = vmatmul.mubr.bf16.gmra.mrb[0].mxu0 %v341
        %v2168 = vpop.f32.mrb[0].mxu0
        %v2169 = vadd.f32 0.0, %v2168
        %v2170 = vpop.f32.mrb[0].mxu0
        %v2171 = vpop.f32.mrb[0].mxu0
        %v2172 = vadd.f32 0.0, %v2171
        %v2173 = vpop.f32.mrb[0].mxu0
        %2174 = vmatprep.mubr.bf16.mxu0 0
        %2175 = vmatmul.mubr.bf16.gmra.mrb[0].mxu0 %v852
        %v2176 = vpop.f32.mrb[0].mxu0
        %v2177 = vadd.f32 0.0, %v2176
        %v2178 = vpop.f32.mrb[0].mxu0
        %v2179 = vpop.f32.mrb[0].mxu0
        %v2180 = vadd.f32 0.0, %v2179
        %v2181 = vpop.f32.mrb[0].mxu0
        %2182 = vmatprep.mubr.bf16.mxu0 0
        %2183 = vmatmul.mubr.bf16.gmra.mrb[0].mxu0 %v2092
        %v2184 = vpop.f32.mrb[0].mxu0
        %v2185 = vadd.f32 0.0, %v2184
        %v2186 = vpop.f32.mrb[0].mxu0
        %v2187 = vpop.f32.mrb[0].mxu0
        %v2188 = vadd.f32 0.0, %v2187
        %v2189 = vpop.f32.mrb[0].mxu0
        %2190 = vdwg.mxu0
        %v2191 = vadd.f32 %v2053, %v2129
        %v2192 = vadd.f32 %v2054, %v2132
        %v2193 = vadd.f32 %v2055, %v2137
        %v2194 = vadd.f32 %v2056, %v2140
        %v2195 = vadd.f32 %v2057, %v2145
        %v2196 = vadd.f32 %v2058, %v2148
        %v2197 = vadd.f32 %v2059, %v2153
        %v2198 = vadd.f32 %v2060, %v2156
        %v2199 = vadd.f32 %v2061, %v2161
        %v2200 = vadd.f32 %v2062, %v2164
        %v2201 = vadd.f32 %v2063, %v2169
        %v2202 = vadd.f32 %v2064, %v2172
        %v2203 = vadd.f32 %v2065, %v2177
        %v2204 = vadd.f32 %v2066, %v2180
        %v2205 = vadd.f32 %v2067, %v2185
        %v2206 = vadd.f32 %v2068, %v2188
        %v2208 = vshrl.u32 %v253, 16
        %v2210 = vrot.slane %v2208, 4
        %v2211 = vshll.u32 %v253, 16
        %v2213 = vrot.slane %v2211, 5
        %v2214 = vor.u32 %v2210, %v2213
        %v2215 = vrot.slane %v2214, 4
        %v2217 = vshll.u32 %v254, 16
        %v2219 = vrot.slane %v2217, 5
        %v2220 = vsel %vm458, %v2215, %v2219
        %v2221 = vshrl.u32 %v254, 16
        %v2223 = vrot.slane %v2221, 4
        %v2224 = vor.u32 %v2223, %v2219
        %v2225 = vrot.slane %v2224, 4
        %v2227 = vshll.u32 %v255, 16
        %v2229 = vrot.slane %v2227, 5
        %v2230 = vsel %vm458, %v2225, %v2229
        %s2231 = scalar_lea.vmem %s215, 176
        %v2232 = vld [vmem:[%s2231] sm:$0xf]
        %v2233 = vld [vmem:[%s2231 + $0x4] sm:$0xf]
        %v2234 = vld [vmem:[%s2231 + $0x8] sm:$0xf]
        %v2235 = vld [vmem:[%s2231 + $0xc] sm:$0xf]
        %v2236 = vunpack.c.l.b16 %v2220
        %v2237 = vunpack.c.l.b16 %v2230
        %v2238 = vpack.c.b16 %v2237, %v2236
        %v2243 = vunpack.c.l.b16 %v2232
        %v2244 = vunpack.c.l.b16 %v2233
        %v2245 = vunpack.c.l.b16 %v2234
        %v2246 = vunpack.c.l.b16 %v2235
        %v2247 = vpack.c.b16 %v2244, %v2243
        %v2248 = vpack.c.b16 %v2246, %v2245
        %v2252 = vsel %vm318, %v2238, 0
        %2254 = vmatprep.subr.bf16.mxu0 0
        %2255 = vmatpush1.bf16.msra.mxu0 %v2247
        %2256 = vmatprep.subr.bf16.mxu0 0
        %2257 = vmatpush1.bf16.msra.mxu0 %v2248
        %2258 = vmatprep.subr.bf16.mxu0 0
        %2259 = vmatpush1.bf16.msra.mxu0 0
        %2260 = vmatprep.subr.bf16.mxu0 0
        %2261 = vmatpush1.bf16.msra.mxu0 0
        %2262 = vmatprep.subr.bf16.mxu0 0
        %2263 = vmatpush1.bf16.msra.mxu0 0
        %2264 = vmatprep.subr.bf16.mxu0 0
        %2265 = vmatpush1.bf16.msra.mxu0 0
        %2266 = vmatprep.subr.bf16.mxu0 0
        %2267 = vmatpush1.bf16.msra.mxu0 0
        %2268 = vmatprep.subr.bf16.mxu0 0
        %2269 = vmatpush1.bf16.msra.mxu0 0
        %2270 = vmatprep.subr.bf16.mxu0 0
        %2271 = vmatpush1.bf16.msra.mxu0 0
        %2272 = vmatprep.subr.bf16.mxu0 0
        %2273 = vmatpush1.bf16.msra.mxu0 0
        %2274 = vmatprep.subr.bf16.mxu0 0
        %2275 = vmatpush1.bf16.msra.mxu0 0
        %2276 = vmatprep.subr.bf16.mxu0 0
        %2277 = vmatpush1.bf16.msra.mxu0 0
        %2278 = vmatprep.subr.bf16.mxu0 0
        %2279 = vmatpush1.bf16.msra.mxu0 0
        %2280 = vmatprep.subr.bf16.mxu0 0
        %2281 = vmatpush1.bf16.msra.mxu0 0
        %2282 = vmatprep.subr.bf16.mxu0 0
        %2283 = vmatpush1.bf16.msra.mxu0 0
        %2284 = vmatprep.subr.bf16.mxu0 0
        %2285 = vmatpush1.bf16.msra.mxu0 0
        %2286 = vmatprep.mubr.bf16.mxu0 0
        %2287 = vmatmul.mubr.bf16.gmra.mrb[0].mxu0 %v699
        %v2288 = vpop.f32.mrb[0].mxu0
        %v2289 = vadd.f32 0.0, %v2288
        %v2290 = vpop.f32.mrb[0].mxu0
        %v2291 = vpop.f32.mrb[0].mxu0
        %v2292 = vadd.f32 0.0, %v2291
        %v2293 = vpop.f32.mrb[0].mxu0
        %2294 = vmatprep.mubr.bf16.mxu0 0
        %2295 = vmatmul.mubr.bf16.gmra.mrb[0].mxu0 %v702
        %v2296 = vpop.f32.mrb[0].mxu0
        %v2297 = vadd.f32 0.0, %v2296
        %v2298 = vpop.f32.mrb[0].mxu0
        %v2299 = vpop.f32.mrb[0].mxu0
        %v2300 = vadd.f32 0.0, %v2299
        %v2301 = vpop.f32.mrb[0].mxu0
        %2302 = vmatprep.mubr.bf16.mxu0 0
        %2303 = vmatmul.mubr.bf16.gmra.mrb[0].mxu0 %v705
        %v2304 = vpop.f32.mrb[0].mxu0
        %v2305 = vadd.f32 0.0, %v2304
        %v2306 = vpop.f32.mrb[0].mxu0
        %v2307 = vpop.f32.mrb[0].mxu0
        %v2308 = vadd.f32 0.0, %v2307
        %v2309 = vpop.f32.mrb[0].mxu0
        %2310 = vmatprep.mubr.bf16.mxu0 0
        %2311 = vmatmul.mubr.bf16.gmra.mrb[0].mxu0 %v708
        %v2312 = vpop.f32.mrb[0].mxu0
        %v2313 = vadd.f32 0.0, %v2312
        %v2314 = vpop.f32.mrb[0].mxu0
        %v2315 = vpop.f32.mrb[0].mxu0
        %v2316 = vadd.f32 0.0, %v2315
        %v2317 = vpop.f32.mrb[0].mxu0
        %2318 = vmatprep.mubr.bf16.mxu0 0
        %2319 = vmatmul.mubr.bf16.gmra.mrb[0].mxu0 %v711
        %v2320 = vpop.f32.mrb[0].mxu0
        %v2321 = vadd.f32 0.0, %v2320
        %v2322 = vpop.f32.mrb[0].mxu0
        %v2323 = vpop.f32.mrb[0].mxu0
        %v2324 = vadd.f32 0.0, %v2323
        %v2325 = vpop.f32.mrb[0].mxu0
        %2326 = vmatprep.mubr.bf16.mxu0 0
        %2327 = vmatmul.mubr.bf16.gmra.mrb[0].mxu0 %v714
        %v2328 = vpop.f32.mrb[0].mxu0
        %v2329 = vadd.f32 0.0, %v2328
        %v2330 = vpop.f32.mrb[0].mxu0
        %v2331 = vpop.f32.mrb[0].mxu0
        %v2332 = vadd.f32 0.0, %v2331
        %v2333 = vpop.f32.mrb[0].mxu0
        %2334 = vmatprep.mubr.bf16.mxu0 0
        %2335 = vmatmul.mubr.bf16.gmra.mrb[0].mxu0 %v1012
        %v2336 = vpop.f32.mrb[0].mxu0
        %v2337 = vadd.f32 0.0, %v2336
        %v2338 = vpop.f32.mrb[0].mxu0
        %v2339 = vpop.f32.mrb[0].mxu0
        %v2340 = vadd.f32 0.0, %v2339
        %v2341 = vpop.f32.mrb[0].mxu0
        %2342 = vmatprep.mubr.bf16.mxu0 0
        %2343 = vmatmul.mubr.bf16.gmra.mrb[0].mxu0 %v2252
        %v2344 = vpop.f32.mrb[0].mxu0
        %v2345 = vadd.f32 0.0, %v2344
        %v2346 = vpop.f32.mrb[0].mxu0
        %v2347 = vpop.f32.mrb[0].mxu0
        %v2348 = vadd.f32 0.0, %v2347
        %v2349 = vpop.f32.mrb[0].mxu0
        %2350 = vdwg.mxu0
        %v2351 = vadd.f32 %v2191, %v2289
        %v2352 = vadd.f32 %v2192, %v2292
        %v2353 = vadd.f32 %v2193, %v2297
        %v2354 = vadd.f32 %v2194, %v2300
        %v2355 = vadd.f32 %v2195, %v2305
        %v2356 = vadd.f32 %v2196, %v2308
        %v2357 = vadd.f32 %v2197, %v2313
        %v2358 = vadd.f32 %v2198, %v2316
        %v2359 = vadd.f32 %v2199, %v2321
        %v2360 = vadd.f32 %v2200, %v2324
        %v2361 = vadd.f32 %v2201, %v2329
        %v2362 = vadd.f32 %v2202, %v2332
        %v2363 = vadd.f32 %v2203, %v2337
        %v2364 = vadd.f32 %v2204, %v2340
        %v2365 = vadd.f32 %v2205, %v2345
        %v2366 = vadd.f32 %v2206, %v2348
        %s2367 = scalar_lea.vmem %s206, 256 [#allocation2]
        %2368 = vst [vmem:[%s2367] sm:$0xff] %v2351
        %2369 = vst [vmem:[%s2367 + $0x8] sm:$0xff] %v2352
        %2370 = vst [vmem:[%s2367 + $0x10] sm:$0xff] %v2353
        %2371 = vst [vmem:[%s2367 + $0x18] sm:$0xff] %v2354
        %2372 = vst [vmem:[%s2367 + $0x20] sm:$0xff] %v2355
        %2373 = vst [vmem:[%s2367 + $0x28] sm:$0xff] %v2356
        %2374 = vst [vmem:[%s2367 + $0x30] sm:$0xff] %v2357
        %2375 = vst [vmem:[%s2367 + $0x38] sm:$0xff] %v2358
        %2376 = vst [vmem:[%s2367 + $0x40] sm:$0xff] %v2359
        %2377 = vst [vmem:[%s2367 + $0x48] sm:$0xff] %v2360
        %2378 = vst [vmem:[%s2367 + $0x50] sm:$0xff] %v2361
        %2379 = vst [vmem:[%s2367 + $0x58] sm:$0xff] %v2362
        %2380 = vst [vmem:[%s2367 + $0x60] sm:$0xff] %v2363
        %2381 = vst [vmem:[%s2367 + $0x68] sm:$0xff] %v2364
        %2382 = vst [vmem:[%s2367 + $0x70] sm:$0xff] %v2365
        %2383 = vst [vmem:[%s2367 + $0x78] sm:$0xff] %v2366
        %s2384 = scalar_lea.vmem %s215, 192
        %v2385 = vld [vmem:[%s2384] sm:$0xf]
        %v2386 = vld [vmem:[%s2384 + $0x4] sm:$0xf]
        %v2387 = vld [vmem:[%s2384 + $0x8] sm:$0xf]
        %v2388 = vld [vmem:[%s2384 + $0xc] sm:$0xf]
        %v2393 = vunpack.c.l.b16 %v2385
        %v2394 = vunpack.c.l.b16 %v2386
        %v2395 = vunpack.c.l.b16 %v2387
        %v2396 = vunpack.c.l.b16 %v2388
        %v2397 = vpack.c.b16 %v2394, %v2393
        %v2398 = vpack.c.b16 %v2396, %v2395
        %2401 = vmatprep.subr.bf16.mxu0 0
        %2402 = vmatpush1.bf16.msra.mxu0 %v2397
        %2403 = vmatprep.subr.bf16.mxu0 0
        %2404 = vmatpush1.bf16.msra.mxu0 %v2398
        %2405 = vmatprep.subr.bf16.mxu0 0
        %2406 = vmatpush1.bf16.msra.mxu0 0
        %2407 = vmatprep.subr.bf16.mxu0 0
        %2408 = vmatpush1.bf16.msra.mxu0 0
        %2409 = vmatprep.subr.bf16.mxu0 0
        %2410 = vmatpush1.bf16.msra.mxu0 0
        %2411 = vmatprep.subr.bf16.mxu0 0
        %2412 = vmatpush1.bf16.msra.mxu0 0
        %2413 = vmatprep.subr.bf16.mxu0 0
        %2414 = vmatpush1.bf16.msra.mxu0 0
        %2415 = vmatprep.subr.bf16.mxu0 0
        %2416 = vmatpush1.bf16.msra.mxu0 0
        %2417 = vmatprep.subr.bf16.mxu0 0
        %2418 = vmatpush1.bf16.msra.mxu0 0
        %2419 = vmatprep.subr.bf16.mxu0 0
        %2420 = vmatpush1.bf16.msra.mxu0 0
        %2421 = vmatprep.subr.bf16.mxu0 0
        %2422 = vmatpush1.bf16.msra.mxu0 0
        %2423 = vmatprep.subr.bf16.mxu0 0
        %2424 = vmatpush1.bf16.msra.mxu0 0
        %2425 = vmatprep.subr.bf16.mxu0 0
        %2426 = vmatpush1.bf16.msra.mxu0 0
        %2427 = vmatprep.subr.bf16.mxu0 0
        %2428 = vmatpush1.bf16.msra.mxu0 0
        %2429 = vmatprep.subr.bf16.mxu0 0
        %2430 = vmatpush1.bf16.msra.mxu0 0
        %2431 = vmatprep.subr.bf16.mxu0 0
        %2432 = vmatpush1.bf16.msra.mxu0 0
        %2433 = vmatprep.mubr.bf16.mxu0 0
        %2434 = vmatmul.mubr.bf16.gmra.mrb[0].mxu0 %v696
        %v2435 = vpop.f32.mrb[0].mxu0
        %v2436 = vadd.f32 0.0, %v2435
        %v2437 = vpop.f32.mrb[0].mxu0
        %v2438 = vpop.f32.mrb[0].mxu0
        %v2439 = vadd.f32 0.0, %v2438
        %v2440 = vpop.f32.mrb[0].mxu0
        %2441 = vmatprep.mubr.bf16.mxu0 0
        %2442 = vmatmul.mubr.bf16.gmra.mrb[0].mxu0 %v699
        %v2443 = vpop.f32.mrb[0].mxu0
        %v2444 = vadd.f32 0.0, %v2443
        %v2445 = vpop.f32.mrb[0].mxu0
        %v2446 = vpop.f32.mrb[0].mxu0
        %v2447 = vadd.f32 0.0, %v2446
        %v2448 = vpop.f32.mrb[0].mxu0
        %2449 = vmatprep.mubr.bf16.mxu0 0
        %2450 = vmatmul.mubr.bf16.gmra.mrb[0].mxu0 %v702
        %v2451 = vpop.f32.mrb[0].mxu0
        %v2452 = vadd.f32 0.0, %v2451
        %v2453 = vpop.f32.mrb[0].mxu0
        %v2454 = vpop.f32.mrb[0].mxu0
        %v2455 = vadd.f32 0.0, %v2454
        %v2456 = vpop.f32.mrb[0].mxu0
        %2457 = vmatprep.mubr.bf16.mxu0 0
        %2458 = vmatmul.mubr.bf16.gmra.mrb[0].mxu0 %v705
        %v2459 = vpop.f32.mrb[0].mxu0
        %v2460 = vadd.f32 0.0, %v2459
        %v2461 = vpop.f32.mrb[0].mxu0
        %v2462 = vpop.f32.mrb[0].mxu0
        %v2463 = vadd.f32 0.0, %v2462
        %v2464 = vpop.f32.mrb[0].mxu0
        %2465 = vmatprep.mubr.bf16.mxu0 0
        %2466 = vmatmul.mubr.bf16.gmra.mrb[0].mxu0 %v708
        %v2467 = vpop.f32.mrb[0].mxu0
        %v2468 = vadd.f32 0.0, %v2467
        %v2469 = vpop.f32.mrb[0].mxu0
        %v2470 = vpop.f32.mrb[0].mxu0
        %v2471 = vadd.f32 0.0, %v2470
        %v2472 = vpop.f32.mrb[0].mxu0
        %2473 = vmatprep.mubr.bf16.mxu0 0
        %2474 = vmatmul.mubr.bf16.gmra.mrb[0].mxu0 %v711
        %v2475 = vpop.f32.mrb[0].mxu0
        %v2476 = vadd.f32 0.0, %v2475
        %v2477 = vpop.f32.mrb[0].mxu0
        %v2478 = vpop.f32.mrb[0].mxu0
        %v2479 = vadd.f32 0.0, %v2478
        %v2480 = vpop.f32.mrb[0].mxu0
        %2481 = vmatprep.mubr.bf16.mxu0 0
        %2482 = vmatmul.mubr.bf16.gmra.mrb[0].mxu0 %v714
        %v2483 = vpop.f32.mrb[0].mxu0
        %v2484 = vadd.f32 0.0, %v2483
        %v2485 = vpop.f32.mrb[0].mxu0
        %v2486 = vpop.f32.mrb[0].mxu0
        %v2487 = vadd.f32 0.0, %v2486
        %v2488 = vpop.f32.mrb[0].mxu0
        %2489 = vmatprep.mubr.bf16.mxu0 0
        %2490 = vmatmul.mubr.bf16.gmra.mrb[0].mxu0 %v1012
        %v2491 = vpop.f32.mrb[0].mxu0
        %v2492 = vadd.f32 0.0, %v2491
        %v2493 = vpop.f32.mrb[0].mxu0
        %v2494 = vpop.f32.mrb[0].mxu0
        %v2495 = vadd.f32 0.0, %v2494
        %v2496 = vpop.f32.mrb[0].mxu0
        %2497 = vdwg.mxu0
        %v2498 = vadd.f32 %v260, %v2436
        %v2499 = vadd.f32 %v260, %v2439
        %v2500 = vadd.f32 %v260, %v2444
        %v2501 = vadd.f32 %v260, %v2447
        %v2502 = vadd.f32 %v260, %v2452
        %v2503 = vadd.f32 %v260, %v2455
        %v2504 = vadd.f32 %v260, %v2460
        %v2505 = vadd.f32 %v260, %v2463
        %v2506 = vadd.f32 %v260, %v2468
        %v2507 = vadd.f32 %v260, %v2471
        %v2508 = vadd.f32 %v260, %v2476
        %v2509 = vadd.f32 %v260, %v2479
        %v2510 = vadd.f32 %v260, %v2484
        %v2511 = vadd.f32 %v260, %v2487
        %v2512 = vadd.f32 %v260, %v2492
        %v2513 = vadd.f32 %v260, %v2495
        %s2514 = scalar_lea.vmem %s215, 208
        %v2515 = vld [vmem:[%s2514] sm:$0xf]
        %v2516 = vld [vmem:[%s2514 + $0x4] sm:$0xf]
        %v2517 = vld [vmem:[%s2514 + $0x8] sm:$0xf]
        %v2518 = vld [vmem:[%s2514 + $0xc] sm:$0xf]
        %v2523 = vunpack.c.l.b16 %v2515
        %v2524 = vunpack.c.l.b16 %v2516
        %v2525 = vunpack.c.l.b16 %v2517
        %v2526 = vunpack.c.l.b16 %v2518
        %v2527 = vpack.c.b16 %v2524, %v2523
        %v2528 = vpack.c.b16 %v2526, %v2525
        %2531 = vmatprep.subr.bf16.mxu0 0
        %2532 = vmatpush1.bf16.msra.mxu0 %v2527
        %2533 = vmatprep.subr.bf16.mxu0 0
        %2534 = vmatpush1.bf16.msra.mxu0 %v2528
        %2535 = vmatprep.subr.bf16.mxu0 0
        %2536 = vmatpush1.bf16.msra.mxu0 0
        %2537 = vmatprep.subr.bf16.mxu0 0
        %2538 = vmatpush1.bf16.msra.mxu0 0
        %2539 = vmatprep.subr.bf16.mxu0 0
        %2540 = vmatpush1.bf16.msra.mxu0 0
        %2541 = vmatprep.subr.bf16.mxu0 0
        %2542 = vmatpush1.bf16.msra.mxu0 0
        %2543 = vmatprep.subr.bf16.mxu0 0
        %2544 = vmatpush1.bf16.msra.mxu0 0
        %2545 = vmatprep.subr.bf16.mxu0 0
        %2546 = vmatpush1.bf16.msra.mxu0 0
        %2547 = vmatprep.subr.bf16.mxu0 0
        %2548 = vmatpush1.bf16.msra.mxu0 0
        %2549 = vmatprep.subr.bf16.mxu0 0
        %2550 = vmatpush1.bf16.msra.mxu0 0
        %2551 = vmatprep.subr.bf16.mxu0 0
        %2552 = vmatpush1.bf16.msra.mxu0 0
        %2553 = vmatprep.subr.bf16.mxu0 0
        %2554 = vmatpush1.bf16.msra.mxu0 0
        %2555 = vmatprep.subr.bf16.mxu0 0
        %2556 = vmatpush1.bf16.msra.mxu0 0
        %2557 = vmatprep.subr.bf16.mxu0 0
        %2558 = vmatpush1.bf16.msra.mxu0 0
        %2559 = vmatprep.subr.bf16.mxu0 0
        %2560 = vmatpush1.bf16.msra.mxu0 0
        %2561 = vmatprep.subr.bf16.mxu0 0
        %2562 = vmatpush1.bf16.msra.mxu0 0
        %2563 = vmatprep.mubr.bf16.mxu0 0
        %2564 = vmatmul.mubr.bf16.gmra.mrb[0].mxu0 %v1385
        %v2565 = vpop.f32.mrb[0].mxu0
        %v2566 = vadd.f32 0.0, %v2565
        %v2567 = vpop.f32.mrb[0].mxu0
        %v2568 = vpop.f32.mrb[0].mxu0
        %v2569 = vadd.f32 0.0, %v2568
        %v2570 = vpop.f32.mrb[0].mxu0
        %2571 = vmatprep.mubr.bf16.mxu0 0
        %2572 = vmatmul.mubr.bf16.gmra.mrb[0].mxu0 %v1388
        %v2573 = vpop.f32.mrb[0].mxu0
        %v2574 = vadd.f32 0.0, %v2573
        %v2575 = vpop.f32.mrb[0].mxu0
        %v2576 = vpop.f32.mrb[0].mxu0
        %v2577 = vadd.f32 0.0, %v2576
        %v2578 = vpop.f32.mrb[0].mxu0
        %2579 = vmatprep.mubr.bf16.mxu0 0
        %2580 = vmatmul.mubr.bf16.gmra.mrb[0].mxu0 %v1391
        %v2581 = vpop.f32.mrb[0].mxu0
        %v2582 = vadd.f32 0.0, %v2581
        %v2583 = vpop.f32.mrb[0].mxu0
        %v2584 = vpop.f32.mrb[0].mxu0
        %v2585 = vadd.f32 0.0, %v2584
        %v2586 = vpop.f32.mrb[0].mxu0
        %2587 = vmatprep.mubr.bf16.mxu0 0
        %2588 = vmatmul.mubr.bf16.gmra.mrb[0].mxu0 %v1394
        %v2589 = vpop.f32.mrb[0].mxu0
        %v2590 = vadd.f32 0.0, %v2589
        %v2591 = vpop.f32.mrb[0].mxu0
        %v2592 = vpop.f32.mrb[0].mxu0
        %v2593 = vadd.f32 0.0, %v2592
        %v2594 = vpop.f32.mrb[0].mxu0
        %2595 = vmatprep.mubr.bf16.mxu0 0
        %2596 = vmatmul.mubr.bf16.gmra.mrb[0].mxu0 %v1397
        %v2597 = vpop.f32.mrb[0].mxu0
        %v2598 = vadd.f32 0.0, %v2597
        %v2599 = vpop.f32.mrb[0].mxu0
        %v2600 = vpop.f32.mrb[0].mxu0
        %v2601 = vadd.f32 0.0, %v2600
        %v2602 = vpop.f32.mrb[0].mxu0
        %2603 = vmatprep.mubr.bf16.mxu0 0
        %2604 = vmatmul.mubr.bf16.gmra.mrb[0].mxu0 %v1400
        %v2605 = vpop.f32.mrb[0].mxu0
        %v2606 = vadd.f32 0.0, %v2605
        %v2607 = vpop.f32.mrb[0].mxu0
        %v2608 = vpop.f32.mrb[0].mxu0
        %v2609 = vadd.f32 0.0, %v2608
        %v2610 = vpop.f32.mrb[0].mxu0
        %2611 = vmatprep.mubr.bf16.mxu0 0
        %2612 = vmatmul.mubr.bf16.gmra.mrb[0].mxu0 %v1403
        %v2613 = vpop.f32.mrb[0].mxu0
        %v2614 = vadd.f32 0.0, %v2613
        %v2615 = vpop.f32.mrb[0].mxu0
        %v2616 = vpop.f32.mrb[0].mxu0
        %v2617 = vadd.f32 0.0, %v2616
        %v2618 = vpop.f32.mrb[0].mxu0
        %2619 = vmatprep.mubr.bf16.mxu0 0
        %2620 = vmatmul.mubr.bf16.gmra.mrb[0].mxu0 %v1677
        %v2621 = vpop.f32.mrb[0].mxu0
        %v2622 = vadd.f32 0.0, %v2621
        %v2623 = vpop.f32.mrb[0].mxu0
        %v2624 = vpop.f32.mrb[0].mxu0
        %v2625 = vadd.f32 0.0, %v2624
        %v2626 = vpop.f32.mrb[0].mxu0
        %2627 = vdwg.mxu0
        %v2628 = vadd.f32 %v2498, %v2566
        %v2629 = vadd.f32 %v2499, %v2569
        %v2630 = vadd.f32 %v2500, %v2574
        %v2631 = vadd.f32 %v2501, %v2577
        %v2632 = vadd.f32 %v2502, %v2582
        %v2633 = vadd.f32 %v2503, %v2585
        %v2634 = vadd.f32 %v2504, %v2590
        %v2635 = vadd.f32 %v2505, %v2593
        %v2636 = vadd.f32 %v2506, %v2598
        %v2637 = vadd.f32 %v2507, %v2601
        %v2638 = vadd.f32 %v2508, %v2606
        %v2639 = vadd.f32 %v2509, %v2609
        %v2640 = vadd.f32 %v2510, %v2614
        %v2641 = vadd.f32 %v2511, %v2617
        %v2642 = vadd.f32 %v2512, %v2622
        %v2643 = vadd.f32 %v2513, %v2625
        %s2644 = scalar_lea.vmem %s215, 224
        %v2645 = vld [vmem:[%s2644] sm:$0xf]
        %v2646 = vld [vmem:[%s2644 + $0x4] sm:$0xf]
        %v2647 = vld [vmem:[%s2644 + $0x8] sm:$0xf]
        %v2648 = vld [vmem:[%s2644 + $0xc] sm:$0xf]
        %v2653 = vunpack.c.l.b16 %v2645
        %v2654 = vunpack.c.l.b16 %v2646
        %v2655 = vunpack.c.l.b16 %v2647
        %v2656 = vunpack.c.l.b16 %v2648
        %v2657 = vpack.c.b16 %v2654, %v2653
        %v2658 = vpack.c.b16 %v2656, %v2655
        %2661 = vmatprep.subr.bf16.mxu0 0
        %2662 = vmatpush1.bf16.msra.mxu0 %v2657
        %2663 = vmatprep.subr.bf16.mxu0 0
        %2664 = vmatpush1.bf16.msra.mxu0 %v2658
        %2665 = vmatprep.subr.bf16.mxu0 0
        %2666 = vmatpush1.bf16.msra.mxu0 0
        %2667 = vmatprep.subr.bf16.mxu0 0
        %2668 = vmatpush1.bf16.msra.mxu0 0
        %2669 = vmatprep.subr.bf16.mxu0 0
        %2670 = vmatpush1.bf16.msra.mxu0 0
        %2671 = vmatprep.subr.bf16.mxu0 0
        %2672 = vmatpush1.bf16.msra.mxu0 0
        %2673 = vmatprep.subr.bf16.mxu0 0
        %2674 = vmatpush1.bf16.msra.mxu0 0
        %2675 = vmatprep.subr.bf16.mxu0 0
        %2676 = vmatpush1.bf16.msra.mxu0 0
        %2677 = vmatprep.subr.bf16.mxu0 0
        %2678 = vmatpush1.bf16.msra.mxu0 0
        %2679 = vmatprep.subr.bf16.mxu0 0
        %2680 = vmatpush1.bf16.msra.mxu0 0
        %2681 = vmatprep.subr.bf16.mxu0 0
        %2682 = vmatpush1.bf16.msra.mxu0 0
        %2683 = vmatprep.subr.bf16.mxu0 0
        %2684 = vmatpush1.bf16.msra.mxu0 0
        %2685 = vmatprep.subr.bf16.mxu0 0
        %2686 = vmatpush1.bf16.msra.mxu0 0
        %2687 = vmatprep.subr.bf16.mxu0 0
        %2688 = vmatpush1.bf16.msra.mxu0 0
        %2689 = vmatprep.subr.bf16.mxu0 0
        %2690 = vmatpush1.bf16.msra.mxu0 0
        %2691 = vmatprep.subr.bf16.mxu0 0
        %2692 = vmatpush1.bf16.msra.mxu0 0
        %2693 = vmatprep.mubr.bf16.mxu0 0
        %2694 = vmatmul.mubr.bf16.gmra.mrb[0].mxu0 %v699
        %v2695 = vpop.f32.mrb[0].mxu0
        %v2696 = vadd.f32 0.0, %v2695
        %v2697 = vpop.f32.mrb[0].mxu0
        %v2698 = vpop.f32.mrb[0].mxu0
        %v2699 = vadd.f32 0.0, %v2698
        %v2700 = vpop.f32.mrb[0].mxu0
        %2701 = vmatprep.mubr.bf16.mxu0 0
        %2702 = vmatmul.mubr.bf16.gmra.mrb[0].mxu0 %v702
        %v2703 = vpop.f32.mrb[0].mxu0
        %v2704 = vadd.f32 0.0, %v2703
        %v2705 = vpop.f32.mrb[0].mxu0
        %v2706 = vpop.f32.mrb[0].mxu0
        %v2707 = vadd.f32 0.0, %v2706
        %v2708 = vpop.f32.mrb[0].mxu0
        %2709 = vmatprep.mubr.bf16.mxu0 0
        %2710 = vmatmul.mubr.bf16.gmra.mrb[0].mxu0 %v705
        %v2711 = vpop.f32.mrb[0].mxu0
        %v2712 = vadd.f32 0.0, %v2711
        %v2713 = vpop.f32.mrb[0].mxu0
        %v2714 = vpop.f32.mrb[0].mxu0
        %v2715 = vadd.f32 0.0, %v2714
        %v2716 = vpop.f32.mrb[0].mxu0
        %2717 = vmatprep.mubr.bf16.mxu0 0
        %2718 = vmatmul.mubr.bf16.gmra.mrb[0].mxu0 %v708
        %v2719 = vpop.f32.mrb[0].mxu0
        %v2720 = vadd.f32 0.0, %v2719
        %v2721 = vpop.f32.mrb[0].mxu0
        %v2722 = vpop.f32.mrb[0].mxu0
        %v2723 = vadd.f32 0.0, %v2722
        %v2724 = vpop.f32.mrb[0].mxu0
        %2725 = vmatprep.mubr.bf16.mxu0 0
        %2726 = vmatmul.mubr.bf16.gmra.mrb[0].mxu0 %v711
        %v2727 = vpop.f32.mrb[0].mxu0
        %v2728 = vadd.f32 0.0, %v2727
        %v2729 = vpop.f32.mrb[0].mxu0
        %v2730 = vpop.f32.mrb[0].mxu0
        %v2731 = vadd.f32 0.0, %v2730
        %v2732 = vpop.f32.mrb[0].mxu0
        %2733 = vmatprep.mubr.bf16.mxu0 0
        %2734 = vmatmul.mubr.bf16.gmra.mrb[0].mxu0 %v714
        %v2735 = vpop.f32.mrb[0].mxu0
        %v2736 = vadd.f32 0.0, %v2735
        %v2737 = vpop.f32.mrb[0].mxu0
        %v2738 = vpop.f32.mrb[0].mxu0
        %v2739 = vadd.f32 0.0, %v2738
        %v2740 = vpop.f32.mrb[0].mxu0
        %2741 = vmatprep.mubr.bf16.mxu0 0
        %2742 = vmatmul.mubr.bf16.gmra.mrb[0].mxu0 %v1012
        %v2743 = vpop.f32.mrb[0].mxu0
        %v2744 = vadd.f32 0.0, %v2743
        %v2745 = vpop.f32.mrb[0].mxu0
        %v2746 = vpop.f32.mrb[0].mxu0
        %v2747 = vadd.f32 0.0, %v2746
        %v2748 = vpop.f32.mrb[0].mxu0
        %2749 = vmatprep.mubr.bf16.mxu0 0
        %2750 = vmatmul.mubr.bf16.gmra.mrb[0].mxu0 %v2252
        %v2751 = vpop.f32.mrb[0].mxu0
        %v2752 = vadd.f32 0.0, %v2751
        %v2753 = vpop.f32.mrb[0].mxu0
        %v2754 = vpop.f32.mrb[0].mxu0
        %v2755 = vadd.f32 0.0, %v2754
        %v2756 = vpop.f32.mrb[0].mxu0
        %2757 = vdwg.mxu0
        %v2758 = vadd.f32 %v2628, %v2696
        %v2759 = vadd.f32 %v2629, %v2699
        %v2760 = vadd.f32 %v2630, %v2704
        %v2761 = vadd.f32 %v2631, %v2707
        %v2762 = vadd.f32 %v2632, %v2712
        %v2763 = vadd.f32 %v2633, %v2715
        %v2764 = vadd.f32 %v2634, %v2720
        %v2765 = vadd.f32 %v2635, %v2723
        %v2766 = vadd.f32 %v2636, %v2728
        %v2767 = vadd.f32 %v2637, %v2731
        %v2768 = vadd.f32 %v2638, %v2736
        %v2769 = vadd.f32 %v2639, %v2739
        %v2770 = vadd.f32 %v2640, %v2744
        %v2771 = vadd.f32 %v2641, %v2747
        %v2772 = vadd.f32 %v2642, %v2752
        %v2773 = vadd.f32 %v2643, %v2755
        %v2775 = vrot.slane %v253, 5
        %v2776 = vrot.slane %v2775, 4
        %v2777 = vrot.slane %v254, 5
        %v2778 = vsel %vm1283, %v2776, %v2777
        %v2779 = vrot.slane %v2777, 4
        %v2780 = vrot.slane %v255, 5
        %v2781 = vsel %vm1283, %v2779, %v2780
        %s2782 = scalar_lea.vmem %s215, 240
        %v2783 = vld [vmem:[%s2782] sm:$0xf]
        %v2784 = vld [vmem:[%s2782 + $0x4] sm:$0xf]
        %v2785 = vld [vmem:[%s2782 + $0x8] sm:$0xf]
        %v2786 = vld [vmem:[%s2782 + $0xc] sm:$0xf]
        %v2787 = vunpack.c.l.b16 %v2778
        %v2788 = vunpack.c.l.b16 %v2781
        %v2789 = vpack.c.b16 %v2788, %v2787
        %v2794 = vunpack.c.l.b16 %v2783
        %v2795 = vunpack.c.l.b16 %v2784
        %v2796 = vunpack.c.l.b16 %v2785
        %v2797 = vunpack.c.l.b16 %v2786
        %v2798 = vpack.c.b16 %v2795, %v2794
        %v2799 = vpack.c.b16 %v2797, %v2796
        %v2803 = vsel %vm318, %v2789, 0
        %2805 = vmatprep.subr.bf16.mxu0 0
        %2806 = vmatpush1.bf16.msra.mxu0 %v2798
        %2807 = vmatprep.subr.bf16.mxu0 0
        %2808 = vmatpush1.bf16.msra.mxu0 %v2799
        %2809 = vmatprep.subr.bf16.mxu0 0
        %2810 = vmatpush1.bf16.msra.mxu0 0
        %2811 = vmatprep.subr.bf16.mxu0 0
        %2812 = vmatpush1.bf16.msra.mxu0 0
        %2813 = vmatprep.subr.bf16.mxu0 0
        %2814 = vmatpush1.bf16.msra.mxu0 0
        %2815 = vmatprep.subr.bf16.mxu0 0
        %2816 = vmatpush1.bf16.msra.mxu0 0
        %2817 = vmatprep.subr.bf16.mxu0 0
        %2818 = vmatpush1.bf16.msra.mxu0 0
        %2819 = vmatprep.subr.bf16.mxu0 0
        %2820 = vmatpush1.bf16.msra.mxu0 0
        %2821 = vmatprep.subr.bf16.mxu0 0
        %2822 = vmatpush1.bf16.msra.mxu0 0
        %2823 = vmatprep.subr.bf16.mxu0 0
        %2824 = vmatpush1.bf16.msra.mxu0 0
        %2825 = vmatprep.subr.bf16.mxu0 0
        %2826 = vmatpush1.bf16.msra.mxu0 0
        %2827 = vmatprep.subr.bf16.mxu0 0
        %2828 = vmatpush1.bf16.msra.mxu0 0
        %2829 = vmatprep.subr.bf16.mxu0 0
        %2830 = vmatpush1.bf16.msra.mxu0 0
        %2831 = vmatprep.subr.bf16.mxu0 0
        %2832 = vmatpush1.bf16.msra.mxu0 0
        %2833 = vmatprep.subr.bf16.mxu0 0
        %2834 = vmatpush1.bf16.msra.mxu0 0
        %2835 = vmatprep.subr.bf16.mxu0 0
        %2836 = vmatpush1.bf16.msra.mxu0 0
        %2837 = vmatprep.mubr.bf16.mxu0 0
        %2838 = vmatmul.mubr.bf16.gmra.mrb[0].mxu0 %v1388
        %v2839 = vpop.f32.mrb[0].mxu0
        %v2840 = vadd.f32 0.0, %v2839
        %v2841 = vpop.f32.mrb[0].mxu0
        %v2842 = vpop.f32.mrb[0].mxu0
        %v2843 = vadd.f32 0.0, %v2842
        %v2844 = vpop.f32.mrb[0].mxu0
        %2845 = vmatprep.mubr.bf16.mxu0 0
        %2846 = vmatmul.mubr.bf16.gmra.mrb[0].mxu0 %v1391
        %v2847 = vpop.f32.mrb[0].mxu0
        %v2848 = vadd.f32 0.0, %v2847
        %v2849 = vpop.f32.mrb[0].mxu0
        %v2850 = vpop.f32.mrb[0].mxu0
        %v2851 = vadd.f32 0.0, %v2850
        %v2852 = vpop.f32.mrb[0].mxu0
        %2853 = vmatprep.mubr.bf16.mxu0 0
        %2854 = vmatmul.mubr.bf16.gmra.mrb[0].mxu0 %v1394
        %v2855 = vpop.f32.mrb[0].mxu0
        %v2856 = vadd.f32 0.0, %v2855
        %v2857 = vpop.f32.mrb[0].mxu0
        %v2858 = vpop.f32.mrb[0].mxu0
        %v2859 = vadd.f32 0.0, %v2858
        %v2860 = vpop.f32.mrb[0].mxu0
        %2861 = vmatprep.mubr.bf16.mxu0 0
        %2862 = vmatmul.mubr.bf16.gmra.mrb[0].mxu0 %v1397
        %v2863 = vpop.f32.mrb[0].mxu0
        %v2864 = vadd.f32 0.0, %v2863
        %v2865 = vpop.f32.mrb[0].mxu0
        %v2866 = vpop.f32.mrb[0].mxu0
        %v2867 = vadd.f32 0.0, %v2866
        %v2868 = vpop.f32.mrb[0].mxu0
        %2869 = vmatprep.mubr.bf16.mxu0 0
        %2870 = vmatmul.mubr.bf16.gmra.mrb[0].mxu0 %v1400
        %v2871 = vpop.f32.mrb[0].mxu0
        %v2872 = vadd.f32 0.0, %v2871
        %v2873 = vpop.f32.mrb[0].mxu0
        %v2874 = vpop.f32.mrb[0].mxu0
        %v2875 = vadd.f32 0.0, %v2874
        %v2876 = vpop.f32.mrb[0].mxu0
        %2877 = vmatprep.mubr.bf16.mxu0 0
        %2878 = vmatmul.mubr.bf16.gmra.mrb[0].mxu0 %v1403
        %v2879 = vpop.f32.mrb[0].mxu0
        %v2880 = vadd.f32 0.0, %v2879
        %v2881 = vpop.f32.mrb[0].mxu0
        %v2882 = vpop.f32.mrb[0].mxu0
        %v2883 = vadd.f32 0.0, %v2882
        %v2884 = vpop.f32.mrb[0].mxu0
        %2885 = vmatprep.mubr.bf16.mxu0 0
        %2886 = vmatmul.mubr.bf16.gmra.mrb[0].mxu0 %v1677
        %v2887 = vpop.f32.mrb[0].mxu0
        %v2888 = vadd.f32 0.0, %v2887
        %v2889 = vpop.f32.mrb[0].mxu0
        %v2890 = vpop.f32.mrb[0].mxu0
        %v2891 = vadd.f32 0.0, %v2890
        %v2892 = vpop.f32.mrb[0].mxu0
        %2893 = vmatprep.mubr.bf16.mxu0 0
        %2894 = vmatmul.mubr.bf16.gmra.mrb[0].mxu0 %v2803
        %v2895 = vpop.f32.mrb[0].mxu0
        %v2896 = vadd.f32 0.0, %v2895
        %v2897 = vpop.f32.mrb[0].mxu0
        %v2898 = vpop.f32.mrb[0].mxu0
        %v2899 = vadd.f32 0.0, %v2898
        %v2900 = vpop.f32.mrb[0].mxu0
        %2901 = vdwg.mxu0
        %v2902 = vadd.f32 %v2758, %v2840
        %v2903 = vadd.f32 %v2759, %v2843
        %v2904 = vadd.f32 %v2760, %v2848
        %v2905 = vadd.f32 %v2761, %v2851
        %v2906 = vadd.f32 %v2762, %v2856
        %v2907 = vadd.f32 %v2763, %v2859
        %v2908 = vadd.f32 %v2764, %v2864
        %v2909 = vadd.f32 %v2765, %v2867
        %v2910 = vadd.f32 %v2766, %v2872
        %v2911 = vadd.f32 %v2767, %v2875
        %v2912 = vadd.f32 %v2768, %v2880
        %v2913 = vadd.f32 %v2769, %v2883
        %v2914 = vadd.f32 %v2770, %v2888
        %v2915 = vadd.f32 %v2771, %v2891
        %v2916 = vadd.f32 %v2772, %v2896
        %v2917 = vadd.f32 %v2773, %v2899
        %s2918 = scalar_lea.vmem %s206, 384 [#allocation2]
        %2919 = vst [vmem:[%s2918] sm:$0xff] %v2902
        %2920 = vst [vmem:[%s2918 + $0x8] sm:$0xff] %v2903
        %2921 = vst [vmem:[%s2918 + $0x10] sm:$0xff] %v2904
        %2922 = vst [vmem:[%s2918 + $0x18] sm:$0xff] %v2905
        %2923 = vst [vmem:[%s2918 + $0x20] sm:$0xff] %v2906
        %2924 = vst [vmem:[%s2918 + $0x28] sm:$0xff] %v2907
        %2925 = vst [vmem:[%s2918 + $0x30] sm:$0xff] %v2908
        %2926 = vst [vmem:[%s2918 + $0x38] sm:$0xff] %v2909
        %2927 = vst [vmem:[%s2918 + $0x40] sm:$0xff] %v2910
        %2928 = vst [vmem:[%s2918 + $0x48] sm:$0xff] %v2911
        %2929 = vst [vmem:[%s2918 + $0x50] sm:$0xff] %v2912
        %2930 = vst [vmem:[%s2918 + $0x58] sm:$0xff] %v2913
        %2931 = vst [vmem:[%s2918 + $0x60] sm:$0xff] %v2914
        %2932 = vst [vmem:[%s2918 + $0x68] sm:$0xff] %v2915
        %2933 = vst [vmem:[%s2918 + $0x70] sm:$0xff] %v2916
        %2934 = vst [vmem:[%s2918 + $0x78] sm:$0xff] %v2917
        %s2935 = sand.u32 %s123, 1
        %s2936 = sand.u32 %s123, 1
        %s2937 = smul.addr %s2936, 512
        %s2938 = scalar_lea.vmem [#allocation2], %s2937
        // Predicated region
        $region33: #{upsample_forward.1} parent=31 // pred_check
          %p2939 = pneg %p133
        $region34: #{upsample_forward.1} parent=31 // pred_check_branch
          %2941 = sbr.rel (%p2939) target = $region36
        $region35: #{upsample_forward.1} parent=31 // pred_region
          %s2942 = smul.u32 8, %s21
          %s2943 = smul.addr %s2942, 2
          %s2944 = sadd.s32 %s20, %s2943
          %s2945 = smul.addr %s19, 128
          %s2946 = sadd.s32 %s2944, %s2945
          %s2947 = smul.addr %s2946, 8
          %s2948 = scalar_lea.vmem %s3, %s2947
          // Predicated region
          $region37: #{upsample_forward.1} parent=35 // pred_check
            _
          $region38: #{upsample_forward.1} parent=35 // pred_check_branch
            %2950 = sbr.rel (0) target = $region40
          $region39: #{upsample_forward.1} parent=35 // pred_region
            // Predicated region
            $region41: #{upsample_forward.1} parent=39 // pred_check
              _
            $region42: #{upsample_forward.1} parent=39 // pred_check_branch
              %2952 = sbr.rel (0) target = $region44
            $region43: #{upsample_forward.1} parent=39 // pred_region
              // Predicated region
              $region56: #{upsample_forward.1} parent=43 // pred_check
                _
              $region57: #{upsample_forward.1} parent=43 // pred_check_branch
                %3093 = sbr.rel (0) target = $region59
              $region58: #{upsample_forward.1} parent=43 // pred_region
                loop: start=0, step=1, limit=1
                $region60: #{upsample_forward.1} parent=58 // loop_pre_header
                  _
                $region61: #{upsample_forward.1} parent=58 // loop_header
                  %s3095 = sphi 0, %s3099
                  %p3096 = scmp.ge.s32.totalorder %s3095, 1
                  %s3100 = sphi %s2938, %s2938
                  %s3101 = sphi %s2948, %s2948
                $region62: #{upsample_forward.1} parent=58 // loop_header_branch
                  %3098 = sbr.rel (%p3096) target = $region66
                $region63: #{upsample_forward.1} parent=58 // loop_body
                  %v3102 = vld [vmem:[%s3100] sm:$0xff]
                  %3103 = vst [vmem:[%s3101] sm:$0xff] %v3102
                  %v3104 = vld [vmem:[%s3100 + $0x8] sm:$0xff]
                  %3105 = vst [vmem:[%s3101 + $0x8] sm:$0xff] %v3104
                  %v3106 = vld [vmem:[%s3100 + $0x10] sm:$0xff]
                  %3107 = vst [vmem:[%s3101 + $0x10] sm:$0xff] %v3106
                  %v3108 = vld [vmem:[%s3100 + $0x18] sm:$0xff]
                  %3109 = vst [vmem:[%s3101 + $0x18] sm:$0xff] %v3108
                  %v3110 = vld [vmem:[%s3100 + $0x20] sm:$0xff]
                  %3111 = vst [vmem:[%s3101 + $0x20] sm:$0xff] %v3110
                  %v3112 = vld [vmem:[%s3100 + $0x28] sm:$0xff]
                  %3113 = vst [vmem:[%s3101 + $0x28] sm:$0xff] %v3112
                  %v3114 = vld [vmem:[%s3100 + $0x30] sm:$0xff]
                  %3115 = vst [vmem:[%s3101 + $0x30] sm:$0xff] %v3114
                  %v3116 = vld [vmem:[%s3100 + $0x38] sm:$0xff]
                  %3117 = vst [vmem:[%s3101 + $0x38] sm:$0xff] %v3116
                  %v3118 = vld [vmem:[%s3100 + $0x40] sm:$0xff]
                  %3119 = vst [vmem:[%s3101 + $0x40] sm:$0xff] %v3118
                  %v3120 = vld [vmem:[%s3100 + $0x48] sm:$0xff]
                  %3121 = vst [vmem:[%s3101 + $0x48] sm:$0xff] %v3120
                  %v3122 = vld [vmem:[%s3100 + $0x50] sm:$0xff]
                  %3123 = vst [vmem:[%s3101 + $0x50] sm:$0xff] %v3122
                  %v3124 = vld [vmem:[%s3100 + $0x58] sm:$0xff]
                  %3125 = vst [vmem:[%s3101 + $0x58] sm:$0xff] %v3124
                  %v3126 = vld [vmem:[%s3100 + $0x60] sm:$0xff]
                  %3127 = vst [vmem:[%s3101 + $0x60] sm:$0xff] %v3126
                  %v3128 = vld [vmem:[%s3100 + $0x68] sm:$0xff]
                  %3129 = vst [vmem:[%s3101 + $0x68] sm:$0xff] %v3128
                  %v3130 = vld [vmem:[%s3100 + $0x70] sm:$0xff]
                  %3131 = vst [vmem:[%s3101 + $0x70] sm:$0xff] %v3130
                  %v3132 = vld [vmem:[%s3100 + $0x78] sm:$0xff]
                  %3133 = vst [vmem:[%s3101 + $0x78] sm:$0xff] %v3132
                  %v3134 = vld [vmem:[%s3100 + $0x80] sm:$0xff]
                  %3135 = vst [vmem:[%s3101 + $0x100] sm:$0xff] %v3134
                  %v3136 = vld [vmem:[%s3100 + $0x88] sm:$0xff]
                  %3137 = vst [vmem:[%s3101 + $0x108] sm:$0xff] %v3136
                  %v3138 = vld [vmem:[%s3100 + $0x90] sm:$0xff]
                  %3139 = vst [vmem:[%s3101 + $0x110] sm:$0xff] %v3138
                  %v3140 = vld [vmem:[%s3100 + $0x98] sm:$0xff]
                  %3141 = vst [vmem:[%s3101 + $0x118] sm:$0xff] %v3140
                  %v3142 = vld [vmem:[%s3100 + $0xa0] sm:$0xff]
                  %3143 = vst [vmem:[%s3101 + $0x120] sm:$0xff] %v3142
                  %v3144 = vld [vmem:[%s3100 + $0xa8] sm:$0xff]
                  %3145 = vst [vmem:[%s3101 + $0x128] sm:$0xff] %v3144
                  %v3146 = vld [vmem:[%s3100 + $0xb0] sm:$0xff]
                  %3147 = vst [vmem:[%s3101 + $0x130] sm:$0xff] %v3146
                  %v3148 = vld [vmem:[%s3100 + $0xb8] sm:$0xff]
                  %3149 = vst [vmem:[%s3101 + $0x138] sm:$0xff] %v3148
                  %v3150 = vld [vmem:[%s3100 + $0xc0] sm:$0xff]
                  %3151 = vst [vmem:[%s3101 + $0x140] sm:$0xff] %v3150
                  %v3152 = vld [vmem:[%s3100 + $0xc8] sm:$0xff]
                  %3153 = vst [vmem:[%s3101 + $0x148] sm:$0xff] %v3152
                  %v3154 = vld [vmem:[%s3100 + $0xd0] sm:$0xff]
                  %3155 = vst [vmem:[%s3101 + $0x150] sm:$0xff] %v3154
                  %v3156 = vld [vmem:[%s3100 + $0xd8] sm:$0xff]
                  %3157 = vst [vmem:[%s3101 + $0x158] sm:$0xff] %v3156
                  %v3158 = vld [vmem:[%s3100 + $0xe0] sm:$0xff]
                  %3159 = vst [vmem:[%s3101 + $0x160] sm:$0xff] %v3158
                  %v3160 = vld [vmem:[%s3100 + $0xe8] sm:$0xff]
                  %3161 = vst [vmem:[%s3101 + $0x168] sm:$0xff] %v3160
                  %v3162 = vld [vmem:[%s3100 + $0xf0] sm:$0xff]
                  %3163 = vst [vmem:[%s3101 + $0x170] sm:$0xff] %v3162
                  %v3164 = vld [vmem:[%s3100 + $0xf8] sm:$0xff]
                  %3165 = vst [vmem:[%s3101 + $0x178] sm:$0xff] %v3164
                  %v3166 = vld [vmem:[%s3100 + $0x100] sm:$0xff]
                  %3167 = vst [vmem:[%s3101 + $0x200] sm:$0xff] %v3166
                  %v3168 = vld [vmem:[%s3100 + $0x108] sm:$0xff]
                  %3169 = vst [vmem:[%s3101 + $0x208] sm:$0xff] %v3168
                  %v3170 = vld [vmem:[%s3100 + $0x110] sm:$0xff]
                  %3171 = vst [vmem:[%s3101 + $0x210] sm:$0xff] %v3170
                  %v3172 = vld [vmem:[%s3100 + $0x118] sm:$0xff]
                  %3173 = vst [vmem:[%s3101 + $0x218] sm:$0xff] %v3172
                  %v3174 = vld [vmem:[%s3100 + $0x120] sm:$0xff]
                  %3175 = vst [vmem:[%s3101 + $0x220] sm:$0xff] %v3174
                  %v3176 = vld [vmem:[%s3100 + $0x128] sm:$0xff]
                  %3177 = vst [vmem:[%s3101 + $0x228] sm:$0xff] %v3176
                  %v3178 = vld [vmem:[%s3100 + $0x130] sm:$0xff]
                  %3179 = vst [vmem:[%s3101 + $0x230] sm:$0xff] %v3178
                  %v3180 = vld [vmem:[%s3100 + $0x138] sm:$0xff]
                  %3181 = vst [vmem:[%s3101 + $0x238] sm:$0xff] %v3180
                  %v3182 = vld [vmem:[%s3100 + $0x140] sm:$0xff]
                  %3183 = vst [vmem:[%s3101 + $0x240] sm:$0xff] %v3182
                  %v3184 = vld [vmem:[%s3100 + $0x148] sm:$0xff]
                  %3185 = vst [vmem:[%s3101 + $0x248] sm:$0xff] %v3184
                  %v3186 = vld [vmem:[%s3100 + $0x150] sm:$0xff]
                  %3187 = vst [vmem:[%s3101 + $0x250] sm:$0xff] %v3186
                  %v3188 = vld [vmem:[%s3100 + $0x158] sm:$0xff]
                  %3189 = vst [vmem:[%s3101 + $0x258] sm:$0xff] %v3188
                  %v3190 = vld [vmem:[%s3100 + $0x160] sm:$0xff]
                  %3191 = vst [vmem:[%s3101 + $0x260] sm:$0xff] %v3190
                  %v3192 = vld [vmem:[%s3100 + $0x168] sm:$0xff]
                  %3193 = vst [vmem:[%s3101 + $0x268] sm:$0xff] %v3192
                  %v3194 = vld [vmem:[%s3100 + $0x170] sm:$0xff]
                  %3195 = vst [vmem:[%s3101 + $0x270] sm:$0xff] %v3194
                  %v3196 = vld [vmem:[%s3100 + $0x178] sm:$0xff]
                  %3197 = vst [vmem:[%s3101 + $0x278] sm:$0xff] %v3196
                  %v3198 = vld [vmem:[%s3100 + $0x180] sm:$0xff]
                  %3199 = vst [vmem:[%s3101 + $0x300] sm:$0xff] %v3198
                  %v3200 = vld [vmem:[%s3100 + $0x188] sm:$0xff]
                  %3201 = vst [vmem:[%s3101 + $0x308] sm:$0xff] %v3200
                  %v3202 = vld [vmem:[%s3100 + $0x190] sm:$0xff]
                  %3203 = vst [vmem:[%s3101 + $0x310] sm:$0xff] %v3202
                  %v3204 = vld [vmem:[%s3100 + $0x198] sm:$0xff]
                  %3205 = vst [vmem:[%s3101 + $0x318] sm:$0xff] %v3204
                  %v3206 = vld [vmem:[%s3100 + $0x1a0] sm:$0xff]
                  %3207 = vst [vmem:[%s3101 + $0x320] sm:$0xff] %v3206
                  %v3208 = vld [vmem:[%s3100 + $0x1a8] sm:$0xff]
                  %3209 = vst [vmem:[%s3101 + $0x328] sm:$0xff] %v3208
                  %v3210 = vld [vmem:[%s3100 + $0x1b0] sm:$0xff]
                  %3211 = vst [vmem:[%s3101 + $0x330] sm:$0xff] %v3210
                  %v3212 = vld [vmem:[%s3100 + $0x1b8] sm:$0xff]
                  %3213 = vst [vmem:[%s3101 + $0x338] sm:$0xff] %v3212
                  %v3214 = vld [vmem:[%s3100 + $0x1c0] sm:$0xff]
                  %3215 = vst [vmem:[%s3101 + $0x340] sm:$0xff] %v3214
                  %v3216 = vld [vmem:[%s3100 + $0x1c8] sm:$0xff]
                  %3217 = vst [vmem:[%s3101 + $0x348] sm:$0xff] %v3216
                  %v3218 = vld [vmem:[%s3100 + $0x1d0] sm:$0xff]
                  %3219 = vst [vmem:[%s3101 + $0x350] sm:$0xff] %v3218
                  %v3220 = vld [vmem:[%s3100 + $0x1d8] sm:$0xff]
                  %3221 = vst [vmem:[%s3101 + $0x358] sm:$0xff] %v3220
                  %v3222 = vld [vmem:[%s3100 + $0x1e0] sm:$0xff]
                  %3223 = vst [vmem:[%s3101 + $0x360] sm:$0xff] %v3222
                  %v3224 = vld [vmem:[%s3100 + $0x1e8] sm:$0xff]
                  %3225 = vst [vmem:[%s3101 + $0x368] sm:$0xff] %v3224
                  %v3226 = vld [vmem:[%s3100 + $0x1f0] sm:$0xff]
                  %3227 = vst [vmem:[%s3101 + $0x370] sm:$0xff] %v3226
                  %v3228 = vld [vmem:[%s3100 + $0x1f8] sm:$0xff]
                  %3229 = vst [vmem:[%s3101 + $0x378] sm:$0xff] %v3228
                $region64: #{upsample_forward.1} parent=58 // loop_footer
                  %s3099 = sadd.s32 1, %s3095
                $region65: #{upsample_forward.1} parent=58 // loop_footer_branch
                  %3094 = sbr.rel target = $region61
                $region66: #{upsample_forward.1} parent=58 // loop_exit
                  _
              $region59: #{upsample_forward.1} parent=43 // pred_fallthru
                _
              // Predicated region
              $region67: #{upsample_forward.1} parent=43 // pred_check
                _
              $region68: #{upsample_forward.1} parent=43 // pred_check_branch
                %3231 = sbr.rel target = $region70
              $region69: #{upsample_forward.1} parent=43 // pred_region
                _
              $region70: #{upsample_forward.1} parent=43 // pred_fallthru
                _
            $region44: #{upsample_forward.1} parent=39 // pred_fallthru
              _
            // Predicated region
            $region45: #{upsample_forward.1} parent=39 // pred_check
              _
            $region46: #{upsample_forward.1} parent=39 // pred_check_branch
              %2954 = sbr.rel target = $region48
            $region47: #{upsample_forward.1} parent=39 // pred_region
              loop: start=0, step=1, limit=1
              $region49: #{upsample_forward.1} parent=47 // loop_pre_header
                _
              $region50: #{upsample_forward.1} parent=47 // loop_header
                %s2957 = sphi 0, %s2961
                %p2958 = scmp.ge.s32.totalorder %s2957, 1
                %s2962 = sphi %s2938, %s2938
                %s2963 = sphi %s2948, %s2948
              $region51: #{upsample_forward.1} parent=47 // loop_header_branch
                %2960 = sbr.rel (%p2958) target = $region55
              $region52: #{upsample_forward.1} parent=47 // loop_body
                %v2964 = vld [vmem:[%s2962] sm:$0xff]
                %2965 = vst [vmem:[%s2963] sm:$0xff] %v2964
                %v2966 = vld [vmem:[%s2962 + $0x8] sm:$0xff]
                %2967 = vst [vmem:[%s2963 + $0x8] sm:$0xff] %v2966
                %v2968 = vld [vmem:[%s2962 + $0x10] sm:$0xff]
                %2969 = vst [vmem:[%s2963 + $0x10] sm:$0xff] %v2968
                %v2970 = vld [vmem:[%s2962 + $0x18] sm:$0xff]
                %2971 = vst [vmem:[%s2963 + $0x18] sm:$0xff] %v2970
                %v2972 = vld [vmem:[%s2962 + $0x20] sm:$0xff]
                %2973 = vst [vmem:[%s2963 + $0x20] sm:$0xff] %v2972
                %v2974 = vld [vmem:[%s2962 + $0x28] sm:$0xff]
                %2975 = vst [vmem:[%s2963 + $0x28] sm:$0xff] %v2974
                %v2976 = vld [vmem:[%s2962 + $0x30] sm:$0xff]
                %2977 = vst [vmem:[%s2963 + $0x30] sm:$0xff] %v2976
                %v2978 = vld [vmem:[%s2962 + $0x38] sm:$0xff]
                %2979 = vst [vmem:[%s2963 + $0x38] sm:$0xff] %v2978
                %v2980 = vld [vmem:[%s2962 + $0x40] sm:$0xff]
                %2981 = vst [vmem:[%s2963 + $0x40] sm:$0xff] %v2980
                %v2982 = vld [vmem:[%s2962 + $0x48] sm:$0xff]
                %2983 = vst [vmem:[%s2963 + $0x48] sm:$0xff] %v2982
                %v2984 = vld [vmem:[%s2962 + $0x50] sm:$0xff]
                %2985 = vst [vmem:[%s2963 + $0x50] sm:$0xff] %v2984
                %v2986 = vld [vmem:[%s2962 + $0x58] sm:$0xff]
                %2987 = vst [vmem:[%s2963 + $0x58] sm:$0xff] %v2986
                %v2988 = vld [vmem:[%s2962 + $0x60] sm:$0xff]
                %2989 = vst [vmem:[%s2963 + $0x60] sm:$0xff] %v2988
                %v2990 = vld [vmem:[%s2962 + $0x68] sm:$0xff]
                %2991 = vst [vmem:[%s2963 + $0x68] sm:$0xff] %v2990
                %v2992 = vld [vmem:[%s2962 + $0x70] sm:$0xff]
                %2993 = vst [vmem:[%s2963 + $0x70] sm:$0xff] %v2992
                %v2994 = vld [vmem:[%s2962 + $0x78] sm:$0xff]
                %2995 = vst [vmem:[%s2963 + $0x78] sm:$0xff] %v2994
                %v2996 = vld [vmem:[%s2962 + $0x80] sm:$0xff]
                %2997 = vst [vmem:[%s2963 + $0x100] sm:$0xff] %v2996
                %v2998 = vld [vmem:[%s2962 + $0x88] sm:$0xff]
                %2999 = vst [vmem:[%s2963 + $0x108] sm:$0xff] %v2998
                %v3000 = vld [vmem:[%s2962 + $0x90] sm:$0xff]
                %3001 = vst [vmem:[%s2963 + $0x110] sm:$0xff] %v3000
                %v3002 = vld [vmem:[%s2962 + $0x98] sm:$0xff]
                %3003 = vst [vmem:[%s2963 + $0x118] sm:$0xff] %v3002
                %v3004 = vld [vmem:[%s2962 + $0xa0] sm:$0xff]
                %3005 = vst [vmem:[%s2963 + $0x120] sm:$0xff] %v3004
                %v3006 = vld [vmem:[%s2962 + $0xa8] sm:$0xff]
                %3007 = vst [vmem:[%s2963 + $0x128] sm:$0xff] %v3006
                %v3008 = vld [vmem:[%s2962 + $0xb0] sm:$0xff]
                %3009 = vst [vmem:[%s2963 + $0x130] sm:$0xff] %v3008
                %v3010 = vld [vmem:[%s2962 + $0xb8] sm:$0xff]
                %3011 = vst [vmem:[%s2963 + $0x138] sm:$0xff] %v3010
                %v3012 = vld [vmem:[%s2962 + $0xc0] sm:$0xff]
                %3013 = vst [vmem:[%s2963 + $0x140] sm:$0xff] %v3012
                %v3014 = vld [vmem:[%s2962 + $0xc8] sm:$0xff]
                %3015 = vst [vmem:[%s2963 + $0x148] sm:$0xff] %v3014
                %v3016 = vld [vmem:[%s2962 + $0xd0] sm:$0xff]
                %3017 = vst [vmem:[%s2963 + $0x150] sm:$0xff] %v3016
                %v3018 = vld [vmem:[%s2962 + $0xd8] sm:$0xff]
                %3019 = vst [vmem:[%s2963 + $0x158] sm:$0xff] %v3018
                %v3020 = vld [vmem:[%s2962 + $0xe0] sm:$0xff]
                %3021 = vst [vmem:[%s2963 + $0x160] sm:$0xff] %v3020
                %v3022 = vld [vmem:[%s2962 + $0xe8] sm:$0xff]
                %3023 = vst [vmem:[%s2963 + $0x168] sm:$0xff] %v3022
                %v3024 = vld [vmem:[%s2962 + $0xf0] sm:$0xff]
                %3025 = vst [vmem:[%s2963 + $0x170] sm:$0xff] %v3024
                %v3026 = vld [vmem:[%s2962 + $0xf8] sm:$0xff]
                %3027 = vst [vmem:[%s2963 + $0x178] sm:$0xff] %v3026
                %v3028 = vld [vmem:[%s2962 + $0x100] sm:$0xff]
                %3029 = vst [vmem:[%s2963 + $0x200] sm:$0xff] %v3028
                %v3030 = vld [vmem:[%s2962 + $0x108] sm:$0xff]
                %3031 = vst [vmem:[%s2963 + $0x208] sm:$0xff] %v3030
                %v3032 = vld [vmem:[%s2962 + $0x110] sm:$0xff]
                %3033 = vst [vmem:[%s2963 + $0x210] sm:$0xff] %v3032
                %v3034 = vld [vmem:[%s2962 + $0x118] sm:$0xff]
                %3035 = vst [vmem:[%s2963 + $0x218] sm:$0xff] %v3034
                %v3036 = vld [vmem:[%s2962 + $0x120] sm:$0xff]
                %3037 = vst [vmem:[%s2963 + $0x220] sm:$0xff] %v3036
                %v3038 = vld [vmem:[%s2962 + $0x128] sm:$0xff]
                %3039 = vst [vmem:[%s2963 + $0x228] sm:$0xff] %v3038
                %v3040 = vld [vmem:[%s2962 + $0x130] sm:$0xff]
                %3041 = vst [vmem:[%s2963 + $0x230] sm:$0xff] %v3040
                %v3042 = vld [vmem:[%s2962 + $0x138] sm:$0xff]
                %3043 = vst [vmem:[%s2963 + $0x238] sm:$0xff] %v3042
                %v3044 = vld [vmem:[%s2962 + $0x140] sm:$0xff]
                %3045 = vst [vmem:[%s2963 + $0x240] sm:$0xff] %v3044
                %v3046 = vld [vmem:[%s2962 + $0x148] sm:$0xff]
                %3047 = vst [vmem:[%s2963 + $0x248] sm:$0xff] %v3046
                %v3048 = vld [vmem:[%s2962 + $0x150] sm:$0xff]
                %3049 = vst [vmem:[%s2963 + $0x250] sm:$0xff] %v3048
                %v3050 = vld [vmem:[%s2962 + $0x158] sm:$0xff]
                %3051 = vst [vmem:[%s2963 + $0x258] sm:$0xff] %v3050
                %v3052 = vld [vmem:[%s2962 + $0x160] sm:$0xff]
                %3053 = vst [vmem:[%s2963 + $0x260] sm:$0xff] %v3052
                %v3054 = vld [vmem:[%s2962 + $0x168] sm:$0xff]
                %3055 = vst [vmem:[%s2963 + $0x268] sm:$0xff] %v3054
                %v3056 = vld [vmem:[%s2962 + $0x170] sm:$0xff]
                %3057 = vst [vmem:[%s2963 + $0x270] sm:$0xff] %v3056
                %v3058 = vld [vmem:[%s2962 + $0x178] sm:$0xff]
                %3059 = vst [vmem:[%s2963 + $0x278] sm:$0xff] %v3058
                %v3060 = vld [vmem:[%s2962 + $0x180] sm:$0xff]
                %3061 = vst [vmem:[%s2963 + $0x300] sm:$0xff] %v3060
                %v3062 = vld [vmem:[%s2962 + $0x188] sm:$0xff]
                %3063 = vst [vmem:[%s2963 + $0x308] sm:$0xff] %v3062
                %v3064 = vld [vmem:[%s2962 + $0x190] sm:$0xff]
                %3065 = vst [vmem:[%s2963 + $0x310] sm:$0xff] %v3064
                %v3066 = vld [vmem:[%s2962 + $0x198] sm:$0xff]
                %3067 = vst [vmem:[%s2963 + $0x318] sm:$0xff] %v3066
                %v3068 = vld [vmem:[%s2962 + $0x1a0] sm:$0xff]
                %3069 = vst [vmem:[%s2963 + $0x320] sm:$0xff] %v3068
                %v3070 = vld [vmem:[%s2962 + $0x1a8] sm:$0xff]
                %3071 = vst [vmem:[%s2963 + $0x328] sm:$0xff] %v3070
                %v3072 = vld [vmem:[%s2962 + $0x1b0] sm:$0xff]
                %3073 = vst [vmem:[%s2963 + $0x330] sm:$0xff] %v3072
                %v3074 = vld [vmem:[%s2962 + $0x1b8] sm:$0xff]
                %3075 = vst [vmem:[%s2963 + $0x338] sm:$0xff] %v3074
                %v3076 = vld [vmem:[%s2962 + $0x1c0] sm:$0xff]
                %3077 = vst [vmem:[%s2963 + $0x340] sm:$0xff] %v3076
                %v3078 = vld [vmem:[%s2962 + $0x1c8] sm:$0xff]
                %3079 = vst [vmem:[%s2963 + $0x348] sm:$0xff] %v3078
                %v3080 = vld [vmem:[%s2962 + $0x1d0] sm:$0xff]
                %3081 = vst [vmem:[%s2963 + $0x350] sm:$0xff] %v3080
                %v3082 = vld [vmem:[%s2962 + $0x1d8] sm:$0xff]
                %3083 = vst [vmem:[%s2963 + $0x358] sm:$0xff] %v3082
                %v3084 = vld [vmem:[%s2962 + $0x1e0] sm:$0xff]
                %3085 = vst [vmem:[%s2963 + $0x360] sm:$0xff] %v3084
                %v3086 = vld [vmem:[%s2962 + $0x1e8] sm:$0xff]
                %3087 = vst [vmem:[%s2963 + $0x368] sm:$0xff] %v3086
                %v3088 = vld [vmem:[%s2962 + $0x1f0] sm:$0xff]
                %3089 = vst [vmem:[%s2963 + $0x370] sm:$0xff] %v3088
                %v3090 = vld [vmem:[%s2962 + $0x1f8] sm:$0xff]
                %3091 = vst [vmem:[%s2963 + $0x378] sm:$0xff] %v3090
              $region53: #{upsample_forward.1} parent=47 // loop_footer
                %s2961 = sadd.s32 1, %s2957
              $region54: #{upsample_forward.1} parent=47 // loop_footer_branch
                %2956 = sbr.rel target = $region50
              $region55: #{upsample_forward.1} parent=47 // loop_exit
                _
            $region48: #{upsample_forward.1} parent=39 // pred_fallthru
              _
          $region40: #{upsample_forward.1} parent=35 // pred_fallthru
            _
          %3232 = vnop
        $region36: #{upsample_forward.1} parent=31 // pred_fallthru
          _
      $region32: #{upsample_forward.1} parent=5 // pred_fallthru
        _
      %p3233 = scmp.le.s32.totalorder 2, %s9
      // Predicated region
      $region71: #{upsample_forward.1} parent=5 // pred_check
        %p3234 = pneg %p3233
      $region72: #{upsample_forward.1} parent=5 // pred_check_branch
        %3236 = sbr.rel (%p3234) target = $region74
      $region73: #{upsample_forward.1} parent=5 // pred_region
        %s3237 = ssub.s32 %s9, 2
        // Predicated region
        $region75: #{upsample_forward.1} parent=73 // pred_check
          %p3238 = pneg %p139
        $region76: #{upsample_forward.1} parent=73 // pred_check_branch
          %3240 = sbr.rel (%p3238) target = $region78
        $region77: #{upsample_forward.1} parent=73 // pred_region
          %s3241 = sand.u32 %s124, 1
          %s3242 = sand.u32 %s124, 1
          %s3243 = smul.addr %s3242, 512
          %s3244 = scalar_lea.vmem [#allocation2], %s3243
        $region78: #{upsample_forward.1} parent=73 // pred_fallthru
          _
      $region74: #{upsample_forward.1} parent=5 // pred_fallthru
        _
    $region6: #{upsample_forward.1} parent=1 // loop_footer
      %s13 = sadd.s32 1, %s9
    $region7: #{upsample_forward.1} parent=1 // loop_footer_branch
      %8 = sbr.rel target = $region3
    $region8: #{upsample_forward.1} parent=1 // loop_exit
      _

</llo_original>
